<compile_context>
chip_gen: v6e
topology: v6e:2x2x1
jax: 0.10.0
libtpu: 0.0.40
codegen_flags: <defaults>
</compile_context>

<pallas_src>
import functools

import jax
import jax.numpy as jnp
from jax import lax
from jax.experimental import pallas as pl
from jax.experimental.pallas import tpu as pltpu


# ----------------------------------------------------------------------------
# Fused kernel: ClsAttention + global mean + 3 GCLayers, one batch item / step.
#   feats_ref   : (1, HW, C)  f32
#   clsw_ref    : (nc, C)     bf16   1x1-conv weight of ClsAttention
#   adjT_ref    : (2, N, N)   bf16   [fw_A^T, bw_A^T]
#   w_in_ref    : (L, 3, C, S) bf16  [Wc^T, Wf^T, Wb^T] with BN scale folded in
#   w_up_ref    : (L, 3, S, C) bf16  [Wu1^T, Wu2^T, Wu3^T] with BN scale folded
#   shift_s_ref : (L, 3, 1, S) f32   BN shifts for condense / fw / bw branches
#   shift_c_ref : (L, 1, C)    f32   BN shift for the update branch
#   node_ref    : (1, N, C)    f32   output node states
#   glob_ref    : (1, 1, C)    f32   output global (spatial-mean) features
#   st_ref      : (N, C)       f32   VMEM scratch, node states across layers
# ----------------------------------------------------------------------------
def fused_gcn_kernel(feats_ref, clsw_ref, adjT_ref, w_in_ref, w_up_ref,
                     shift_s_ref, shift_c_ref,
                     node_ref, glob_ref,
                     st_ref, *, num_layers):
    f = feats_ref[0]                                   # (HW, C) f32
    fb = f.astype(jnp.bfloat16)

    # --- ClsAttention: class axis on sublanes, softmax reduces along lanes (HW)
    scores = lax.dot_general(clsw_ref[...], fb, (((1,), (1,)), ((), ())),
                             preferred_element_type=jnp.float32)      # (nc, HW)
    m = jnp.max(scores, axis=-1, keepdims=True)
    e = jnp.exp(scores - m)
    att = e / jnp.sum(e, axis=-1, keepdims=True)                      # softmax over HW
    cls = jnp.dot(att.astype(jnp.bfloat16), fb,
                  preferred_element_type=jnp.float32)                 # (nc, C)

    # --- global mean over spatial positions (reused for both outputs)
    glob = jnp.mean(f, axis=0, keepdims=True)                         # (1, C)
    glob_ref[0] = glob

    # --- node_feats = [global ; cls_feats] stored directly (no concat temp)
    nc = cls.shape[0]
    st_ref[0:1, :] = glob
    st_ref[1:1 + nc, :] = cls

    fwAT = adjT_ref[0]                                                # (N, N) bf16
    bwAT = adjT_ref[1]

    # --- 3 GCLayers, statically unrolled; states stay in VMEM scratch
    for l in range(num_layers):
        s = st_ref[...]                                               # (N, C) f32
        sb = s.astype(jnp.bfloat16)

        cond = jnp.dot(sb, w_in_ref[l, 0], preferred_element_type=jnp.float32)
        cond = jnp.maximum(cond + shift_s_ref[l, 0], 0.0)             # (N, S)

        fw = jnp.dot(sb, w_in_ref[l, 1], preferred_element_type=jnp.float32)
        fw = jnp.dot(fwAT, fw.astype(jnp.bfloat16),
                     preferred_element_type=jnp.float32)
        fw = jnp.maximum(fw + shift_s_ref[l, 1], 0.0)                 # (N, S)

        bw = jnp.dot(sb, w_in_ref[l, 2], preferred_element_type=jnp.float32)
        bw = jnp.dot(bwAT, bw.astype(jnp.bfloat16),
                     preferred_element_type=jnp.float32)
        bw = jnp.maximum(bw + shift_s_ref[l, 2], 0.0)                 # (N, S)

        upd = (jnp.dot(cond.astype(jnp.bfloat16), w_up_ref[l, 0],
                       preferred_element_type=jnp.float32)
               + jnp.dot(fw.astype(jnp.bfloat16), w_up_ref[l, 1],
                         preferred_element_type=jnp.float32)
               + jnp.dot(bw.astype(jnp.bfloat16), w_up_ref[l, 2],
                         preferred_element_type=jnp.float32))
        upd = upd + shift_c_ref[l]                                    # (N, C)
        st_ref[...] = jnp.maximum(upd + s, 0.0)                       # residual + relu

    node_ref[0] = st_ref[...]


def fused_gcn_call(feats_r, cls_w, adjT, w_in, w_up, shift_s, shift_c,
                   *, num_classes):
    B, HW, C = feats_r.shape
    N = num_classes + 1
    L = w_in.shape[0]

    def full(shape):
        nd = len(shape)
        return pl.BlockSpec(tuple(shape), lambda b, _nd=nd: (0,) * _nd)

    kernel = functools.partial(fused_gcn_kernel, num_layers=L)
    node, glob = pl.pallas_call(
        kernel,
        out_shape=(jax.ShapeDtypeStruct((B, N, C), jnp.float32),
                   jax.ShapeDtypeStruct((B, 1, C), jnp.float32)),
        grid_spec=pltpu.PrefetchScalarGridSpec(
            num_scalar_prefetch=0,
            grid=(B,),
            in_specs=[
                pl.BlockSpec((1, HW, C), lambda b: (b, 0, 0)),
                full(cls_w.shape),
                full(adjT.shape),
                full(w_in.shape),
                full(w_up.shape),
                full(shift_s.shape),
                full(shift_c.shape),
            ],
            out_specs=(
                pl.BlockSpec((1, N, C), lambda b: (b, 0, 0)),
                pl.BlockSpec((1, 1, C), lambda b: (b, 0, 0)),
            ),
            scratch_shapes=[pltpu.VMEM((N, C), jnp.float32)],
        ),
        # "parallel" batch axis -> v7x shards grid steps across both TensorCores.
        compiler_params=pltpu.CompilerParams(dimension_semantics=("parallel",)),
    )(feats_r, cls_w, adjT, w_in, w_up, shift_s, shift_c)
    return node, glob


# ----------------------------------------------------------------------------
# GCNClassifier forward (single-image path, img2=None), cnn_feats given.
# ----------------------------------------------------------------------------
def gcn_classifier_forward(cnn_feats, params, fw_A, bw_A, num_classes):
    B, C, H, W = cnn_feats.shape
    HW = H * W
    # cnn_feats1.reshape(B, C, HW).permute(0, 2, 1)
    feats_r = jnp.transpose(cnn_feats.reshape(B, C, HW), (0, 2, 1))   # (B, HW, C)

    adjT = jnp.stack([fw_A.T, bw_A.T], axis=0).astype(jnp.bfloat16)   # (2, N, N)

    node_states, glob = fused_gcn_call(
        feats_r, params["cls_w"], adjT,
        params["w_in"], params["w_up"], params["shift_s"], params["shift_c"],
        num_classes=num_classes)

    # AvgPool2d(kernel=7, stride=1) on a 7x7 map == spatial mean (kernel output)
    global_states = glob.reshape(B, C)
    return feats_r, node_states, global_states


# ----------------------------------------------------------------------------
# Parameter / adjacency setup (deterministic, synthetic).  BN scales are folded
# into the weights (exact per output channel up to f32 rounding).
# ----------------------------------------------------------------------------
def normalize_adj(fw_adj, bw_adj):
    fw_d = fw_adj.sum(axis=1)
    bw_d = bw_adj.sum(axis=1)
    inv_fw = jnp.where(fw_d > 0, fw_d ** -0.5, 0.0)
    inv_bw = jnp.where(bw_d > 0, bw_d ** -0.5, 0.0)
    fw_A = (inv_fw[:, None] * fw_adj) * inv_bw[None, :]
    bw_A = (inv_bw[:, None] * bw_adj) * inv_fw[None, :]
    return fw_A, bw_A


def bn_scale_shift(key, n, eps=1e-5):
    kg, kb, km, kv = jax.random.split(key, 4)
    gamma = 1.0 + 0.1 * jax.random.normal(kg, (n,))
    beta = 0.1 * jax.random.normal(kb, (n,))
    running_mean = 0.1 * jax.random.normal(km, (n,))
    running_var = 1.0 + 0.1 * jax.random.uniform(kv, (n,))
    scale = gamma / jnp.sqrt(running_var + eps)
    shift = beta - running_mean * scale
    return (scale.reshape(1, n).astype(jnp.float32),
            shift.reshape(1, n).astype(jnp.float32))


def init_gc_layer_params(key, C, S):
    ks = jax.random.split(key, 8)
    wc = 0.05 * jax.random.normal(ks[0], (S, C), jnp.float32)      # condense
    wf = 0.05 * jax.random.normal(ks[1], (S, C), jnp.float32)      # fw_trans
    wb = 0.05 * jax.random.normal(ks[2], (S, C), jnp.float32)      # bw_trans
    wu = 0.05 * jax.random.normal(ks[3], (C, 3 * S), jnp.float32)  # update
    c_scale, c_shift = bn_scale_shift(ks[4], S)
    f_scale, f_shift = bn_scale_shift(ks[5], S)
    b_scale, b_shift = bn_scale_shift(ks[6], S)
    u_scale, u_shift = bn_scale_shift(ks[7], C)

    # Fold BN scales into the weight columns; keep shifts as bias adds.
    wc_t = wc.T * c_scale                                          # (C, S)
    wf_t = wf.T * f_scale
    wb_t = wb.T * b_scale
    wu_t = wu.T * u_scale                                          # (3S, C)

    w_in_l = jnp.stack([wc_t, wf_t, wb_t]).astype(jnp.bfloat16)         # (3, C, S)
    w_up_l = jnp.stack([wu_t[:S], wu_t[S:2 * S], wu_t[2 * S:]]
                       ).astype(jnp.bfloat16)                           # (3, S, C)
    shift_s_l = jnp.stack([c_shift, f_shift, b_shift])                  # (3, 1, S)
    shift_c_l = u_shift                                                 # (1, C)
    return w_in_l, w_up_l, shift_s_l, shift_c_l


def init_params(key, C, S, num_classes, num_layers=3):
    keys = jax.random.split(key, num_layers + 1)
    cls_w = 0.05 * jax.random.normal(keys[0], (num_classes, C), jnp.float32)
    per = [init_gc_layer_params(k, C, S) for k in keys[1:]]
    return dict(
        cls_w=cls_w.astype(jnp.bfloat16),                       # (nc, C)
        w_in=jnp.stack([p[0] for p in per]),                    # (L, 3, C, S) bf16
        w_up=jnp.stack([p[1] for p in per]),                    # (L, 3, S, C) bf16
        shift_s=jnp.stack([p[2] for p in per]),                 # (L, 3, 1, S) f32
        shift_c=jnp.stack([p[3] for p in per]),                 # (L, 1, C)    f32
    )


if __name__ == "__main__":
    key = jax.random.PRNGKey(0)
    B, C, H, W = 2, 128, 7, 7          # small stand-in for densenet feat_size=1024, 7x7
    num_classes = 8
    S = 256                            # GCN state_size (as in module)
    N = num_classes + 1

    k_feat, k_adj1, k_adj2, k_params = jax.random.split(key, 4)
    cnn_feats = jax.random.normal(k_feat, (B, C, H, W), dtype=jnp.float32)
    fw_adj = (jax.random.uniform(k_adj1, (N, N)) > 0.5).astype(jnp.float32)
    bw_adj = (jax.random.uniform(k_adj2, (N, N)) > 0.5).astype(jnp.float32)
    fw_A, bw_A = normalize_adj(fw_adj, bw_adj)
    params = init_params(k_params, C, S, num_classes)

    fwd = jax.jit(functools.partial(gcn_classifier_forward, num_classes=num_classes))
    cnn_out, node_states, global_states = fwd(cnn_feats, params, fw_A, bw_A)
    jax.block_until_ready((cnn_out, node_states, global_states))

    assert cnn_out.shape == (B, H * W, C)
    assert node_states.shape == (B, N, C)
    assert global_states.shape == (B, C)
    assert bool(jnp.all(jnp.isfinite(cnn_out)))
    assert bool(jnp.all(jnp.isfinite(node_states)))
    assert bool(jnp.all(jnp.isfinite(global_states)))
    print("KERNEL_OK")
</pallas_src>

<mosaic_0001>
module attributes {stable_mosaic.version = 11 : i64} {
  func.func @fused_gcn_kernel(%arg0: i32, %arg1: memref<1x49x128xf32, #tpu.memory_space<vmem>>, %arg2: memref<8x128xbf16, #tpu.memory_space<vmem>>, %arg3: memref<2x9x9xbf16, #tpu.memory_space<vmem>>, %arg4: memref<3x3x128x256xbf16, #tpu.memory_space<vmem>>, %arg5: memref<3x3x256x128xbf16, #tpu.memory_space<vmem>>, %arg6: memref<3x3x1x256xf32, #tpu.memory_space<vmem>>, %arg7: memref<3x1x128xf32, #tpu.memory_space<vmem>>, %arg8: memref<1x9x128xf32, #tpu.memory_space<vmem>>, %arg9: memref<1x1x128xf32, #tpu.memory_space<vmem>>, %arg10: memref<9x128xf32, #tpu.memory_space<vmem>>) attributes {dimension_semantics = [#tpu.dimension_semantics<parallel>], iteration_bounds = array<i64: 2>, scalar_prefetch = 0 : i64, scratch_operands = 1 : i64, tpu.core_type = #tpu.core_type<tc>, window_params = [{transform_indices = @transform_0, window_bounds = array<i64: 1, 49, 128>}, {pipeline_mode = #tpu.pipeline_mode<synchronous>, transform_indices = @transform_1, window_bounds = array<i64: 8, 128>}, {pipeline_mode = #tpu.pipeline_mode<synchronous>, transform_indices = @transform_2, window_bounds = array<i64: 2, 9, 9>}, {pipeline_mode = #tpu.pipeline_mode<synchronous>, transform_indices = @transform_3, window_bounds = array<i64: 3, 3, 128, 256>}, {pipeline_mode = #tpu.pipeline_mode<synchronous>, transform_indices = @transform_4, window_bounds = array<i64: 3, 3, 256, 128>}, {pipeline_mode = #tpu.pipeline_mode<synchronous>, transform_indices = @transform_5, window_bounds = array<i64: 3, 3, 1, 256>}, {pipeline_mode = #tpu.pipeline_mode<synchronous>, transform_indices = @transform_6, window_bounds = array<i64: 3, 1, 128>}, {transform_indices = @transform_7, window_bounds = array<i64: 1, 9, 128>}, {transform_indices = @transform_8, window_bounds = array<i64: 1, 1, 128>}]} {
    %c0 = arith.constant 0 : index
    %c0_0 = arith.constant 0 : index
    %c0_1 = arith.constant 0 : index
    %0 = vector.load %arg1[%c0, %c0_0, %c0_1] : memref<1x49x128xf32, #tpu.memory_space<vmem>>, vector<1x49x128xf32>
    %1 = vector.shape_cast %0 : vector<1x49x128xf32> to vector<49x128xf32>
    %2 = arith.truncf %1 : vector<49x128xf32> to vector<49x128xbf16>
    %c0_2 = arith.constant 0 : index
    %c0_3 = arith.constant 0 : index
    %3 = vector.load %arg2[%c0_2, %c0_3] : memref<8x128xbf16, #tpu.memory_space<vmem>>, vector<8x128xbf16>
    %cst = arith.constant dense<0.000000e+00> : vector<8x49xf32>
    %4 = tpu.matmul %3, %2, %cst {dimension_numbers = #tpu.dot_dimension_numbers<[1], [1], [0], [0], [0, 0, 1, 0], [], []>} : vector<8x128xbf16>, vector<49x128xbf16>, vector<8x49xf32> -> vector<8x49xf32>
    %cst_4 = arith.constant dense<0xFF800000> : vector<8xf32>
    %5 = vector.multi_reduction <maximumf>, %4, %cst_4 [1] : vector<8x49xf32> to vector<8xf32>
    %6 = vector.shape_cast %5 : vector<8xf32> to vector<8x1xf32>
    %7 = vector.broadcast %6 : vector<8x1xf32> to vector<8x49xf32>
    %8 = arith.subf %4, %7 : vector<8x49xf32>
    %9 = math.exp %8 : vector<8x49xf32>
    %cst_5 = arith.constant dense<0.000000e+00> : vector<8xf32>
    %10 = vector.multi_reduction <add>, %9, %cst_5 [1] : vector<8x49xf32> to vector<8xf32>
    %11 = vector.shape_cast %10 : vector<8xf32> to vector<8x1xf32>
    %12 = vector.broadcast %11 : vector<8x1xf32> to vector<8x49xf32>
    %13 = arith.divf %9, %12 : vector<8x49xf32>
    %14 = arith.truncf %13 : vector<8x49xf32> to vector<8x49xbf16>
    %cst_6 = arith.constant dense<0.000000e+00> : vector<8x128xf32>
    %15 = tpu.matmul %14, %2, %cst_6 {dimension_numbers = #tpu.dot_dimension_numbers<[1], [0], [0], [1], [0, 0, 1, 1], [], []>} : vector<8x49xbf16>, vector<49x128xbf16>, vector<8x128xf32> -> vector<8x128xf32>
    %cst_7 = arith.constant dense<0.000000e+00> : vector<128xf32>
    %16 = vector.multi_reduction <add>, %1, %cst_7 [0] : vector<49x128xf32> to vector<128xf32>
    %17 = vector.shape_cast %16 : vector<128xf32> to vector<1x128xf32>
    %cst_8 = arith.constant 4.900000e+01 : f32
    %18 = vector.broadcast %cst_8 : f32 to vector<1x128xf32>
    %19 = arith.divf %17, %18 : vector<1x128xf32>
    %c0_9 = arith.constant 0 : index
    %c0_10 = arith.constant 0 : index
    %c0_11 = arith.constant 0 : index
    %20 = vector.load %arg9[%c0_9, %c0_10, %c0_11] : memref<1x1x128xf32, #tpu.memory_space<vmem>>, vector<1x1x128xf32>
    %21 = vector.shape_cast %20 : vector<1x1x128xf32> to vector<1x128xf32>
    %22 = vector.shape_cast %19 : vector<1x128xf32> to vector<1x1x128xf32>
    tpu.vector_store %arg9[%c0_9, %c0_10, %c0_11], %22 {strides = array<i32>} : memref<1x1x128xf32, #tpu.memory_space<vmem>>, vector<1x1x128xf32>,
    %c0_12 = arith.constant 0 : index
    %c0_13 = arith.constant 0 : index
    %23 = vector.load %arg10[%c0_12, %c0_13] : memref<9x128xf32, #tpu.memory_space<vmem>>, vector<1x128xf32>
    tpu.vector_store %arg10[%c0_12, %c0_13], %19 {strides = array<i32>} : memref<9x128xf32, #tpu.memory_space<vmem>>, vector<1x128xf32>,
    %c1 = arith.constant 1 : index
    %c0_14 = arith.constant 0 : index
    %24 = vector.load %arg10[%c1, %c0_14] : memref<9x128xf32, #tpu.memory_space<vmem>>, vector<8x128xf32>
    tpu.vector_store %arg10[%c1, %c0_14], %15 {strides = array<i32>} : memref<9x128xf32, #tpu.memory_space<vmem>>, vector<8x128xf32>,
    %c0_15 = arith.constant 0 : index
    %c0_16 = arith.constant 0 : index
    %c0_17 = arith.constant 0 : index
    %25 = vector.load %arg3[%c0_15, %c0_16, %c0_17] : memref<2x9x9xbf16, #tpu.memory_space<vmem>>, vector<1x9x9xbf16>
    %26 = vector.shape_cast %25 : vector<1x9x9xbf16> to vector<9x9xbf16>
    %c1_18 = arith.constant 1 : index
    %c0_19 = arith.constant 0 : index
    %c0_20 = arith.constant 0 : index
    %27 = vector.load %arg3[%c1_18, %c0_19, %c0_20] : memref<2x9x9xbf16, #tpu.memory_space<vmem>>, vector<1x9x9xbf16>
    %28 = vector.shape_cast %27 : vector<1x9x9xbf16> to vector<9x9xbf16>
    %c0_21 = arith.constant 0 : index
    %c0_22 = arith.constant 0 : index
    %29 = vector.load %arg10[%c0_21, %c0_22] : memref<9x128xf32, #tpu.memory_space<vmem>>, vector<9x128xf32>
    %30 = arith.truncf %29 : vector<9x128xf32> to vector<9x128xbf16>
    %c0_23 = arith.constant 0 : index
    %c0_24 = arith.constant 0 : index
    %c0_25 = arith.constant 0 : index
    %c0_26 = arith.constant 0 : index
    %31 = vector.load %arg4[%c0_23, %c0_24, %c0_25, %c0_26] : memref<3x3x128x256xbf16, #tpu.memory_space<vmem>>, vector<1x1x128x256xbf16>
    %32 = vector.shape_cast %31 : vector<1x1x128x256xbf16> to vector<128x256xbf16>
    %cst_27 = arith.constant dense<0.000000e+00> : vector<9x256xf32>
    %33 = tpu.matmul %30, %32, %cst_27 {dimension_numbers = #tpu.dot_dimension_numbers<[1], [0], [0], [1], [0, 0, 1, 1], [], []>} : vector<9x128xbf16>, vector<128x256xbf16>, vector<9x256xf32> -> vector<9x256xf32>
    %c0_28 = arith.constant 0 : index
    %c0_29 = arith.constant 0 : index
    %c0_30 = arith.constant 0 : index
    %c0_31 = arith.constant 0 : index
    %34 = vector.load %arg6[%c0_28, %c0_29, %c0_30, %c0_31] : memref<3x3x1x256xf32, #tpu.memory_space<vmem>>, vector<1x1x1x256xf32>
    %35 = vector.shape_cast %34 : vector<1x1x1x256xf32> to vector<1x256xf32>
    %36 = vector.broadcast %35 : vector<1x256xf32> to vector<9x256xf32>
    %37 = arith.addf %33, %36 : vector<9x256xf32>
    %cst_32 = arith.constant 0.000000e+00 : f32
    %38 = vector.broadcast %cst_32 : f32 to vector<9x256xf32>
    %39 = arith.maximumf %37, %38 : vector<9x256xf32>
    %c0_33 = arith.constant 0 : index
    %c1_34 = arith.constant 1 : index
    %c0_35 = arith.constant 0 : index
    %c0_36 = arith.constant 0 : index
    %40 = vector.load %arg4[%c0_33, %c1_34, %c0_35, %c0_36] : memref<3x3x128x256xbf16, #tpu.memory_space<vmem>>, vector<1x1x128x256xbf16>
    %41 = vector.shape_cast %40 : vector<1x1x128x256xbf16> to vector<128x256xbf16>
    %cst_37 = arith.constant dense<0.000000e+00> : vector<9x256xf32>
    %42 = tpu.matmul %30, %41, %cst_37 {dimension_numbers = #tpu.dot_dimension_numbers<[1], [0], [0], [1], [0, 0, 1, 1], [], []>} : vector<9x128xbf16>, vector<128x256xbf16>, vector<9x256xf32> -> vector<9x256xf32>
    %43 = arith.truncf %42 : vector<9x256xf32> to vector<9x256xbf16>
    %cst_38 = arith.constant dense<0.000000e+00> : vector<9x256xf32>
    %44 = tpu.matmul %26, %43, %cst_38 {dimension_numbers = #tpu.dot_dimension_numbers<[1], [0], [0], [1], [0, 0, 1, 1], [], []>} : vector<9x9xbf16>, vector<9x256xbf16>, vector<9x256xf32> -> vector<9x256xf32>
    %c0_39 = arith.constant 0 : index
    %c1_40 = arith.constant 1 : index
    %c0_41 = arith.constant 0 : index
    %c0_42 = arith.constant 0 : index
    %45 = vector.load %arg6[%c0_39, %c1_40, %c0_41, %c0_42] : memref<3x3x1x256xf32, #tpu.memory_space<vmem>>, vector<1x1x1x256xf32>
    %46 = vector.shape_cast %45 : vector<1x1x1x256xf32> to vector<1x256xf32>
    %47 = vector.broadcast %46 : vector<1x256xf32> to vector<9x256xf32>
    %48 = arith.addf %44, %47 : vector<9x256xf32>
    %cst_43 = arith.constant 0.000000e+00 : f32
    %49 = vector.broadcast %cst_43 : f32 to vector<9x256xf32>
    %50 = arith.maximumf %48, %49 : vector<9x256xf32>
    %c0_44 = arith.constant 0 : index
    %c2 = arith.constant 2 : index
    %c0_45 = arith.constant 0 : index
    %c0_46 = arith.constant 0 : index
    %51 = vector.load %arg4[%c0_44, %c2, %c0_45, %c0_46] : memref<3x3x128x256xbf16, #tpu.memory_space<vmem>>, vector<1x1x128x256xbf16>
    %52 = vector.shape_cast %51 : vector<1x1x128x256xbf16> to vector<128x256xbf16>
    %cst_47 = arith.constant dense<0.000000e+00> : vector<9x256xf32>
    %53 = tpu.matmul %30, %52, %cst_47 {dimension_numbers = #tpu.dot_dimension_numbers<[1], [0], [0], [1], [0, 0, 1, 1], [], []>} : vector<9x128xbf16>, vector<128x256xbf16>, vector<9x256xf32> -> vector<9x256xf32>
    %54 = arith.truncf %53 : vector<9x256xf32> to vector<9x256xbf16>
    %cst_48 = arith.constant dense<0.000000e+00> : vector<9x256xf32>
    %55 = tpu.matmul %28, %54, %cst_48 {dimension_numbers = #tpu.dot_dimension_numbers<[1], [0], [0], [1], [0, 0, 1, 1], [], []>} : vector<9x9xbf16>, vector<9x256xbf16>, vector<9x256xf32> -> vector<9x256xf32>
    %c0_49 = arith.constant 0 : index
    %c2_50 = arith.constant 2 : index
    %c0_51 = arith.constant 0 : index
    %c0_52 = arith.constant 0 : index
    %56 = vector.load %arg6[%c0_49, %c2_50, %c0_51, %c0_52] : memref<3x3x1x256xf32, #tpu.memory_space<vmem>>, vector<1x1x1x256xf32>
    %57 = vector.shape_cast %56 : vector<1x1x1x256xf32> to vector<1x256xf32>
    %58 = vector.broadcast %57 : vector<1x256xf32> to vector<9x256xf32>
    %59 = arith.addf %55, %58 : vector<9x256xf32>
    %cst_53 = arith.constant 0.000000e+00 : f32
    %60 = vector.broadcast %cst_53 : f32 to vector<9x256xf32>
    %61 = arith.maximumf %59, %60 : vector<9x256xf32>
    %62 = arith.truncf %39 : vector<9x256xf32> to vector<9x256xbf16>
    %c0_54 = arith.constant 0 : index
    %c0_55 = arith.constant 0 : index
    %c0_56 = arith.constant 0 : index
    %c0_57 = arith.constant 0 : index
    %63 = vector.load %arg5[%c0_54, %c0_55, %c0_56, %c0_57] : memref<3x3x256x128xbf16, #tpu.memory_space<vmem>>, vector<1x1x256x128xbf16>
    %64 = vector.shape_cast %63 : vector<1x1x256x128xbf16> to vector<256x128xbf16>
    %cst_58 = arith.constant dense<0.000000e+00> : vector<9x128xf32>
    %65 = tpu.matmul %62, %64, %cst_58 {dimension_numbers = #tpu.dot_dimension_numbers<[1], [0], [0], [1], [0, 0, 1, 1], [], []>} : vector<9x256xbf16>, vector<256x128xbf16>, vector<9x128xf32> -> vector<9x128xf32>
    %66 = arith.truncf %50 : vector<9x256xf32> to vector<9x256xbf16>
    %c0_59 = arith.constant 0 : index
    %c1_60 = arith.constant 1 : index
    %c0_61 = arith.constant 0 : index
    %c0_62 = arith.constant 0 : index
    %67 = vector.load %arg5[%c0_59, %c1_60, %c0_61, %c0_62] : memref<3x3x256x128xbf16, #tpu.memory_space<vmem>>, vector<1x1x256x128xbf16>
    %68 = vector.shape_cast %67 : vector<1x1x256x128xbf16> to vector<256x128xbf16>
    %cst_63 = arith.constant dense<0.000000e+00> : vector<9x128xf32>
    %69 = tpu.matmul %66, %68, %cst_63 {dimension_numbers = #tpu.dot_dimension_numbers<[1], [0], [0], [1], [0, 0, 1, 1], [], []>} : vector<9x256xbf16>, vector<256x128xbf16>, vector<9x128xf32> -> vector<9x128xf32>
    %70 = arith.addf %65, %69 : vector<9x128xf32>
    %71 = arith.truncf %61 : vector<9x256xf32> to vector<9x256xbf16>
    %c0_64 = arith.constant 0 : index
    %c2_65 = arith.constant 2 : index
    %c0_66 = arith.constant 0 : index
    %c0_67 = arith.constant 0 : index
    %72 = vector.load %arg5[%c0_64, %c2_65, %c0_66, %c0_67] : memref<3x3x256x128xbf16, #tpu.memory_space<vmem>>, vector<1x1x256x128xbf16>
    %73 = vector.shape_cast %72 : vector<1x1x256x128xbf16> to vector<256x128xbf16>
    %cst_68 = arith.constant dense<0.000000e+00> : vector<9x128xf32>
    %74 = tpu.matmul %71, %73, %cst_68 {dimension_numbers = #tpu.dot_dimension_numbers<[1], [0], [0], [1], [0, 0, 1, 1], [], []>} : vector<9x256xbf16>, vector<256x128xbf16>, vector<9x128xf32> -> vector<9x128xf32>
    %75 = arith.addf %70, %74 : vector<9x128xf32>
    %c0_69 = arith.constant 0 : index
    %c0_70 = arith.constant 0 : index
    %c0_71 = arith.constant 0 : index
    %76 = vector.load %arg7[%c0_69, %c0_70, %c0_71] : memref<3x1x128xf32, #tpu.memory_space<vmem>>, vector<1x1x128xf32>
    %77 = vector.shape_cast %76 : vector<1x1x128xf32> to vector<1x128xf32>
    %78 = vector.broadcast %77 : vector<1x128xf32> to vector<9x128xf32>
    %79 = arith.addf %75, %78 : vector<9x128xf32>
    %80 = arith.addf %79, %29 : vector<9x128xf32>
    %cst_72 = arith.constant 0.000000e+00 : f32
    %81 = vector.broadcast %cst_72 : f32 to vector<9x128xf32>
    %82 = arith.maximumf %80, %81 : vector<9x128xf32>
    %c0_73 = arith.constant 0 : index
    %c0_74 = arith.constant 0 : index
    %83 = vector.load %arg10[%c0_73, %c0_74] : memref<9x128xf32, #tpu.memory_space<vmem>>, vector<9x128xf32>
    tpu.vector_store %arg10[%c0_73, %c0_74], %82 {strides = array<i32>} : memref<9x128xf32, #tpu.memory_space<vmem>>, vector<9x128xf32>,
    %c0_75 = arith.constant 0 : index
    %c0_76 = arith.constant 0 : index
    %84 = vector.load %arg10[%c0_75, %c0_76] : memref<9x128xf32, #tpu.memory_space<vmem>>, vector<9x128xf32>
    %85 = arith.truncf %84 : vector<9x128xf32> to vector<9x128xbf16>
    %c1_77 = arith.constant 1 : index
    %c0_78 = arith.constant 0 : index
    %c0_79 = arith.constant 0 : index
    %c0_80 = arith.constant 0 : index
    %86 = vector.load %arg4[%c1_77, %c0_78, %c0_79, %c0_80] : memref<3x3x128x256xbf16, #tpu.memory_space<vmem>>, vector<1x1x128x256xbf16>
    %87 = vector.shape_cast %86 : vector<1x1x128x256xbf16> to vector<128x256xbf16>
    %cst_81 = arith.constant dense<0.000000e+00> : vector<9x256xf32>
    %88 = tpu.matmul %85, %87, %cst_81 {dimension_numbers = #tpu.dot_dimension_numbers<[1], [0], [0], [1], [0, 0, 1, 1], [], []>} : vector<9x128xbf16>, vector<128x256xbf16>, vector<9x256xf32> -> vector<9x256xf32>
    %c1_82 = arith.constant 1 : index
    %c0_83 = arith.constant 0 : index
    %c0_84 = arith.constant 0 : index
    %c0_85 = arith.constant 0 : index
    %89 = vector.load %arg6[%c1_82, %c0_83, %c0_84, %c0_85] : memref<3x3x1x256xf32, #tpu.memory_space<vmem>>, vector<1x1x1x256xf32>
    %90 = vector.shape_cast %89 : vector<1x1x1x256xf32> to vector<1x256xf32>
    %91 = vector.broadcast %90 : vector<1x256xf32> to vector<9x256xf32>
    %92 = arith.addf %88, %91 : vector<9x256xf32>
    %cst_86 = arith.constant 0.000000e+00 : f32
    %93 = vector.broadcast %cst_86 : f32 to vector<9x256xf32>
    %94 = arith.maximumf %92, %93 : vector<9x256xf32>
    %c1_87 = arith.constant 1 : index
    %c1_88 = arith.constant 1 : index
    %c0_89 = arith.constant 0 : index
    %c0_90 = arith.constant 0 : index
    %95 = vector.load %arg4[%c1_87, %c1_88, %c0_89, %c0_90] : memref<3x3x128x256xbf16, #tpu.memory_space<vmem>>, vector<1x1x128x256xbf16>
    %96 = vector.shape_cast %95 : vector<1x1x128x256xbf16> to vector<128x256xbf16>
    %cst_91 = arith.constant dense<0.000000e+00> : vector<9x256xf32>
    %97 = tpu.matmul %85, %96, %cst_91 {dimension_numbers = #tpu.dot_dimension_numbers<[1], [0], [0], [1], [0, 0, 1, 1], [], []>} : vector<9x128xbf16>, vector<128x256xbf16>, vector<9x256xf32> -> vector<9x256xf32>
    %98 = arith.truncf %97 : vector<9x256xf32> to vector<9x256xbf16>
    %cst_92 = arith.constant dense<0.000000e+00> : vector<9x256xf32>
    %99 = tpu.matmul %26, %98, %cst_92 {dimension_numbers = #tpu.dot_dimension_numbers<[1], [0], [0], [1], [0, 0, 1, 1], [], []>} : vector<9x9xbf16>, vector<9x256xbf16>, vector<9x256xf32> -> vector<9x256xf32>
    %c1_93 = arith.constant 1 : index
    %c1_94 = arith.constant 1 : index
    %c0_95 = arith.constant 0 : index
    %c0_96 = arith.constant 0 : index
    %100 = vector.load %arg6[%c1_93, %c1_94, %c0_95, %c0_96] : memref<3x3x1x256xf32, #tpu.memory_space<vmem>>, vector<1x1x1x256xf32>
    %101 = vector.shape_cast %100 : vector<1x1x1x256xf32> to vector<1x256xf32>
    %102 = vector.broadcast %101 : vector<1x256xf32> to vector<9x256xf32>
    %103 = arith.addf %99, %102 : vector<9x256xf32>
    %cst_97 = arith.constant 0.000000e+00 : f32
    %104 = vector.broadcast %cst_97 : f32 to vector<9x256xf32>
    %105 = arith.maximumf %103, %104 : vector<9x256xf32>
    %c1_98 = arith.constant 1 : index
    %c2_99 = arith.constant 2 : index
    %c0_100 = arith.constant 0 : index
    %c0_101 = arith.constant 0 : index
    %106 = vector.load %arg4[%c1_98, %c2_99, %c0_100, %c0_101] : memref<3x3x128x256xbf16, #tpu.memory_space<vmem>>, vector<1x1x128x256xbf16>
    %107 = vector.shape_cast %106 : vector<1x1x128x256xbf16> to vector<128x256xbf16>
    %cst_102 = arith.constant dense<0.000000e+00> : vector<9x256xf32>
    %108 = tpu.matmul %85, %107, %cst_102 {dimension_numbers = #tpu.dot_dimension_numbers<[1], [0], [0], [1], [0, 0, 1, 1], [], []>} : vector<9x128xbf16>, vector<128x256xbf16>, vector<9x256xf32> -> vector<9x256xf32>
    %109 = arith.truncf %108 : vector<9x256xf32> to vector<9x256xbf16>
    %cst_103 = arith.constant dense<0.000000e+00> : vector<9x256xf32>
    %110 = tpu.matmul %28, %109, %cst_103 {dimension_numbers = #tpu.dot_dimension_numbers<[1], [0], [0], [1], [0, 0, 1, 1], [], []>} : vector<9x9xbf16>, vector<9x256xbf16>, vector<9x256xf32> -> vector<9x256xf32>
    %c1_104 = arith.constant 1 : index
    %c2_105 = arith.constant 2 : index
    %c0_106 = arith.constant 0 : index
    %c0_107 = arith.constant 0 : index
    %111 = vector.load %arg6[%c1_104, %c2_105, %c0_106, %c0_107] : memref<3x3x1x256xf32, #tpu.memory_space<vmem>>, vector<1x1x1x256xf32>
    %112 = vector.shape_cast %111 : vector<1x1x1x256xf32> to vector<1x256xf32>
    %113 = vector.broadcast %112 : vector<1x256xf32> to vector<9x256xf32>
    %114 = arith.addf %110, %113 : vector<9x256xf32>
    %cst_108 = arith.constant 0.000000e+00 : f32
    %115 = vector.broadcast %cst_108 : f32 to vector<9x256xf32>
    %116 = arith.maximumf %114, %115 : vector<9x256xf32>
    %117 = arith.truncf %94 : vector<9x256xf32> to vector<9x256xbf16>
    %c1_109 = arith.constant 1 : index
    %c0_110 = arith.constant 0 : index
    %c0_111 = arith.constant 0 : index
    %c0_112 = arith.constant 0 : index
    %118 = vector.load %arg5[%c1_109, %c0_110, %c0_111, %c0_112] : memref<3x3x256x128xbf16, #tpu.memory_space<vmem>>, vector<1x1x256x128xbf16>
    %119 = vector.shape_cast %118 : vector<1x1x256x128xbf16> to vector<256x128xbf16>
    %cst_113 = arith.constant dense<0.000000e+00> : vector<9x128xf32>
    %120 = tpu.matmul %117, %119, %cst_113 {dimension_numbers = #tpu.dot_dimension_numbers<[1], [0], [0], [1], [0, 0, 1, 1], [], []>} : vector<9x256xbf16>, vector<256x128xbf16>, vector<9x128xf32> -> vector<9x128xf32>
    %121 = arith.truncf %105 : vector<9x256xf32> to vector<9x256xbf16>
    %c1_114 = arith.constant 1 : index
    %c1_115 = arith.constant 1 : index
    %c0_116 = arith.constant 0 : index
    %c0_117 = arith.constant 0 : index
    %122 = vector.load %arg5[%c1_114, %c1_115, %c0_116, %c0_117] : memref<3x3x256x128xbf16, #tpu.memory_space<vmem>>, vector<1x1x256x128xbf16>
    %123 = vector.shape_cast %122 : vector<1x1x256x128xbf16> to vector<256x128xbf16>
    %cst_118 = arith.constant dense<0.000000e+00> : vector<9x128xf32>
    %124 = tpu.matmul %121, %123, %cst_118 {dimension_numbers = #tpu.dot_dimension_numbers<[1], [0], [0], [1], [0, 0, 1, 1], [], []>} : vector<9x256xbf16>, vector<256x128xbf16>, vector<9x128xf32> -> vector<9x128xf32>
    %125 = arith.addf %120, %124 : vector<9x128xf32>
    %126 = arith.truncf %116 : vector<9x256xf32> to vector<9x256xbf16>
    %c1_119 = arith.constant 1 : index
    %c2_120 = arith.constant 2 : index
    %c0_121 = arith.constant 0 : index
    %c0_122 = arith.constant 0 : index
    %127 = vector.load %arg5[%c1_119, %c2_120, %c0_121, %c0_122] : memref<3x3x256x128xbf16, #tpu.memory_space<vmem>>, vector<1x1x256x128xbf16>
    %128 = vector.shape_cast %127 : vector<1x1x256x128xbf16> to vector<256x128xbf16>
    %cst_123 = arith.constant dense<0.000000e+00> : vector<9x128xf32>
    %129 = tpu.matmul %126, %128, %cst_123 {dimension_numbers = #tpu.dot_dimension_numbers<[1], [0], [0], [1], [0, 0, 1, 1], [], []>} : vector<9x256xbf16>, vector<256x128xbf16>, vector<9x128xf32> -> vector<9x128xf32>
    %130 = arith.addf %125, %129 : vector<9x128xf32>
    %c1_124 = arith.constant 1 : index
    %c0_125 = arith.constant 0 : index
    %c0_126 = arith.constant 0 : index
    %131 = vector.load %arg7[%c1_124, %c0_125, %c0_126] : memref<3x1x128xf32, #tpu.memory_space<vmem>>, vector<1x1x128xf32>
    %132 = vector.shape_cast %131 : vector<1x1x128xf32> to vector<1x128xf32>
    %133 = vector.broadcast %132 : vector<1x128xf32> to vector<9x128xf32>
    %134 = arith.addf %130, %133 : vector<9x128xf32>
    %135 = arith.addf %134, %84 : vector<9x128xf32>
    %cst_127 = arith.constant 0.000000e+00 : f32
    %136 = vector.broadcast %cst_127 : f32 to vector<9x128xf32>
    %137 = arith.maximumf %135, %136 : vector<9x128xf32>
    %c0_128 = arith.constant 0 : index
    %c0_129 = arith.constant 0 : index
    %138 = vector.load %arg10[%c0_128, %c0_129] : memref<9x128xf32, #tpu.memory_space<vmem>>, vector<9x128xf32>
    tpu.vector_store %arg10[%c0_128, %c0_129], %137 {strides = array<i32>} : memref<9x128xf32, #tpu.memory_space<vmem>>, vector<9x128xf32>,
    %c0_130 = arith.constant 0 : index
    %c0_131 = arith.constant 0 : index
    %139 = vector.load %arg10[%c0_130, %c0_131] : memref<9x128xf32, #tpu.memory_space<vmem>>, vector<9x128xf32>
    %140 = arith.truncf %139 : vector<9x128xf32> to vector<9x128xbf16>
    %c2_132 = arith.constant 2 : index
    %c0_133 = arith.constant 0 : index
    %c0_134 = arith.constant 0 : index
    %c0_135 = arith.constant 0 : index
    %141 = vector.load %arg4[%c2_132, %c0_133, %c0_134, %c0_135] : memref<3x3x128x256xbf16, #tpu.memory_space<vmem>>, vector<1x1x128x256xbf16>
    %142 = vector.shape_cast %141 : vector<1x1x128x256xbf16> to vector<128x256xbf16>
    %cst_136 = arith.constant dense<0.000000e+00> : vector<9x256xf32>
    %143 = tpu.matmul %140, %142, %cst_136 {dimension_numbers = #tpu.dot_dimension_numbers<[1], [0], [0], [1], [0, 0, 1, 1], [], []>} : vector<9x128xbf16>, vector<128x256xbf16>, vector<9x256xf32> -> vector<9x256xf32>
    %c2_137 = arith.constant 2 : index
    %c0_138 = arith.constant 0 : index
    %c0_139 = arith.constant 0 : index
    %c0_140 = arith.constant 0 : index
    %144 = vector.load %arg6[%c2_137, %c0_138, %c0_139, %c0_140] : memref<3x3x1x256xf32, #tpu.memory_space<vmem>>, vector<1x1x1x256xf32>
    %145 = vector.shape_cast %144 : vector<1x1x1x256xf32> to vector<1x256xf32>
    %146 = vector.broadcast %145 : vector<1x256xf32> to vector<9x256xf32>
    %147 = arith.addf %143, %146 : vector<9x256xf32>
    %cst_141 = arith.constant 0.000000e+00 : f32
    %148 = vector.broadcast %cst_141 : f32 to vector<9x256xf32>
    %149 = arith.maximumf %147, %148 : vector<9x256xf32>
    %c2_142 = arith.constant 2 : index
    %c1_143 = arith.constant 1 : index
    %c0_144 = arith.constant 0 : index
    %c0_145 = arith.constant 0 : index
    %150 = vector.load %arg4[%c2_142, %c1_143, %c0_144, %c0_145] : memref<3x3x128x256xbf16, #tpu.memory_space<vmem>>, vector<1x1x128x256xbf16>
    %151 = vector.shape_cast %150 : vector<1x1x128x256xbf16> to vector<128x256xbf16>
    %cst_146 = arith.constant dense<0.000000e+00> : vector<9x256xf32>
    %152 = tpu.matmul %140, %151, %cst_146 {dimension_numbers = #tpu.dot_dimension_numbers<[1], [0], [0], [1], [0, 0, 1, 1], [], []>} : vector<9x128xbf16>, vector<128x256xbf16>, vector<9x256xf32> -> vector<9x256xf32>
    %153 = arith.truncf %152 : vector<9x256xf32> to vector<9x256xbf16>
    %cst_147 = arith.constant dense<0.000000e+00> : vector<9x256xf32>
    %154 = tpu.matmul %26, %153, %cst_147 {dimension_numbers = #tpu.dot_dimension_numbers<[1], [0], [0], [1], [0, 0, 1, 1], [], []>} : vector<9x9xbf16>, vector<9x256xbf16>, vector<9x256xf32> -> vector<9x256xf32>
    %c2_148 = arith.constant 2 : index
    %c1_149 = arith.constant 1 : index
    %c0_150 = arith.constant 0 : index
    %c0_151 = arith.constant 0 : index
    %155 = vector.load %arg6[%c2_148, %c1_149, %c0_150, %c0_151] : memref<3x3x1x256xf32, #tpu.memory_space<vmem>>, vector<1x1x1x256xf32>
    %156 = vector.shape_cast %155 : vector<1x1x1x256xf32> to vector<1x256xf32>
    %157 = vector.broadcast %156 : vector<1x256xf32> to vector<9x256xf32>
    %158 = arith.addf %154, %157 : vector<9x256xf32>
    %cst_152 = arith.constant 0.000000e+00 : f32
    %159 = vector.broadcast %cst_152 : f32 to vector<9x256xf32>
    %160 = arith.maximumf %158, %159 : vector<9x256xf32>
    %c2_153 = arith.constant 2 : index
    %c2_154 = arith.constant 2 : index
    %c0_155 = arith.constant 0 : index
    %c0_156 = arith.constant 0 : index
    %161 = vector.load %arg4[%c2_153, %c2_154, %c0_155, %c0_156] : memref<3x3x128x256xbf16, #tpu.memory_space<vmem>>, vector<1x1x128x256xbf16>
    %162 = vector.shape_cast %161 : vector<1x1x128x256xbf16> to vector<128x256xbf16>
    %cst_157 = arith.constant dense<0.000000e+00> : vector<9x256xf32>
    %163 = tpu.matmul %140, %162, %cst_157 {dimension_numbers = #tpu.dot_dimension_numbers<[1], [0], [0], [1], [0, 0, 1, 1], [], []>} : vector<9x128xbf16>, vector<128x256xbf16>, vector<9x256xf32> -> vector<9x256xf32>
    %164 = arith.truncf %163 : vector<9x256xf32> to vector<9x256xbf16>
    %cst_158 = arith.constant dense<0.000000e+00> : vector<9x256xf32>
    %165 = tpu.matmul %28, %164, %cst_158 {dimension_numbers = #tpu.dot_dimension_numbers<[1], [0], [0], [1], [0, 0, 1, 1], [], []>} : vector<9x9xbf16>, vector<9x256xbf16>, vector<9x256xf32> -> vector<9x256xf32>
    %c2_159 = arith.constant 2 : index
    %c2_160 = arith.constant 2 : index
    %c0_161 = arith.constant 0 : index
    %c0_162 = arith.constant 0 : index
    %166 = vector.load %arg6[%c2_159, %c2_160, %c0_161, %c0_162] : memref<3x3x1x256xf32, #tpu.memory_space<vmem>>, vector<1x1x1x256xf32>
    %167 = vector.shape_cast %166 : vector<1x1x1x256xf32> to vector<1x256xf32>
    %168 = vector.broadcast %167 : vector<1x256xf32> to vector<9x256xf32>
    %169 = arith.addf %165, %168 : vector<9x256xf32>
    %cst_163 = arith.constant 0.000000e+00 : f32
    %170 = vector.broadcast %cst_163 : f32 to vector<9x256xf32>
    %171 = arith.maximumf %169, %170 : vector<9x256xf32>
    %172 = arith.truncf %149 : vector<9x256xf32> to vector<9x256xbf16>
    %c2_164 = arith.constant 2 : index
    %c0_165 = arith.constant 0 : index
    %c0_166 = arith.constant 0 : index
    %c0_167 = arith.constant 0 : index
    %173 = vector.load %arg5[%c2_164, %c0_165, %c0_166, %c0_167] : memref<3x3x256x128xbf16, #tpu.memory_space<vmem>>, vector<1x1x256x128xbf16>
    %174 = vector.shape_cast %173 : vector<1x1x256x128xbf16> to vector<256x128xbf16>
    %cst_168 = arith.constant dense<0.000000e+00> : vector<9x128xf32>
    %175 = tpu.matmul %172, %174, %cst_168 {dimension_numbers = #tpu.dot_dimension_numbers<[1], [0], [0], [1], [0, 0, 1, 1], [], []>} : vector<9x256xbf16>, vector<256x128xbf16>, vector<9x128xf32> -> vector<9x128xf32>
    %176 = arith.truncf %160 : vector<9x256xf32> to vector<9x256xbf16>
    %c2_169 = arith.constant 2 : index
    %c1_170 = arith.constant 1 : index
    %c0_171 = arith.constant 0 : index
    %c0_172 = arith.constant 0 : index
    %177 = vector.load %arg5[%c2_169, %c1_170, %c0_171, %c0_172] : memref<3x3x256x128xbf16, #tpu.memory_space<vmem>>, vector<1x1x256x128xbf16>
    %178 = vector.shape_cast %177 : vector<1x1x256x128xbf16> to vector<256x128xbf16>
    %cst_173 = arith.constant dense<0.000000e+00> : vector<9x128xf32>
    %179 = tpu.matmul %176, %178, %cst_173 {dimension_numbers = #tpu.dot_dimension_numbers<[1], [0], [0], [1], [0, 0, 1, 1], [], []>} : vector<9x256xbf16>, vector<256x128xbf16>, vector<9x128xf32> -> vector<9x128xf32>
    %180 = arith.addf %175, %179 : vector<9x128xf32>
    %181 = arith.truncf %171 : vector<9x256xf32> to vector<9x256xbf16>
    %c2_174 = arith.constant 2 : index
    %c2_175 = arith.constant 2 : index
    %c0_176 = arith.constant 0 : index
    %c0_177 = arith.constant 0 : index
    %182 = vector.load %arg5[%c2_174, %c2_175, %c0_176, %c0_177] : memref<3x3x256x128xbf16, #tpu.memory_space<vmem>>, vector<1x1x256x128xbf16>
    %183 = vector.shape_cast %182 : vector<1x1x256x128xbf16> to vector<256x128xbf16>
    %cst_178 = arith.constant dense<0.000000e+00> : vector<9x128xf32>
    %184 = tpu.matmul %181, %183, %cst_178 {dimension_numbers = #tpu.dot_dimension_numbers<[1], [0], [0], [1], [0, 0, 1, 1], [], []>} : vector<9x256xbf16>, vector<256x128xbf16>, vector<9x128xf32> -> vector<9x128xf32>
    %185 = arith.addf %180, %184 : vector<9x128xf32>
    %c2_179 = arith.constant 2 : index
    %c0_180 = arith.constant 0 : index
    %c0_181 = arith.constant 0 : index
    %186 = vector.load %arg7[%c2_179, %c0_180, %c0_181] : memref<3x1x128xf32, #tpu.memory_space<vmem>>, vector<1x1x128xf32>
    %187 = vector.shape_cast %186 : vector<1x1x128xf32> to vector<1x128xf32>
    %188 = vector.broadcast %187 : vector<1x128xf32> to vector<9x128xf32>
    %189 = arith.addf %185, %188 : vector<9x128xf32>
    %190 = arith.addf %189, %139 : vector<9x128xf32>
    %cst_182 = arith.constant 0.000000e+00 : f32
    %191 = vector.broadcast %cst_182 : f32 to vector<9x128xf32>
    %192 = arith.maximumf %190, %191 : vector<9x128xf32>
    %c0_183 = arith.constant 0 : index
    %c0_184 = arith.constant 0 : index
    %193 = vector.load %arg10[%c0_183, %c0_184] : memref<9x128xf32, #tpu.memory_space<vmem>>, vector<9x128xf32>
    tpu.vector_store %arg10[%c0_183, %c0_184], %192 {strides = array<i32>} : memref<9x128xf32, #tpu.memory_space<vmem>>, vector<9x128xf32>,
    %c0_185 = arith.constant 0 : index
    %c0_186 = arith.constant 0 : index
    %194 = vector.load %arg10[%c0_185, %c0_186] : memref<9x128xf32, #tpu.memory_space<vmem>>, vector<9x128xf32>
    %c0_187 = arith.constant 0 : index
    %c0_188 = arith.constant 0 : index
    %c0_189 = arith.constant 0 : index
    %195 = vector.load %arg8[%c0_187, %c0_188, %c0_189] : memref<1x9x128xf32, #tpu.memory_space<vmem>>, vector<1x9x128xf32>
    %196 = vector.shape_cast %195 : vector<1x9x128xf32> to vector<9x128xf32>
    %197 = vector.shape_cast %194 : vector<9x128xf32> to vector<1x9x128xf32>
    tpu.vector_store %arg8[%c0_187, %c0_188, %c0_189], %197 {strides = array<i32>} : memref<1x9x128xf32, #tpu.memory_space<vmem>>, vector<1x9x128xf32>,
    return
  }
  func.func @transform_0(%arg0: i32) -> (i32, i32, i32) {
    %c0_i32 = arith.constant 0 : i32
    %c0_i32_0 = arith.constant 0 : i32
    %c0_i32_1 = arith.constant 0 : i32
    return %arg0, %c0_i32, %c0_i32_0 : i32, i32, i32
  }
  func.func @transform_1(%arg0: i32) -> (i32, i32) {
    %c0_i32 = arith.constant 0 : i32
    %c0_i32_0 = arith.constant 0 : i32
    %c0_i32_1 = arith.constant 0 : i32
    return %c0_i32, %c0_i32_0 : i32, i32
  }
  func.func @transform_2(%arg0: i32) -> (i32, i32, i32) {
    %c0_i32 = arith.constant 0 : i32
    %c0_i32_0 = arith.constant 0 : i32
    %c0_i32_1 = arith.constant 0 : i32
    %c0_i32_2 = arith.constant 0 : i32
    return %c0_i32, %c0_i32_0, %c0_i32_1 : i32, i32, i32
  }
  func.func @transform_3(%arg0: i32) -> (i32, i32, i32, i32) {
    %c0_i32 = arith.constant 0 : i32
    %c0_i32_0 = arith.constant 0 : i32
    %c0_i32_1 = arith.constant 0 : i32
    %c0_i32_2 = arith.constant 0 : i32
    %c0_i32_3 = arith.constant 0 : i32
    return %c0_i32, %c0_i32_0, %c0_i32_1, %c0_i32_2 : i32, i32, i32, i32
  }
  func.func @transform_4(%arg0: i32) -> (i32, i32, i32, i32) {
    %c0_i32 = arith.constant 0 : i32
    %c0_i32_0 = arith.constant 0 : i32
    %c0_i32_1 = arith.constant 0 : i32
    %c0_i32_2 = arith.constant 0 : i32
    %c0_i32_3 = arith.constant 0 : i32
    return %c0_i32, %c0_i32_0, %c0_i32_1, %c0_i32_2 : i32, i32, i32, i32
  }
  func.func @transform_5(%arg0: i32) -> (i32, i32, i32, i32) {
    %c0_i32 = arith.constant 0 : i32
    %c0_i32_0 = arith.constant 0 : i32
    %c0_i32_1 = arith.constant 0 : i32
    %c0_i32_2 = arith.constant 0 : i32
    %c0_i32_3 = arith.constant 0 : i32
    return %c0_i32, %c0_i32_0, %c0_i32_1, %c0_i32_2 : i32, i32, i32, i32
  }
  func.func @transform_6(%arg0: i32) -> (i32, i32, i32) {
    %c0_i32 = arith.constant 0 : i32
    %c0_i32_0 = arith.constant 0 : i32
    %c0_i32_1 = arith.constant 0 : i32
    %c0_i32_2 = arith.constant 0 : i32
    return %c0_i32, %c0_i32_0, %c0_i32_1 : i32, i32, i32
  }
  func.func @transform_7(%arg0: i32) -> (i32, i32, i32) {
    %c0_i32 = arith.constant 0 : i32
    %c0_i32_0 = arith.constant 0 : i32
    %c0_i32_1 = arith.constant 0 : i32
    return %arg0, %c0_i32, %c0_i32_0 : i32, i32, i32
  }
  func.func @transform_8(%arg0: i32) -> (i32, i32, i32) {
    %c0_i32 = arith.constant 0 : i32
    %c0_i32_0 = arith.constant 0 : i32
    %c0_i32_1 = arith.constant 0 : i32
    return %arg0, %c0_i32, %c0_i32_0 : i32, i32, i32
  }
}

</mosaic_0001>

<llo_original>
// kernel: gcn_classifier_forward.1
$region0: #{gcn_classifier_forward.1}
  #allocation0 [shape = 'u32[]', space=smem, size = 0x4, offset = 0x4, fixed_abs, tag = 'smem constant byte address 0x4 - core index']
  #allocation1 [shape = 'u32[144,128]{1,0:T(1,128)}', space=vmem, size = 0x12000, scoped, tag = 'internal scratch']
  #allocation2 [shape = 'f32[9,128]{1,0:T(8,128)}', space=vmem, size = 0x2000, scoped, tag = 'scratch operand']
  %s0 = inlined_call_operand.vmem [shape: f32[2,49,128], index: 0, kind: input, shape index: {}]
  %s1 = inlined_call_operand.vmem [shape: bf16[8,128], index: 1, kind: input, shape index: {}]
  %s2 = inlined_call_operand.vmem [shape: bf16[2,9,9], index: 2, kind: input, shape index: {}]
  %s3 = inlined_call_operand.hbm [shape: bf16[3,3,128,256], index: 3, kind: input, shape index: {}]
  %s4 = inlined_call_operand.hbm [shape: bf16[3,3,256,128], index: 4, kind: input, shape index: {}]
  %s5 = inlined_call_operand.vmem [shape: f32[3,3,1,256], index: 5, kind: input, shape index: {}]
  %s6 = inlined_call_operand.vmem [shape: f32[3,1,128], index: 6, kind: input, shape index: {}]
  %s7 = inlined_call_operand.vmem [shape: f32[2,9,128], index: 7, kind: output, shape index: {0}]
  %s8 = inlined_call_operand.hbm [shape: f32[2,1,128], index: 8, kind: output, shape index: {1}]
  %9 = xla_tuple %s7, %s8
  %s10 = sld [smem:[#allocation0]]
  $region77: #{gcn_classifier_forward.1} parent=0
    _
  %s12 = ssub.s32 1, %s10
  %s13 = scalar_select 0, %s12, %s10
  $region1: #{gcn_classifier_forward.1} parent=0
    #allocation3 [shape = 'u8[589824]{0}', space=vmem, size = 0x90000, scoped, tag = 'input window, operand 3, single buffered']
    #allocation4 [shape = 's32[2]{0}', space=sflag, size = 0x8, scoped, tag = 'scoped memory for gcn_classifier_forward.1']
    #allocation5 [shape = 's32[2]{0}', space=sflag, size = 0x8, scoped, tag = 'scoped memory for gcn_classifier_forward.1']
    #allocation6 [shape = 'u8[589824]{0}', space=vmem, size = 0x90000, scoped, tag = 'input window, operand 4, single buffered']
    #allocation7 [shape = 's32[1]{0}', space=sflag, size = 0x4, scoped, tag = 'scoped memory for gcn_classifier_forward.1']
    #allocation8 [shape = 'u8[1024]{0}', space=vmem, size = 0x400, scoped, tag = 'output window, operand 1']
    %14 = vsyncpa [#allocation4], 0
    %15 = vsyncpa [#allocation7], 0
    %16 = vsyncpa [#allocation5], 0
    %s17 = scalar_lea.sflag [#allocation5], 1
    %18 = vsyncpa %s17, 0
    loop: start=0, step=1, limit=4
    $region2: #{gcn_classifier_forward.1} parent=1 // loop_pre_header
      _
    $region3: #{gcn_classifier_forward.1} parent=1 // loop_header
      %s20 = sphi 0, %s24
      %p21 = scmp.ge.s32.totalorder %s20, 4
      %s30 = sphi 0, %s32
      %s33 = sphi 0, %s30
      %s34 = sphi 0, %s33
      %s50 = sphi 0, %s34
      %s54 = sphi 0, %s54
      %s56 = sphi 0, %s54
      %s57 = sphi 0, %s56
      %s71 = sphi 0, %s57
      %s75 = sphi 0, %s75
      %s77 = sphi 0, %s75
      %s78 = sphi 0, %s77
      %s92 = sphi 0, %s78
      %s96 = sphi 0, %s96
      %s98 = sphi 0, %s96
      %s99 = sphi 0, %s98
      %s113 = sphi 0, %s99
      %s117 = sphi 0, %s117
      %s119 = sphi 0, %s117
      %s120 = sphi 0, %s119
      %s134 = sphi 0, %s120
      %s138 = sphi 0, %s138
      %s140 = sphi 0, %s138
      %s141 = sphi 0, %s140
      %s155 = sphi 0, %s141
      %s159 = sphi 0, %s159
      %s161 = sphi 0, %s159
      %s162 = sphi 0, %s161
      %s176 = sphi 0, %s162
      %s182 = sphi 0, %s184
      %s185 = sphi 0, %s182
      %s186 = sphi 0, %s185
      %s202 = sphi 0, %s186
      %s208 = sphi 0, %s210
      %s211 = sphi 0, %s208
      %s212 = sphi 0, %s211
      %s228 = sphi 0, %s212
    $region4: #{gcn_classifier_forward.1} parent=1 // loop_header_branch
      %23 = sbr.rel (%p21) target = $region8
    $region5: #{gcn_classifier_forward.1} parent=1 // loop_body
      %s25 = ssub.s32 %s20, 1
      %s26 = ssub.s32 %s20, 2
      %s27 = sadd.s32 %s20, 1
      %s28 = ssub.s32 %s20, %s27
      %p29 = scmp.eq.s32.totalorder %s28, 0
      %s31 = sadd.s32 %s30, 1
      %s32 = scalar_select %p29, %s30, %s31
      %p35 = pneg %p29
      %p36 = scmp.eq.s32.totalorder %s20, 1
      %p37 = por %p35, %p36
      %p38 = scmp.ne.s32.totalorder %s30, %s33
      %p39 = scmp.eq.s32.totalorder %s20, 0
      %p40 = por %p38, %p39
      %p41 = scmp.ne.s32.totalorder %s30, %s33
      %p42 = scmp.eq.s32.totalorder %s25, 1
      %p43 = por %p41, %p42
      %p44 = scmp.ne.s32.totalorder %s33, %s34
      %p45 = scmp.eq.s32.totalorder %s25, 0
      %p46 = por %p44, %p45
      %p47 = scmp.ne.s32.totalorder %s33, %s34
      %p48 = scmp.eq.s32.totalorder %s26, 1
      %p49 = por %p47, %p48
      %p51 = scmp.ne.s32.totalorder %s34, %s50
      %p52 = scmp.eq.s32.totalorder %s26, 0
      %p53 = por %p51, %p52
      %s55 = sadd.s32 %s54, 1
      %p58 = scmp.eq.s32.totalorder %s20, 1
      %p59 = scmp.ne.s32.totalorder %s54, %s56
      %p60 = scmp.eq.s32.totalorder %s20, 0
      %p61 = por %p59, %p60
      %p62 = scmp.ne.s32.totalorder %s54, %s56
      %p63 = scmp.eq.s32.totalorder %s25, 1
      %p64 = por %p62, %p63
      %p65 = scmp.ne.s32.totalorder %s56, %s57
      %p66 = scmp.eq.s32.totalorder %s25, 0
      %p67 = por %p65, %p66
      %p68 = scmp.ne.s32.totalorder %s56, %s57
      %p69 = scmp.eq.s32.totalorder %s26, 1
      %p70 = por %p68, %p69
      %p72 = scmp.ne.s32.totalorder %s57, %s71
      %p73 = scmp.eq.s32.totalorder %s26, 0
      %p74 = por %p72, %p73
      %s76 = sadd.s32 %s75, 1
      %p79 = scmp.eq.s32.totalorder %s20, 1
      %p80 = scmp.ne.s32.totalorder %s75, %s77
      %p81 = scmp.eq.s32.totalorder %s20, 0
      %p82 = por %p80, %p81
      %p83 = scmp.ne.s32.totalorder %s75, %s77
      %p84 = scmp.eq.s32.totalorder %s25, 1
      %p85 = por %p83, %p84
      %p86 = scmp.ne.s32.totalorder %s77, %s78
      %p87 = scmp.eq.s32.totalorder %s25, 0
      %p88 = por %p86, %p87
      %p89 = scmp.ne.s32.totalorder %s77, %s78
      %p90 = scmp.eq.s32.totalorder %s26, 1
      %p91 = por %p89, %p90
      %p93 = scmp.ne.s32.totalorder %s78, %s92
      %p94 = scmp.eq.s32.totalorder %s26, 0
      %p95 = por %p93, %p94
      %s97 = sadd.s32 %s96, 1
      %p100 = scmp.eq.s32.totalorder %s20, 1
      %p101 = scmp.ne.s32.totalorder %s96, %s98
      %p102 = scmp.eq.s32.totalorder %s20, 0
      %p103 = por %p101, %p102
      %p104 = scmp.ne.s32.totalorder %s96, %s98
      %p105 = scmp.eq.s32.totalorder %s25, 1
      %p106 = por %p104, %p105
      %p107 = scmp.ne.s32.totalorder %s98, %s99
      %p108 = scmp.eq.s32.totalorder %s25, 0
      %p109 = por %p107, %p108
      %p110 = scmp.ne.s32.totalorder %s98, %s99
      %p111 = scmp.eq.s32.totalorder %s26, 1
      %p112 = por %p110, %p111
      %p114 = scmp.ne.s32.totalorder %s99, %s113
      %p115 = scmp.eq.s32.totalorder %s26, 0
      %p116 = por %p114, %p115
      %s118 = sadd.s32 %s117, 1
      %p121 = scmp.eq.s32.totalorder %s20, 1
      %p122 = scmp.ne.s32.totalorder %s117, %s119
      %p123 = scmp.eq.s32.totalorder %s20, 0
      %p124 = por %p122, %p123
      %p125 = scmp.ne.s32.totalorder %s117, %s119
      %p126 = scmp.eq.s32.totalorder %s25, 1
      %p127 = por %p125, %p126
      %p128 = scmp.ne.s32.totalorder %s119, %s120
      %p129 = scmp.eq.s32.totalorder %s25, 0
      %p130 = por %p128, %p129
      %p131 = scmp.ne.s32.totalorder %s119, %s120
      %p132 = scmp.eq.s32.totalorder %s26, 1
      %p133 = por %p131, %p132
      %p135 = scmp.ne.s32.totalorder %s120, %s134
      %p136 = scmp.eq.s32.totalorder %s26, 0
      %p137 = por %p135, %p136
      %s139 = sadd.s32 %s138, 1
      %p142 = scmp.eq.s32.totalorder %s20, 1
      %p143 = scmp.ne.s32.totalorder %s138, %s140
      %p144 = scmp.eq.s32.totalorder %s20, 0
      %p145 = por %p143, %p144
      %p146 = scmp.ne.s32.totalorder %s138, %s140
      %p147 = scmp.eq.s32.totalorder %s25, 1
      %p148 = por %p146, %p147
      %p149 = scmp.ne.s32.totalorder %s140, %s141
      %p150 = scmp.eq.s32.totalorder %s25, 0
      %p151 = por %p149, %p150
      %p152 = scmp.ne.s32.totalorder %s140, %s141
      %p153 = scmp.eq.s32.totalorder %s26, 1
      %p154 = por %p152, %p153
      %p156 = scmp.ne.s32.totalorder %s141, %s155
      %p157 = scmp.eq.s32.totalorder %s26, 0
      %p158 = por %p156, %p157
      %s160 = sadd.s32 %s159, 1
      %p163 = scmp.eq.s32.totalorder %s20, 1
      %p164 = scmp.ne.s32.totalorder %s159, %s161
      %p165 = scmp.eq.s32.totalorder %s20, 0
      %p166 = por %p164, %p165
      %p167 = scmp.ne.s32.totalorder %s159, %s161
      %p168 = scmp.eq.s32.totalorder %s25, 1
      %p169 = por %p167, %p168
      %p170 = scmp.ne.s32.totalorder %s161, %s162
      %p171 = scmp.eq.s32.totalorder %s25, 0
      %p172 = por %p170, %p171
      %p173 = scmp.ne.s32.totalorder %s161, %s162
      %p174 = scmp.eq.s32.totalorder %s26, 1
      %p175 = por %p173, %p174
      %p177 = scmp.ne.s32.totalorder %s162, %s176
      %p178 = scmp.eq.s32.totalorder %s26, 0
      %p179 = por %p177, %p178
      %s180 = ssub.s32 %s20, %s27
      %p181 = scmp.eq.s32.totalorder %s180, 0
      %s183 = sadd.s32 %s182, 1
      %s184 = scalar_select %p181, %s182, %s183
      %p187 = pneg %p181
      %p188 = scmp.eq.s32.totalorder %s20, 1
      %p189 = por %p187, %p188
      %p190 = scmp.ne.s32.totalorder %s182, %s185
      %p191 = scmp.eq.s32.totalorder %s20, 0
      %p192 = por %p190, %p191
      %p193 = scmp.ne.s32.totalorder %s182, %s185
      %p194 = scmp.eq.s32.totalorder %s25, 1
      %p195 = por %p193, %p194
      %p196 = scmp.ne.s32.totalorder %s185, %s186
      %p197 = scmp.eq.s32.totalorder %s25, 0
      %p198 = por %p196, %p197
      %p199 = scmp.ne.s32.totalorder %s185, %s186
      %p200 = scmp.eq.s32.totalorder %s26, 1
      %p201 = por %p199, %p200
      %p203 = scmp.ne.s32.totalorder %s186, %s202
      %p204 = scmp.eq.s32.totalorder %s26, 0
      %p205 = por %p203, %p204
      %s206 = ssub.s32 %s20, %s27
      %p207 = scmp.eq.s32.totalorder %s206, 0
      %s209 = sadd.s32 %s208, 1
      %s210 = scalar_select %p207, %s208, %s209
      %p213 = pneg %p207
      %p214 = scmp.eq.s32.totalorder %s20, 1
      %p215 = por %p213, %p214
      %p216 = scmp.ne.s32.totalorder %s208, %s211
      %p217 = scmp.eq.s32.totalorder %s20, 0
      %p218 = por %p216, %p217
      %p219 = scmp.ne.s32.totalorder %s208, %s211
      %p220 = scmp.eq.s32.totalorder %s25, 1
      %p221 = por %p219, %p220
      %p222 = scmp.ne.s32.totalorder %s211, %s212
      %p223 = scmp.eq.s32.totalorder %s25, 0
      %p224 = por %p222, %p223
      %p225 = scmp.ne.s32.totalorder %s211, %s212
      %p226 = scmp.eq.s32.totalorder %s26, 1
      %p227 = por %p225, %p226
      %p229 = scmp.ne.s32.totalorder %s212, %s228
      %p230 = scmp.eq.s32.totalorder %s26, 0
      %p231 = por %p229, %p230
      %p232 = scmp.le.s32.totalorder 1, %s20
      %p233 = scmp.lt.s32.totalorder %s20, 3
      %p234 = pnand %p232, %p233
      %p235 = pneg %p234
      // Predicated region
      $region9: #{gcn_classifier_forward.1} parent=5 // pred_check
        _
      $region10: #{gcn_classifier_forward.1} parent=5 // pred_check_branch
        %237 = sbr.rel (%p234) target = $region12
      $region11: #{gcn_classifier_forward.1} parent=5 // pred_region
        %s238 = ssub.s32 %s20, 1
        // Predicated region
        $region13: #{gcn_classifier_forward.1} parent=11 // pred_check
          %p239 = pneg %p67
        $region14: #{gcn_classifier_forward.1} parent=11 // pred_check_branch
          %241 = sbr.rel (%p239) target = $region16
        $region15: #{gcn_classifier_forward.1} parent=11 // pred_region
          _
        $region16: #{gcn_classifier_forward.1} parent=11 // pred_fallthru
          _
        // Predicated region
        $region17: #{gcn_classifier_forward.1} parent=11 // pred_check
          %p242 = pneg %p88
        $region18: #{gcn_classifier_forward.1} parent=11 // pred_check_branch
          %244 = sbr.rel (%p242) target = $region20
        $region19: #{gcn_classifier_forward.1} parent=11 // pred_region
          _
        $region20: #{gcn_classifier_forward.1} parent=11 // pred_fallthru
          _
        // Predicated region
        $region21: #{gcn_classifier_forward.1} parent=11 // pred_check
          %p245 = pneg %p109
        $region22: #{gcn_classifier_forward.1} parent=11 // pred_check_branch
          %247 = sbr.rel (%p245) target = $region24
        $region23: #{gcn_classifier_forward.1} parent=11 // pred_region
          %s249 = ssub.s32 18432, 18432
          %250 = vsyncadd [#allocation4], %s249
          %s251 = sshll.u32 [#allocation3], 4
          %s252 = int_to_ptr.vmem [resolvable:$true] %s251
          %257 = dma.hbm_to_vmem [thread:$0]  %s3, 18432, %s252, [#allocation4], 128, 128, 8
        $region24: #{gcn_classifier_forward.1} parent=11 // pred_fallthru
          _
        // Predicated region
        $region25: #{gcn_classifier_forward.1} parent=11 // pred_check
          %p258 = pneg %p130
        $region26: #{gcn_classifier_forward.1} parent=11 // pred_check_branch
          %260 = sbr.rel (%p258) target = $region28
        $region27: #{gcn_classifier_forward.1} parent=11 // pred_region
          %s262 = ssub.s32 18432, 18432
          %263 = vsyncadd [#allocation7], %s262
          %s264 = sshll.u32 [#allocation6], 4
          %s265 = int_to_ptr.vmem [resolvable:$true] %s264
          %270 = dma.hbm_to_vmem [thread:$0]  %s4, 18432, %s265, [#allocation7], 64, 64, 4
        $region28: #{gcn_classifier_forward.1} parent=11 // pred_fallthru
          _
        // Predicated region
        $region29: #{gcn_classifier_forward.1} parent=11 // pred_check
          %p271 = pneg %p151
        $region30: #{gcn_classifier_forward.1} parent=11 // pred_check_branch
          %273 = sbr.rel (%p271) target = $region32
        $region31: #{gcn_classifier_forward.1} parent=11 // pred_region
          _
        $region32: #{gcn_classifier_forward.1} parent=11 // pred_fallthru
          _
        // Predicated region
        $region33: #{gcn_classifier_forward.1} parent=11 // pred_check
          %p274 = pneg %p172
        $region34: #{gcn_classifier_forward.1} parent=11 // pred_check_branch
          %276 = sbr.rel (%p274) target = $region36
        $region35: #{gcn_classifier_forward.1} parent=11 // pred_region
          _
        $region36: #{gcn_classifier_forward.1} parent=11 // pred_fallthru
          _
      $region12: #{gcn_classifier_forward.1} parent=5 // pred_fallthru
        _
      %p277 = scmp.lt.s32.totalorder %s20, 2
      // Predicated region
      $region37: #{gcn_classifier_forward.1} parent=5 // pred_check
        %p278 = pneg %p277
      $region38: #{gcn_classifier_forward.1} parent=5 // pred_check_branch
        %280 = sbr.rel (%p278) target = $region40
      $region39: #{gcn_classifier_forward.1} parent=5 // pred_region
        // Predicated region
        $region41: #{gcn_classifier_forward.1} parent=39 // pred_check
          %p281 = pneg %p40
        $region42: #{gcn_classifier_forward.1} parent=39 // pred_check_branch
          %283 = sbr.rel (%p281) target = $region44
        $region43: #{gcn_classifier_forward.1} parent=39 // pred_region
          %p284 = scmp.lt.s32.totalorder %s20, 1
          %s285 = scalar_select %p284, %s20, 1
          %s286 = smul.addr %s285, 7
          %s287 = smul.addr %s286, 8
          %s288 = scalar_lea.vmem %s0, %s287
        $region44: #{gcn_classifier_forward.1} parent=39 // pred_fallthru
          _
      $region40: #{gcn_classifier_forward.1} parent=5 // pred_fallthru
        _
      %p289 = scmp.le.s32.totalorder 1, %s20
      %p290 = scmp.lt.s32.totalorder %s20, 3
      %p291 = pnand %p289, %p290
      %p292 = pneg %p291
      // Predicated region
      $region45: #{gcn_classifier_forward.1} parent=5 // pred_check
        _
      $region46: #{gcn_classifier_forward.1} parent=5 // pred_check_branch
        %294 = sbr.rel (%p291) target = $region48
      $region47: #{gcn_classifier_forward.1} parent=5 // pred_region
        %s295 = ssub.s32 %s20, 1
        // Predicated region
        $region49: #{gcn_classifier_forward.1} parent=47 // pred_check
          %p296 = pneg %p109
        $region50: #{gcn_classifier_forward.1} parent=47 // pred_check_branch
          %298 = sbr.rel (%p296) target = $region52
        $region51: #{gcn_classifier_forward.1} parent=47 // pred_region
          %299 = dma.done [#allocation4], 18432
        $region52: #{gcn_classifier_forward.1} parent=47 // pred_fallthru
          _
        // Predicated region
        $region53: #{gcn_classifier_forward.1} parent=47 // pred_check
          %p300 = pneg %p130
        $region54: #{gcn_classifier_forward.1} parent=47 // pred_check_branch
          %302 = sbr.rel (%p300) target = $region56
        $region55: #{gcn_classifier_forward.1} parent=47 // pred_region
          %303 = dma.done [#allocation7], 18432
        $region56: #{gcn_classifier_forward.1} parent=47 // pred_fallthru
          _
        %p304 = scmp.lt.s32.totalorder %s25, 1
        %s305 = scalar_select %p304, %s25, 1
        %s306 = smul.addr %s305, 7
        %s307 = smul.addr %s306, 8
        %s308 = scalar_lea.vmem %s0, %s307
        %p309 = pneg %p46
        %p310 = pneg %p43
        %p311 = pneg %p67
        %p312 = pneg %p64
        %p313 = pneg %p88
        %p314 = pneg %p85
        %p315 = pneg %p109
        %p316 = pneg %p106
        %p317 = pneg %p130
        %p318 = pneg %p127
        %p319 = pneg %p151
        %p320 = pneg %p148
        %p321 = pneg %p172
        %p322 = pneg %p169
        %p323 = pneg %p198
        %p324 = pneg %p195
        %p325 = scmp.lt.s32.totalorder %s25, 1
        %s326 = scalar_select %p325, %s25, 1
        %s327 = smul.addr %s326, 2
        %s328 = smul.addr %s327, 8
        %s329 = scalar_lea.vmem %s7, %s328
        %p330 = pneg %p224
        %p331 = pneg %p221
        %s332 = sand.u32 %s211, 1
        %s333 = scalar_lea.sflag [#allocation5], %s332
        %s334 = sand.u32 %s211, 1
        %s335 = scalar_lea.vmem [#allocation8], %s334
        %p336 = scmp.lt.s32.totalorder %s25, 1
        %s337 = scalar_select %p336, %s25, 1
        %s338 = smul.addr %s337, 7
        %s339 = smul.addr %s338, 8
        %s340 = scalar_lea.vmem %s0, %s339
        %p341 = scmp.lt.s32.totalorder %s25, 1
        %s342 = scalar_select %p341, %s25, 1
        %s343 = smul.addr %s342, 2
        %s344 = smul.addr %s343, 8
        %s345 = scalar_lea.vmem %s7, %s344
        %v347 = vld [vmem:[%s340] sm:$0xff]
        %v348 = vld [vmem:[%s340 + $0x8] sm:$0xff]
        %v349 = vld [vmem:[%s340 + $0x10] sm:$0xff]
        %v350 = vld [vmem:[%s340 + $0x18] sm:$0xff]
        %v351 = vld [vmem:[%s340 + $0x20] sm:$0xff]
        %v352 = vld [vmem:[%s340 + $0x28] sm:$0xff]
        %v353 = vld [vmem:[%s340 + $0x30] sm:$0x1]
        %v354 = vpack.c.bf16 %v348, %v347
        %v355 = vpack.c.bf16 %v350, %v349
        %v356 = vpack.c.bf16 %v352, %v351
        %v357 = vpack.c.bf16 %v353, %v353
        %v358 = vld [vmem:[%s1] sm:$0xf]
        %359 = vmatprep.subr.bf16.mxu0 0
        %360 = vmatpush1.bf16.xpose.msra.mxu0 0
        %361 = vmatprep.subr.bf16.mxu0 0
        %362 = vmatpush1.bf16.xpose.msra.mxu0 0
        %363 = vmatprep.subr.bf16.mxu0 0
        %364 = vmatpush1.bf16.xpose.msra.mxu0 0
        %365 = vmatprep.subr.bf16.mxu0 0
        %366 = vmatpush1.bf16.xpose.msra.mxu0 0
        %367 = vmatprep.subr.bf16.mxu0 0
        %368 = vmatpush1.bf16.xpose.msra.mxu0 %v357
        %369 = vmatprep.subr.bf16.mxu0 0
        %370 = vmatpush1.bf16.xpose.msra.mxu0 %v356
        %371 = vmatprep.subr.bf16.mxu0 0
        %372 = vmatpush1.bf16.xpose.msra.mxu0 %v355
        %373 = vmatprep.subr.bf16.mxu0 0
        %374 = vmatpush1.bf16.xpose.msra.mxu0 %v354
        %375 = vmatprep.subr.bf16.mxu0 0
        %376 = vmatpush2.bf16.xpose.msra.mxu0 0
        %377 = vmatprep.subr.bf16.mxu0 0
        %378 = vmatpush2.bf16.xpose.msra.mxu0 0
        %379 = vmatprep.subr.bf16.mxu0 0
        %380 = vmatpush2.bf16.xpose.msra.mxu0 0
        %381 = vmatprep.subr.bf16.mxu0 0
        %382 = vmatpush2.bf16.xpose.msra.mxu0 0
        %383 = vmatprep.subr.bf16.mxu0 0
        %384 = vmatpush2.bf16.xpose.msra.mxu0 0
        %385 = vmatprep.subr.bf16.mxu0 0
        %386 = vmatpush2.bf16.xpose.msra.mxu0 0
        %387 = vmatprep.subr.bf16.mxu0 0
        %388 = vmatpush2.bf16.xpose.msra.mxu0 0
        %389 = vmatprep.subr.bf16.mxu0 0
        %390 = vmatpush2.bf16.xpose.msra.mxu0 0
        %391 = vmatprep.mubr.bf16.mxu0 0
        %392 = vmatmul.mubr.bf16.gmra.mxu0 %v358
        %v393 = vpop.f32.mrf.mxu0
        %v394 = vadd.f32 0.0, %v393
        %v395 = vpop.f32.mrf.mxu0
        %v396 = vpop.f32.mrf.mxu0
        %v397 = vpop.f32.mrf.mxu0
        %398 = vdwg.mxu0
        %vm399 = vcmask 400384
        %v400 = vsel %vm399, %v394, -inf
        %401 = vmax.xlane.f32.xlu0 %v400
        %v402 = vpop.xlane.xlu0 %401
        %v403 = vsub.f32 %v394, %v402
        %v404 = vmul.f32 %v403, 1.442695
        %v405 = vpow.pop %v404
        %v406 = vsel %vm399, %v405, 0.0
        %407 = vadd.xlane.f32.xlu0 %v406
        %v408 = vpop.xlane.xlu0 %407
        %v409 = vrcp.pop %v408
        %v410 = vmul.f32 %v405, %v409
        %v411 = vpack.c.bf16 %v410, %v410
        %v413 = vsel %vm399, %v411, 0
        %vm415 = vcmask 1040384
        %v416 = vsel 0, 4294967295, 65535
        %v417 = vsel %vm415, %v416, 0
        %v419 = vand.u32 %v357, %v417
        %421 = vmatprep.subr.bf16.mxu0 0
        %422 = vmatpush1.bf16.msra.mxu0 0
        %423 = vmatprep.subr.bf16.mxu0 0
        %424 = vmatpush1.bf16.msra.mxu0 0
        %425 = vmatprep.subr.bf16.mxu0 0
        %426 = vmatpush1.bf16.msra.mxu0 0
        %427 = vmatprep.subr.bf16.mxu0 0
        %428 = vmatpush1.bf16.msra.mxu0 0
        %429 = vmatprep.subr.bf16.mxu0 0
        %430 = vmatpush1.bf16.msra.mxu0 %v419
        %431 = vmatprep.subr.bf16.mxu0 0
        %432 = vmatpush1.bf16.msra.mxu0 %v356
        %433 = vmatprep.subr.bf16.mxu0 0
        %434 = vmatpush1.bf16.msra.mxu0 %v355
        %435 = vmatprep.subr.bf16.mxu0 0
        %436 = vmatpush1.bf16.msra.mxu0 %v354
        %437 = vmatprep.subr.bf16.mxu0 0
        %438 = vmatpush2.bf16.msra.mxu0 0
        %439 = vmatprep.subr.bf16.mxu0 0
        %440 = vmatpush2.bf16.msra.mxu0 0
        %441 = vmatprep.subr.bf16.mxu0 0
        %442 = vmatpush2.bf16.msra.mxu0 0
        %443 = vmatprep.subr.bf16.mxu0 0
        %444 = vmatpush2.bf16.msra.mxu0 0
        %445 = vmatprep.subr.bf16.mxu0 0
        %446 = vmatpush2.bf16.msra.mxu0 0
        %447 = vmatprep.subr.bf16.mxu0 0
        %448 = vmatpush2.bf16.msra.mxu0 0
        %449 = vmatprep.subr.bf16.mxu0 0
        %450 = vmatpush2.bf16.msra.mxu0 0
        %451 = vmatprep.subr.bf16.mxu0 0
        %452 = vmatpush2.bf16.msra.mxu0 0
        %453 = vmatprep.mubr.bf16.mxu0 0
        %454 = vmatmul.mubr.bf16.gmra.mxu0 %v413
        %v455 = vpop.f32.mrf.mxu0
        %v456 = vadd.f32 0.0, %v455
        %v457 = vpop.f32.mrf.mxu0
        %v458 = vpop.f32.mrf.mxu0
        %v459 = vpop.f32.mrf.mxu0
        %460 = vdwg.mxu0
        %v461 = vadd.f32 %v347, %v348
        %v462 = vadd.f32 %v461, %v349
        %v463 = vadd.f32 %v462, %v350
        %v464 = vadd.f32 %v463, %v351
        %v465 = vadd.f32 %v464, %v352
        %v466 = vsel %vm415, %v353, 0.0
        %v467 = vadd.f32 %v465, %v466
        %v468 = vrot.slane %v467, 4
        %v469 = vadd.f32 %v467, %v468
        %v470 = vrot.slane %v469, 2
        %v471 = vadd.f32 %v469, %v470
        %v472 = vrot.slane %v471, 1
        %v473 = vadd.f32 %v471, %v472
        %v474 = vrcp.pop 49.0
        %v475 = vmul.f32 %v473, %v474
        %476 = vst [vmem:[%s335] sm:$0x1] %v475
        %477 = vst [vmem:[#allocation2] sm:$0x1] %v475
        %478 = vst [vmem:[#allocation2 + $0x1] sm:$0xff] %v456
        %v479 = vld [vmem:[%s2] sm:$0xf]
        %v480 = vld [vmem:[%s2 + $0x4] sm:$0x1]
        %s481 = scalar_lea.vmem %s2, 8
        %v482 = vld [vmem:[%s481] sm:$0xf]
        %v483 = vld [vmem:[%s481 + $0x4] sm:$0x1]
        %v484 = vld [vmem:[#allocation2] sm:$0xff]
        %v485 = vld [vmem:[#allocation2 + $0x8] sm:$0x1]
        %v486 = vpack.c.bf16 %v485, %v484
        %v487 = vld [vmem:[#allocation3] sm:$0xff]
        %v488 = vld [vmem:[#allocation3 + $0x8] sm:$0xff]
        %v489 = vld [vmem:[#allocation3 + $0x10] sm:$0xff]
        %v490 = vld [vmem:[#allocation3 + $0x18] sm:$0xff]
        %v491 = vld [vmem:[#allocation3 + $0x20] sm:$0xff]
        %v492 = vld [vmem:[#allocation3 + $0x28] sm:$0xff]
        %v493 = vld [vmem:[#allocation3 + $0x30] sm:$0xff]
        %v494 = vld [vmem:[#allocation3 + $0x38] sm:$0xff]
        %v495 = vld [vmem:[#allocation3 + $0x40] sm:$0xff]
        %v496 = vld [vmem:[#allocation3 + $0x48] sm:$0xff]
        %v497 = vld [vmem:[#allocation3 + $0x50] sm:$0xff]
        %v498 = vld [vmem:[#allocation3 + $0x58] sm:$0xff]
        %v499 = vld [vmem:[#allocation3 + $0x60] sm:$0xff]
        %v500 = vld [vmem:[#allocation3 + $0x68] sm:$0xff]
        %v501 = vld [vmem:[#allocation3 + $0x70] sm:$0xff]
        %v502 = vld [vmem:[#allocation3 + $0x78] sm:$0xff]
        %v503 = vld [vmem:[%s5] sm:$0x3]
        %v505 = vlaneseq
        %v506 = vshrl.u32 %v505, 7
        %v507 = vsub.s32 0, %v506
        %v508 = vrot.slane %v503, %v507
        %v509 = vlaneseq
        %v510 = vshrl.u32 %v509, 7
        %v511 = vsub.s32 1, %v510
        %v512 = vrot.slane %v503, %v511
        %v531 = vunpack.c.l.b16 %v487
        %v532 = vunpack.c.h.b16 %v487
        %v533 = vunpack.c.l.b16 %v488
        %v534 = vunpack.c.h.b16 %v488
        %v535 = vunpack.c.l.b16 %v489
        %v536 = vunpack.c.h.b16 %v489
        %v537 = vunpack.c.l.b16 %v490
        %v538 = vunpack.c.h.b16 %v490
        %v539 = vunpack.c.l.b16 %v491
        %v540 = vunpack.c.h.b16 %v491
        %v541 = vunpack.c.l.b16 %v492
        %v542 = vunpack.c.h.b16 %v492
        %v543 = vunpack.c.l.b16 %v493
        %v544 = vunpack.c.h.b16 %v493
        %v545 = vunpack.c.l.b16 %v494
        %v546 = vunpack.c.h.b16 %v494
        %v547 = vunpack.c.l.b16 %v495
        %v548 = vunpack.c.h.b16 %v495
        %v549 = vunpack.c.l.b16 %v496
        %v550 = vunpack.c.h.b16 %v496
        %v551 = vunpack.c.l.b16 %v497
        %v552 = vunpack.c.h.b16 %v497
        %v553 = vunpack.c.l.b16 %v498
        %v554 = vunpack.c.h.b16 %v498
        %v555 = vunpack.c.l.b16 %v499
        %v556 = vunpack.c.h.b16 %v499
        %v557 = vunpack.c.l.b16 %v500
        %v558 = vunpack.c.h.b16 %v500
        %v559 = vunpack.c.l.b16 %v501
        %v560 = vunpack.c.h.b16 %v501
        %v561 = vunpack.c.l.b16 %v502
        %v562 = vunpack.c.h.b16 %v502
        %v563 = vpack.c.b16 %v533, %v531
        %v564 = vpack.c.b16 %v534, %v532
        %v565 = vpack.c.b16 %v537, %v535
        %v566 = vpack.c.b16 %v538, %v536
        %v567 = vpack.c.b16 %v541, %v539
        %v568 = vpack.c.b16 %v542, %v540
        %v569 = vpack.c.b16 %v545, %v543
        %v570 = vpack.c.b16 %v546, %v544
        %v571 = vpack.c.b16 %v549, %v547
        %v572 = vpack.c.b16 %v550, %v548
        %v573 = vpack.c.b16 %v553, %v551
        %v574 = vpack.c.b16 %v554, %v552
        %v575 = vpack.c.b16 %v557, %v555
        %v576 = vpack.c.b16 %v558, %v556
        %v577 = vpack.c.b16 %v561, %v559
        %v578 = vpack.c.b16 %v562, %v560
        %595 = vmatprep.subr.bf16.mxu0 %v578
        %596 = vmatpush1.bf16.msra.mxu0 %v577
        %597 = vmatprep.subr.bf16.mxu0 %v576
        %598 = vmatpush1.bf16.msra.mxu0 %v575
        %599 = vmatprep.subr.bf16.mxu0 %v574
        %600 = vmatpush1.bf16.msra.mxu0 %v573
        %601 = vmatprep.subr.bf16.mxu0 %v572
        %602 = vmatpush1.bf16.msra.mxu0 %v571
        %603 = vmatprep.subr.bf16.mxu0 %v570
        %604 = vmatpush1.bf16.msra.mxu0 %v569
        %605 = vmatprep.subr.bf16.mxu0 %v568
        %606 = vmatpush1.bf16.msra.mxu0 %v567
        %607 = vmatprep.subr.bf16.mxu0 %v566
        %608 = vmatpush1.bf16.msra.mxu0 %v565
        %609 = vmatprep.subr.bf16.mxu0 %v564
        %610 = vmatpush1.bf16.msra.mxu0 %v563
        %611 = vmatprep.subr.bf16.mxu0 0
        %612 = vmatpush2.bf16.msra.mxu0 0
        %613 = vmatprep.subr.bf16.mxu0 0
        %614 = vmatpush2.bf16.msra.mxu0 0
        %615 = vmatprep.subr.bf16.mxu0 0
        %616 = vmatpush2.bf16.msra.mxu0 0
        %617 = vmatprep.subr.bf16.mxu0 0
        %618 = vmatpush2.bf16.msra.mxu0 0
        %619 = vmatprep.subr.bf16.mxu0 0
        %620 = vmatpush2.bf16.msra.mxu0 0
        %621 = vmatprep.subr.bf16.mxu0 0
        %622 = vmatpush2.bf16.msra.mxu0 0
        %623 = vmatprep.subr.bf16.mxu0 0
        %624 = vmatpush2.bf16.msra.mxu0 0
        %625 = vmatprep.subr.bf16.mxu0 0
        %626 = vmatpush2.bf16.msra.mxu0 0
        %627 = vmatprep.mubr.bf16.mxu0 0
        %628 = vmatmul.mubr.bf16.gmra.mxu0 %v486
        %v629 = vpop.f32.mrf.mxu0
        %v630 = vadd.f32 %v508, %v629
        %v631 = vpop.f32.mrf.mxu0
        %v632 = vadd.f32 %v512, %v631
        %v633 = vpop.f32.mrf.mxu0
        %v634 = vadd.f32 %v508, %v633
        %v635 = vpop.f32.mrf.mxu0
        %v636 = vadd.f32 %v512, %v635
        %637 = vdwg.mxu0
        %v638 = vmax.f32 %v630, 0.0
        %v639 = vmax.f32 %v632, 0.0
        %v640 = vmax.f32 %v634, 0.0
        %v641 = vmax.f32 %v636, 0.0
        %s642 = scalar_lea.vmem [#allocation3], 128
        %v643 = vld [vmem:[%s642] sm:$0xff]
        %v644 = vld [vmem:[%s642 + $0x8] sm:$0xff]
        %v645 = vld [vmem:[%s642 + $0x10] sm:$0xff]
        %v646 = vld [vmem:[%s642 + $0x18] sm:$0xff]
        %v647 = vld [vmem:[%s642 + $0x20] sm:$0xff]
        %v648 = vld [vmem:[%s642 + $0x28] sm:$0xff]
        %v649 = vld [vmem:[%s642 + $0x30] sm:$0xff]
        %v650 = vld [vmem:[%s642 + $0x38] sm:$0xff]
        %v651 = vld [vmem:[%s642 + $0x40] sm:$0xff]
        %v652 = vld [vmem:[%s642 + $0x48] sm:$0xff]
        %v653 = vld [vmem:[%s642 + $0x50] sm:$0xff]
        %v654 = vld [vmem:[%s642 + $0x58] sm:$0xff]
        %v655 = vld [vmem:[%s642 + $0x60] sm:$0xff]
        %v656 = vld [vmem:[%s642 + $0x68] sm:$0xff]
        %v657 = vld [vmem:[%s642 + $0x70] sm:$0xff]
        %v658 = vld [vmem:[%s642 + $0x78] sm:$0xff]
        %v675 = vunpack.c.l.b16 %v643
        %v676 = vunpack.c.h.b16 %v643
        %v677 = vunpack.c.l.b16 %v644
        %v678 = vunpack.c.h.b16 %v644
        %v679 = vunpack.c.l.b16 %v645
        %v680 = vunpack.c.h.b16 %v645
        %v681 = vunpack.c.l.b16 %v646
        %v682 = vunpack.c.h.b16 %v646
        %v683 = vunpack.c.l.b16 %v647
        %v684 = vunpack.c.h.b16 %v647
        %v685 = vunpack.c.l.b16 %v648
        %v686 = vunpack.c.h.b16 %v648
        %v687 = vunpack.c.l.b16 %v649
        %v688 = vunpack.c.h.b16 %v649
        %v689 = vunpack.c.l.b16 %v650
        %v690 = vunpack.c.h.b16 %v650
        %v691 = vunpack.c.l.b16 %v651
        %v692 = vunpack.c.h.b16 %v651
        %v693 = vunpack.c.l.b16 %v652
        %v694 = vunpack.c.h.b16 %v652
        %v695 = vunpack.c.l.b16 %v653
        %v696 = vunpack.c.h.b16 %v653
        %v697 = vunpack.c.l.b16 %v654
        %v698 = vunpack.c.h.b16 %v654
        %v699 = vunpack.c.l.b16 %v655
        %v700 = vunpack.c.h.b16 %v655
        %v701 = vunpack.c.l.b16 %v656
        %v702 = vunpack.c.h.b16 %v656
        %v703 = vunpack.c.l.b16 %v657
        %v704 = vunpack.c.h.b16 %v657
        %v705 = vunpack.c.l.b16 %v658
        %v706 = vunpack.c.h.b16 %v658
        %v707 = vpack.c.b16 %v677, %v675
        %v708 = vpack.c.b16 %v678, %v676
        %v709 = vpack.c.b16 %v681, %v679
        %v710 = vpack.c.b16 %v682, %v680
        %v711 = vpack.c.b16 %v685, %v683
        %v712 = vpack.c.b16 %v686, %v684
        %v713 = vpack.c.b16 %v689, %v687
        %v714 = vpack.c.b16 %v690, %v688
        %v715 = vpack.c.b16 %v693, %v691
        %v716 = vpack.c.b16 %v694, %v692
        %v717 = vpack.c.b16 %v697, %v695
        %v718 = vpack.c.b16 %v698, %v696
        %v719 = vpack.c.b16 %v701, %v699
        %v720 = vpack.c.b16 %v702, %v700
        %v721 = vpack.c.b16 %v705, %v703
        %v722 = vpack.c.b16 %v706, %v704
        %739 = vmatprep.subr.bf16.mxu0 %v722
        %740 = vmatpush1.bf16.msra.mxu0 %v721
        %741 = vmatprep.subr.bf16.mxu0 %v720
        %742 = vmatpush1.bf16.msra.mxu0 %v719
        %743 = vmatprep.subr.bf16.mxu0 %v718
        %744 = vmatpush1.bf16.msra.mxu0 %v717
        %745 = vmatprep.subr.bf16.mxu0 %v716
        %746 = vmatpush1.bf16.msra.mxu0 %v715
        %747 = vmatprep.subr.bf16.mxu0 %v714
        %748 = vmatpush1.bf16.msra.mxu0 %v713
        %749 = vmatprep.subr.bf16.mxu0 %v712
        %750 = vmatpush1.bf16.msra.mxu0 %v711
        %751 = vmatprep.subr.bf16.mxu0 %v710
        %752 = vmatpush1.bf16.msra.mxu0 %v709
        %753 = vmatprep.subr.bf16.mxu0 %v708
        %754 = vmatpush1.bf16.msra.mxu0 %v707
        %755 = vmatprep.subr.bf16.mxu0 0
        %756 = vmatpush2.bf16.msra.mxu0 0
        %757 = vmatprep.subr.bf16.mxu0 0
        %758 = vmatpush2.bf16.msra.mxu0 0
        %759 = vmatprep.subr.bf16.mxu0 0
        %760 = vmatpush2.bf16.msra.mxu0 0
        %761 = vmatprep.subr.bf16.mxu0 0
        %762 = vmatpush2.bf16.msra.mxu0 0
        %763 = vmatprep.subr.bf16.mxu0 0
        %764 = vmatpush2.bf16.msra.mxu0 0
        %765 = vmatprep.subr.bf16.mxu0 0
        %766 = vmatpush2.bf16.msra.mxu0 0
        %767 = vmatprep.subr.bf16.mxu0 0
        %768 = vmatpush2.bf16.msra.mxu0 0
        %769 = vmatprep.subr.bf16.mxu0 0
        %770 = vmatpush2.bf16.msra.mxu0 0
        %771 = vmatprep.mubr.bf16.mxu0 0
        %772 = vmatmul.mubr.bf16.gmra.mxu0 %v486
        %v773 = vpop.f32.mrf.mxu0
        %v774 = vadd.f32 0.0, %v773
        %v775 = vpop.f32.mrf.mxu0
        %v776 = vadd.f32 0.0, %v775
        %v777 = vpop.f32.mrf.mxu0
        %v778 = vadd.f32 0.0, %v777
        %v779 = vpop.f32.mrf.mxu0
        %v780 = vadd.f32 0.0, %v779
        %781 = vdwg.mxu0
        %v782 = vpack.c.bf16 %v778, %v774
        %v783 = vpack.c.bf16 %v780, %v776
        %s784 = scalar_lea.vmem %s5, 2
        %v785 = vld [vmem:[%s784] sm:$0x3]
        %v787 = vlaneseq
        %v788 = vshrl.u32 %v787, 7
        %v789 = vsub.s32 0, %v788
        %v790 = vrot.slane %v785, %v789
        %v791 = vlaneseq
        %v792 = vshrl.u32 %v791, 7
        %v793 = vsub.s32 1, %v792
        %v794 = vrot.slane %v785, %v793
        %v799 = vunpack.c.l.b16 %v479
        %v800 = vunpack.c.l.b16 %v480
        %v801 = vpack.c.b16 %v800, %v799
        %vm802 = vcmask 72704
        %v804 = vsel %vm802, %v801, 0
        %vm806 = vcmask 1043456
        %vm807 = vcmask 1044480
        %v808 = vsel %vm806, 4294967295, 65535
        %v809 = vsel %vm807, %v808, 0
        %v811 = vand.u32 %v782, %v809
        %v814 = vand.u32 %v783, %v809
        %816 = vmatprep.subr.bf16.mxu0 0
        %817 = vmatpush1.bf16.msra.mxu0 0
        %818 = vmatprep.subr.bf16.mxu0 0
        %819 = vmatpush1.bf16.msra.mxu0 0
        %820 = vmatprep.subr.bf16.mxu0 0
        %821 = vmatpush1.bf16.msra.mxu0 0
        %822 = vmatprep.subr.bf16.mxu0 0
        %823 = vmatpush1.bf16.msra.mxu0 0
        %824 = vmatprep.subr.bf16.mxu0 0
        %825 = vmatpush1.bf16.msra.mxu0 0
        %826 = vmatprep.subr.bf16.mxu0 0
        %827 = vmatpush1.bf16.msra.mxu0 0
        %828 = vmatprep.subr.bf16.mxu0 0
        %829 = vmatpush1.bf16.msra.mxu0 0
        %830 = vmatprep.subr.bf16.mxu0 %v814
        %831 = vmatpush1.bf16.msra.mxu0 %v811
        %832 = vmatprep.subr.bf16.mxu0 0
        %833 = vmatpush2.bf16.msra.mxu0 0
        %834 = vmatprep.subr.bf16.mxu0 0
        %835 = vmatpush2.bf16.msra.mxu0 0
        %836 = vmatprep.subr.bf16.mxu0 0
        %837 = vmatpush2.bf16.msra.mxu0 0
        %838 = vmatprep.subr.bf16.mxu0 0
        %839 = vmatpush2.bf16.msra.mxu0 0
        %840 = vmatprep.subr.bf16.mxu0 0
        %841 = vmatpush2.bf16.msra.mxu0 0
        %842 = vmatprep.subr.bf16.mxu0 0
        %843 = vmatpush2.bf16.msra.mxu0 0
        %844 = vmatprep.subr.bf16.mxu0 0
        %845 = vmatpush2.bf16.msra.mxu0 0
        %846 = vmatprep.subr.bf16.mxu0 0
        %847 = vmatpush2.bf16.msra.mxu0 0
        %848 = vmatprep.mubr.bf16.mxu0 0
        %849 = vmatmul.mubr.bf16.gmra.mxu0 %v804
        %v850 = vpop.f32.mrf.mxu0
        %v851 = vadd.f32 %v790, %v850
        %v852 = vpop.f32.mrf.mxu0
        %v853 = vadd.f32 %v794, %v852
        %v854 = vpop.f32.mrf.mxu0
        %v855 = vadd.f32 %v790, %v854
        %v856 = vpop.f32.mrf.mxu0
        %v857 = vadd.f32 %v794, %v856
        %858 = vdwg.mxu0
        %v859 = vmax.f32 %v851, 0.0
        %v860 = vmax.f32 %v853, 0.0
        %v861 = vmax.f32 %v855, 0.0
        %v862 = vmax.f32 %v857, 0.0
        %s863 = scalar_lea.vmem [#allocation3], 256
        %v864 = vld [vmem:[%s863] sm:$0xff]
        %v865 = vld [vmem:[%s863 + $0x8] sm:$0xff]
        %v866 = vld [vmem:[%s863 + $0x10] sm:$0xff]
        %v867 = vld [vmem:[%s863 + $0x18] sm:$0xff]
        %v868 = vld [vmem:[%s863 + $0x20] sm:$0xff]
        %v869 = vld [vmem:[%s863 + $0x28] sm:$0xff]
        %v870 = vld [vmem:[%s863 + $0x30] sm:$0xff]
        %v871 = vld [vmem:[%s863 + $0x38] sm:$0xff]
        %v872 = vld [vmem:[%s863 + $0x40] sm:$0xff]
        %v873 = vld [vmem:[%s863 + $0x48] sm:$0xff]
        %v874 = vld [vmem:[%s863 + $0x50] sm:$0xff]
        %v875 = vld [vmem:[%s863 + $0x58] sm:$0xff]
        %v876 = vld [vmem:[%s863 + $0x60] sm:$0xff]
        %v877 = vld [vmem:[%s863 + $0x68] sm:$0xff]
        %v878 = vld [vmem:[%s863 + $0x70] sm:$0xff]
        %v879 = vld [vmem:[%s863 + $0x78] sm:$0xff]
        %v896 = vunpack.c.l.b16 %v864
        %v897 = vunpack.c.h.b16 %v864
        %v898 = vunpack.c.l.b16 %v865
        %v899 = vunpack.c.h.b16 %v865
        %v900 = vunpack.c.l.b16 %v866
        %v901 = vunpack.c.h.b16 %v866
        %v902 = vunpack.c.l.b16 %v867
        %v903 = vunpack.c.h.b16 %v867
        %v904 = vunpack.c.l.b16 %v868
        %v905 = vunpack.c.h.b16 %v868
        %v906 = vunpack.c.l.b16 %v869
        %v907 = vunpack.c.h.b16 %v869
        %v908 = vunpack.c.l.b16 %v870
        %v909 = vunpack.c.h.b16 %v870
        %v910 = vunpack.c.l.b16 %v871
        %v911 = vunpack.c.h.b16 %v871
        %v912 = vunpack.c.l.b16 %v872
        %v913 = vunpack.c.h.b16 %v872
        %v914 = vunpack.c.l.b16 %v873
        %v915 = vunpack.c.h.b16 %v873
        %v916 = vunpack.c.l.b16 %v874
        %v917 = vunpack.c.h.b16 %v874
        %v918 = vunpack.c.l.b16 %v875
        %v919 = vunpack.c.h.b16 %v875
        %v920 = vunpack.c.l.b16 %v876
        %v921 = vunpack.c.h.b16 %v876
        %v922 = vunpack.c.l.b16 %v877
        %v923 = vunpack.c.h.b16 %v877
        %v924 = vunpack.c.l.b16 %v878
        %v925 = vunpack.c.h.b16 %v878
        %v926 = vunpack.c.l.b16 %v879
        %v927 = vunpack.c.h.b16 %v879
        %v928 = vpack.c.b16 %v898, %v896
        %v929 = vpack.c.b16 %v899, %v897
        %v930 = vpack.c.b16 %v902, %v900
        %v931 = vpack.c.b16 %v903, %v901
        %v932 = vpack.c.b16 %v906, %v904
        %v933 = vpack.c.b16 %v907, %v905
        %v934 = vpack.c.b16 %v910, %v908
        %v935 = vpack.c.b16 %v911, %v909
        %v936 = vpack.c.b16 %v914, %v912
        %v937 = vpack.c.b16 %v915, %v913
        %v938 = vpack.c.b16 %v918, %v916
        %v939 = vpack.c.b16 %v919, %v917
        %v940 = vpack.c.b16 %v922, %v920
        %v941 = vpack.c.b16 %v923, %v921
        %v942 = vpack.c.b16 %v926, %v924
        %v943 = vpack.c.b16 %v927, %v925
        %960 = vmatprep.subr.bf16.mxu0 %v943
        %961 = vmatpush1.bf16.msra.mxu0 %v942
        %962 = vmatprep.subr.bf16.mxu0 %v941
        %963 = vmatpush1.bf16.msra.mxu0 %v940
        %964 = vmatprep.subr.bf16.mxu0 %v939
        %965 = vmatpush1.bf16.msra.mxu0 %v938
        %966 = vmatprep.subr.bf16.mxu0 %v937
        %967 = vmatpush1.bf16.msra.mxu0 %v936
        %968 = vmatprep.subr.bf16.mxu0 %v935
        %969 = vmatpush1.bf16.msra.mxu0 %v934
        %970 = vmatprep.subr.bf16.mxu0 %v933
        %971 = vmatpush1.bf16.msra.mxu0 %v932
        %972 = vmatprep.subr.bf16.mxu0 %v931
        %973 = vmatpush1.bf16.msra.mxu0 %v930
        %974 = vmatprep.subr.bf16.mxu0 %v929
        %975 = vmatpush1.bf16.msra.mxu0 %v928
        %976 = vmatprep.subr.bf16.mxu0 0
        %977 = vmatpush2.bf16.msra.mxu0 0
        %978 = vmatprep.subr.bf16.mxu0 0
        %979 = vmatpush2.bf16.msra.mxu0 0
        %980 = vmatprep.subr.bf16.mxu0 0
        %981 = vmatpush2.bf16.msra.mxu0 0
        %982 = vmatprep.subr.bf16.mxu0 0
        %983 = vmatpush2.bf16.msra.mxu0 0
        %984 = vmatprep.subr.bf16.mxu0 0
        %985 = vmatpush2.bf16.msra.mxu0 0
        %986 = vmatprep.subr.bf16.mxu0 0
        %987 = vmatpush2.bf16.msra.mxu0 0
        %988 = vmatprep.subr.bf16.mxu0 0
        %989 = vmatpush2.bf16.msra.mxu0 0
        %990 = vmatprep.subr.bf16.mxu0 0
        %991 = vmatpush2.bf16.msra.mxu0 0
        %992 = vmatprep.mubr.bf16.mxu0 0
        %993 = vmatmul.mubr.bf16.gmra.mxu0 %v486
        %v994 = vpop.f32.mrf.mxu0
        %v995 = vadd.f32 0.0, %v994
        %v996 = vpop.f32.mrf.mxu0
        %v997 = vadd.f32 0.0, %v996
        %v998 = vpop.f32.mrf.mxu0
        %v999 = vadd.f32 0.0, %v998
        %v1000 = vpop.f32.mrf.mxu0
        %v1001 = vadd.f32 0.0, %v1000
        %1002 = vdwg.mxu0
        %v1003 = vpack.c.bf16 %v999, %v995
        %v1004 = vpack.c.bf16 %v1001, %v997
        %s1005 = scalar_lea.vmem %s5, 4
        %v1006 = vld [vmem:[%s1005] sm:$0x3]
        %v1008 = vlaneseq
        %v1009 = vshrl.u32 %v1008, 7
        %v1010 = vsub.s32 0, %v1009
        %v1011 = vrot.slane %v1006, %v1010
        %v1012 = vlaneseq
        %v1013 = vshrl.u32 %v1012, 7
        %v1014 = vsub.s32 1, %v1013
        %v1015 = vrot.slane %v1006, %v1014
        %v1020 = vunpack.c.l.b16 %v482
        %v1021 = vunpack.c.l.b16 %v483
        %v1022 = vpack.c.b16 %v1021, %v1020
        %v1024 = vsel %vm802, %v1022, 0
        %v1027 = vand.u32 %v1003, %v809
        %v1030 = vand.u32 %v1004, %v809
        %1032 = vmatprep.subr.bf16.mxu0 0
        %1033 = vmatpush1.bf16.msra.mxu0 0
        %1034 = vmatprep.subr.bf16.mxu0 0
        %1035 = vmatpush1.bf16.msra.mxu0 0
        %1036 = vmatprep.subr.bf16.mxu0 0
        %1037 = vmatpush1.bf16.msra.mxu0 0
        %1038 = vmatprep.subr.bf16.mxu0 0
        %1039 = vmatpush1.bf16.msra.mxu0 0
        %1040 = vmatprep.subr.bf16.mxu0 0
        %1041 = vmatpush1.bf16.msra.mxu0 0
        %1042 = vmatprep.subr.bf16.mxu0 0
        %1043 = vmatpush1.bf16.msra.mxu0 0
        %1044 = vmatprep.subr.bf16.mxu0 0
        %1045 = vmatpush1.bf16.msra.mxu0 0
        %1046 = vmatprep.subr.bf16.mxu0 %v1030
        %1047 = vmatpush1.bf16.msra.mxu0 %v1027
        %1048 = vmatprep.subr.bf16.mxu0 0
        %1049 = vmatpush2.bf16.msra.mxu0 0
        %1050 = vmatprep.subr.bf16.mxu0 0
        %1051 = vmatpush2.bf16.msra.mxu0 0
        %1052 = vmatprep.subr.bf16.mxu0 0
        %1053 = vmatpush2.bf16.msra.mxu0 0
        %1054 = vmatprep.subr.bf16.mxu0 0
        %1055 = vmatpush2.bf16.msra.mxu0 0
        %1056 = vmatprep.subr.bf16.mxu0 0
        %1057 = vmatpush2.bf16.msra.mxu0 0
        %1058 = vmatprep.subr.bf16.mxu0 0
        %1059 = vmatpush2.bf16.msra.mxu0 0
        %1060 = vmatprep.subr.bf16.mxu0 0
        %1061 = vmatpush2.bf16.msra.mxu0 0
        %1062 = vmatprep.subr.bf16.mxu0 0
        %1063 = vmatpush2.bf16.msra.mxu0 0
        %1064 = vmatprep.mubr.bf16.mxu0 0
        %1065 = vmatmul.mubr.bf16.gmra.mxu0 %v1024
        %v1066 = vpop.f32.mrf.mxu0
        %v1067 = vadd.f32 %v1011, %v1066
        %v1068 = vpop.f32.mrf.mxu0
        %v1069 = vadd.f32 %v1015, %v1068
        %v1070 = vpop.f32.mrf.mxu0
        %v1071 = vadd.f32 %v1011, %v1070
        %v1072 = vpop.f32.mrf.mxu0
        %v1073 = vadd.f32 %v1015, %v1072
        %1074 = vdwg.mxu0
        %v1075 = vmax.f32 %v1067, 0.0
        %v1076 = vmax.f32 %v1069, 0.0
        %v1077 = vmax.f32 %v1071, 0.0
        %v1078 = vmax.f32 %v1073, 0.0
        %v1079 = vpack.c.bf16 %v640, %v638
        %v1080 = vpack.c.bf16 %v641, %v639
        %v1081 = vld [vmem:[#allocation6] sm:$0xf]
        %v1082 = vld [vmem:[#allocation6 + $0x4] sm:$0xf]
        %v1083 = vld [vmem:[#allocation6 + $0x8] sm:$0xf]
        %v1084 = vld [vmem:[#allocation6 + $0xc] sm:$0xf]
        %v1085 = vld [vmem:[#allocation6 + $0x10] sm:$0xf]
        %v1086 = vld [vmem:[#allocation6 + $0x14] sm:$0xf]
        %v1087 = vld [vmem:[#allocation6 + $0x18] sm:$0xf]
        %v1088 = vld [vmem:[#allocation6 + $0x1c] sm:$0xf]
        %v1089 = vld [vmem:[#allocation6 + $0x20] sm:$0xf]
        %v1090 = vld [vmem:[#allocation6 + $0x24] sm:$0xf]
        %v1091 = vld [vmem:[#allocation6 + $0x28] sm:$0xf]
        %v1092 = vld [vmem:[#allocation6 + $0x2c] sm:$0xf]
        %v1093 = vld [vmem:[#allocation6 + $0x30] sm:$0xf]
        %v1094 = vld [vmem:[#allocation6 + $0x34] sm:$0xf]
        %v1095 = vld [vmem:[#allocation6 + $0x38] sm:$0xf]
        %v1096 = vld [vmem:[#allocation6 + $0x3c] sm:$0xf]
        %v1097 = vld [vmem:[#allocation6 + $0x40] sm:$0xf]
        %v1098 = vld [vmem:[#allocation6 + $0x44] sm:$0xf]
        %v1099 = vld [vmem:[#allocation6 + $0x48] sm:$0xf]
        %v1100 = vld [vmem:[#allocation6 + $0x4c] sm:$0xf]
        %v1101 = vld [vmem:[#allocation6 + $0x50] sm:$0xf]
        %v1102 = vld [vmem:[#allocation6 + $0x54] sm:$0xf]
        %v1103 = vld [vmem:[#allocation6 + $0x58] sm:$0xf]
        %v1104 = vld [vmem:[#allocation6 + $0x5c] sm:$0xf]
        %v1105 = vld [vmem:[#allocation6 + $0x60] sm:$0xf]
        %v1106 = vld [vmem:[#allocation6 + $0x64] sm:$0xf]
        %v1107 = vld [vmem:[#allocation6 + $0x68] sm:$0xf]
        %v1108 = vld [vmem:[#allocation6 + $0x6c] sm:$0xf]
        %v1109 = vld [vmem:[#allocation6 + $0x70] sm:$0xf]
        %v1110 = vld [vmem:[#allocation6 + $0x74] sm:$0xf]
        %v1111 = vld [vmem:[#allocation6 + $0x78] sm:$0xf]
        %v1112 = vld [vmem:[#allocation6 + $0x7c] sm:$0xf]
        %v1113 = vpack.c.bf16 %v861, %v859
        %v1114 = vpack.c.bf16 %v862, %v860
        %s1115 = scalar_lea.vmem [#allocation6], 128
        %v1116 = vld [vmem:[%s1115] sm:$0xf]
        %v1117 = vld [vmem:[%s1115 + $0x4] sm:$0xf]
        %v1118 = vld [vmem:[%s1115 + $0x8] sm:$0xf]
        %v1119 = vld [vmem:[%s1115 + $0xc] sm:$0xf]
        %v1120 = vld [vmem:[%s1115 + $0x10] sm:$0xf]
        %v1121 = vld [vmem:[%s1115 + $0x14] sm:$0xf]
        %v1122 = vld [vmem:[%s1115 + $0x18] sm:$0xf]
        %v1123 = vld [vmem:[%s1115 + $0x1c] sm:$0xf]
        %v1124 = vld [vmem:[%s1115 + $0x20] sm:$0xf]
        %v1125 = vld [vmem:[%s1115 + $0x24] sm:$0xf]
        %v1126 = vld [vmem:[%s1115 + $0x28] sm:$0xf]
        %v1127 = vld [vmem:[%s1115 + $0x2c] sm:$0xf]
        %v1128 = vld [vmem:[%s1115 + $0x30] sm:$0xf]
        %v1129 = vld [vmem:[%s1115 + $0x34] sm:$0xf]
        %v1130 = vld [vmem:[%s1115 + $0x38] sm:$0xf]
        %v1131 = vld [vmem:[%s1115 + $0x3c] sm:$0xf]
        %v1132 = vld [vmem:[%s1115 + $0x40] sm:$0xf]
        %v1133 = vld [vmem:[%s1115 + $0x44] sm:$0xf]
        %v1134 = vld [vmem:[%s1115 + $0x48] sm:$0xf]
        %v1135 = vld [vmem:[%s1115 + $0x4c] sm:$0xf]
        %v1136 = vld [vmem:[%s1115 + $0x50] sm:$0xf]
        %v1137 = vld [vmem:[%s1115 + $0x54] sm:$0xf]
        %v1138 = vld [vmem:[%s1115 + $0x58] sm:$0xf]
        %v1139 = vld [vmem:[%s1115 + $0x5c] sm:$0xf]
        %v1140 = vld [vmem:[%s1115 + $0x60] sm:$0xf]
        %v1141 = vld [vmem:[%s1115 + $0x64] sm:$0xf]
        %v1142 = vld [vmem:[%s1115 + $0x68] sm:$0xf]
        %v1143 = vld [vmem:[%s1115 + $0x6c] sm:$0xf]
        %v1144 = vld [vmem:[%s1115 + $0x70] sm:$0xf]
        %v1145 = vld [vmem:[%s1115 + $0x74] sm:$0xf]
        %v1146 = vld [vmem:[%s1115 + $0x78] sm:$0xf]
        %v1147 = vld [vmem:[%s1115 + $0x7c] sm:$0xf]
        %v1180 = vunpack.c.l.b16 %v1116
        %v1181 = vunpack.c.l.b16 %v1117
        %v1182 = vunpack.c.l.b16 %v1118
        %v1183 = vunpack.c.l.b16 %v1119
        %v1184 = vunpack.c.l.b16 %v1120
        %v1185 = vunpack.c.l.b16 %v1121
        %v1186 = vunpack.c.l.b16 %v1122
        %v1187 = vunpack.c.l.b16 %v1123
        %v1188 = vunpack.c.l.b16 %v1124
        %v1189 = vunpack.c.l.b16 %v1125
        %v1190 = vunpack.c.l.b16 %v1126
        %v1191 = vunpack.c.l.b16 %v1127
        %v1192 = vunpack.c.l.b16 %v1128
        %v1193 = vunpack.c.l.b16 %v1129
        %v1194 = vunpack.c.l.b16 %v1130
        %v1195 = vunpack.c.l.b16 %v1131
        %v1196 = vunpack.c.l.b16 %v1132
        %v1197 = vunpack.c.l.b16 %v1133
        %v1198 = vunpack.c.l.b16 %v1134
        %v1199 = vunpack.c.l.b16 %v1135
        %v1200 = vunpack.c.l.b16 %v1136
        %v1201 = vunpack.c.l.b16 %v1137
        %v1202 = vunpack.c.l.b16 %v1138
        %v1203 = vunpack.c.l.b16 %v1139
        %v1204 = vunpack.c.l.b16 %v1140
        %v1205 = vunpack.c.l.b16 %v1141
        %v1206 = vunpack.c.l.b16 %v1142
        %v1207 = vunpack.c.l.b16 %v1143
        %v1208 = vunpack.c.l.b16 %v1144
        %v1209 = vunpack.c.l.b16 %v1145
        %v1210 = vunpack.c.l.b16 %v1146
        %v1211 = vunpack.c.l.b16 %v1147
        %v1212 = vpack.c.b16 %v1181, %v1180
        %v1213 = vpack.c.b16 %v1183, %v1182
        %v1214 = vpack.c.b16 %v1185, %v1184
        %v1215 = vpack.c.b16 %v1187, %v1186
        %v1216 = vpack.c.b16 %v1189, %v1188
        %v1217 = vpack.c.b16 %v1191, %v1190
        %v1218 = vpack.c.b16 %v1193, %v1192
        %v1219 = vpack.c.b16 %v1195, %v1194
        %v1220 = vpack.c.b16 %v1197, %v1196
        %v1221 = vpack.c.b16 %v1199, %v1198
        %v1222 = vpack.c.b16 %v1201, %v1200
        %v1223 = vpack.c.b16 %v1203, %v1202
        %v1224 = vpack.c.b16 %v1205, %v1204
        %v1225 = vpack.c.b16 %v1207, %v1206
        %v1226 = vpack.c.b16 %v1209, %v1208
        %v1227 = vpack.c.b16 %v1211, %v1210
        %1244 = vmatprep.subr.bf16.mxu0 0
        %1245 = vmatpush1.bf16.msra.mxu0 %v1219
        %1246 = vmatprep.subr.bf16.mxu0 0
        %1247 = vmatpush1.bf16.msra.mxu0 %v1218
        %1248 = vmatprep.subr.bf16.mxu0 0
        %1249 = vmatpush1.bf16.msra.mxu0 %v1217
        %1250 = vmatprep.subr.bf16.mxu0 0
        %1251 = vmatpush1.bf16.msra.mxu0 %v1216
        %1252 = vmatprep.subr.bf16.mxu0 0
        %1253 = vmatpush1.bf16.msra.mxu0 %v1215
        %1254 = vmatprep.subr.bf16.mxu0 0
        %1255 = vmatpush1.bf16.msra.mxu0 %v1214
        %1256 = vmatprep.subr.bf16.mxu0 0
        %1257 = vmatpush1.bf16.msra.mxu0 %v1213
        %1258 = vmatprep.subr.bf16.mxu0 0
        %1259 = vmatpush1.bf16.msra.mxu0 %v1212
        %1260 = vmatprep.subr.bf16.mxu0 0
        %1261 = vmatpush2.bf16.msra.mxu0 %v1227
        %1262 = vmatprep.subr.bf16.mxu0 0
        %1263 = vmatpush2.bf16.msra.mxu0 %v1226
        %1264 = vmatprep.subr.bf16.mxu0 0
        %1265 = vmatpush2.bf16.msra.mxu0 %v1225
        %1266 = vmatprep.subr.bf16.mxu0 0
        %1267 = vmatpush2.bf16.msra.mxu0 %v1224
        %1268 = vmatprep.subr.bf16.mxu0 0
        %1269 = vmatpush2.bf16.msra.mxu0 %v1223
        %1270 = vmatprep.subr.bf16.mxu0 0
        %1271 = vmatpush2.bf16.msra.mxu0 %v1222
        %1272 = vmatprep.subr.bf16.mxu0 0
        %1273 = vmatpush2.bf16.msra.mxu0 %v1221
        %1274 = vmatprep.subr.bf16.mxu0 0
        %1275 = vmatpush2.bf16.msra.mxu0 %v1220
        %1276 = vmatprep.mubr.bf16.mxu0 %v1114
        %1277 = vmatmul.mubr.bf16.gmra.mxu0 %v1113
        %v1278 = vpop.f32.mrf.mxu0
        %v1279 = vadd.f32 0.0, %v1278
        %v1280 = vpop.f32.mrf.mxu0
        %v1281 = vpop.f32.mrf.mxu0
        %v1282 = vadd.f32 0.0, %v1281
        %v1283 = vpop.f32.mrf.mxu0
        %1284 = vdwg.mxu0
        %v1317 = vunpack.c.l.b16 %v1081
        %v1318 = vunpack.c.l.b16 %v1082
        %v1319 = vunpack.c.l.b16 %v1083
        %v1320 = vunpack.c.l.b16 %v1084
        %v1321 = vunpack.c.l.b16 %v1085
        %v1322 = vunpack.c.l.b16 %v1086
        %v1323 = vunpack.c.l.b16 %v1087
        %v1324 = vunpack.c.l.b16 %v1088
        %v1325 = vunpack.c.l.b16 %v1089
        %v1326 = vunpack.c.l.b16 %v1090
        %v1327 = vunpack.c.l.b16 %v1091
        %v1328 = vunpack.c.l.b16 %v1092
        %v1329 = vunpack.c.l.b16 %v1093
        %v1330 = vunpack.c.l.b16 %v1094
        %v1331 = vunpack.c.l.b16 %v1095
        %v1332 = vunpack.c.l.b16 %v1096
        %v1333 = vunpack.c.l.b16 %v1097
        %v1334 = vunpack.c.l.b16 %v1098
        %v1335 = vunpack.c.l.b16 %v1099
        %v1336 = vunpack.c.l.b16 %v1100
        %v1337 = vunpack.c.l.b16 %v1101
        %v1338 = vunpack.c.l.b16 %v1102
        %v1339 = vunpack.c.l.b16 %v1103
        %v1340 = vunpack.c.l.b16 %v1104
        %v1341 = vunpack.c.l.b16 %v1105
        %v1342 = vunpack.c.l.b16 %v1106
        %v1343 = vunpack.c.l.b16 %v1107
        %v1344 = vunpack.c.l.b16 %v1108
        %v1345 = vunpack.c.l.b16 %v1109
        %v1346 = vunpack.c.l.b16 %v1110
        %v1347 = vunpack.c.l.b16 %v1111
        %v1348 = vunpack.c.l.b16 %v1112
        %v1349 = vpack.c.b16 %v1318, %v1317
        %v1350 = vpack.c.b16 %v1320, %v1319
        %v1351 = vpack.c.b16 %v1322, %v1321
        %v1352 = vpack.c.b16 %v1324, %v1323
        %v1353 = vpack.c.b16 %v1326, %v1325
        %v1354 = vpack.c.b16 %v1328, %v1327
        %v1355 = vpack.c.b16 %v1330, %v1329
        %v1356 = vpack.c.b16 %v1332, %v1331
        %v1357 = vpack.c.b16 %v1334, %v1333
        %v1358 = vpack.c.b16 %v1336, %v1335
        %v1359 = vpack.c.b16 %v1338, %v1337
        %v1360 = vpack.c.b16 %v1340, %v1339
        %v1361 = vpack.c.b16 %v1342, %v1341
        %v1362 = vpack.c.b16 %v1344, %v1343
        %v1363 = vpack.c.b16 %v1346, %v1345
        %v1364 = vpack.c.b16 %v1348, %v1347
        %1381 = vmatprep.subr.bf16.mxu0 0
        %1382 = vmatpush1.bf16.msra.mxu0 %v1356
        %1383 = vmatprep.subr.bf16.mxu0 0
        %1384 = vmatpush1.bf16.msra.mxu0 %v1355
        %1385 = vmatprep.subr.bf16.mxu0 0
        %1386 = vmatpush1.bf16.msra.mxu0 %v1354
        %1387 = vmatprep.subr.bf16.mxu0 0
        %1388 = vmatpush1.bf16.msra.mxu0 %v1353
        %1389 = vmatprep.subr.bf16.mxu0 0
        %1390 = vmatpush1.bf16.msra.mxu0 %v1352
        %1391 = vmatprep.subr.bf16.mxu0 0
        %1392 = vmatpush1.bf16.msra.mxu0 %v1351
        %1393 = vmatprep.subr.bf16.mxu0 0
        %1394 = vmatpush1.bf16.msra.mxu0 %v1350
        %1395 = vmatprep.subr.bf16.mxu0 0
        %1396 = vmatpush1.bf16.msra.mxu0 %v1349
        %1397 = vmatprep.subr.bf16.mxu0 0
        %1398 = vmatpush2.bf16.msra.mxu0 %v1364
        %1399 = vmatprep.subr.bf16.mxu0 0
        %1400 = vmatpush2.bf16.msra.mxu0 %v1363
        %1401 = vmatprep.subr.bf16.mxu0 0
        %1402 = vmatpush2.bf16.msra.mxu0 %v1362
        %1403 = vmatprep.subr.bf16.mxu0 0
        %1404 = vmatpush2.bf16.msra.mxu0 %v1361
        %1405 = vmatprep.subr.bf16.mxu0 0
        %1406 = vmatpush2.bf16.msra.mxu0 %v1360
        %1407 = vmatprep.subr.bf16.mxu0 0
        %1408 = vmatpush2.bf16.msra.mxu0 %v1359
        %1409 = vmatprep.subr.bf16.mxu0 0
        %1410 = vmatpush2.bf16.msra.mxu0 %v1358
        %1411 = vmatprep.subr.bf16.mxu0 0
        %1412 = vmatpush2.bf16.msra.mxu0 %v1357
        %1413 = vmatprep.mubr.bf16.mxu0 %v1080
        %1414 = vmatmul.mubr.bf16.gmra.mxu0 %v1079
        %v1415 = vpop.f32.mrf.mxu0
        %v1416 = vadd.f32 %v1279, %v1415
        %v1417 = vpop.f32.mrf.mxu0
        %v1418 = vpop.f32.mrf.mxu0
        %v1419 = vadd.f32 %v1282, %v1418
        %v1420 = vpop.f32.mrf.mxu0
        %1421 = vdwg.mxu0
        %v1422 = vpack.c.bf16 %v1077, %v1075
        %v1423 = vpack.c.bf16 %v1078, %v1076
        %s1424 = scalar_lea.vmem [#allocation6], 256
        %v1425 = vld [vmem:[%s1424] sm:$0xf]
        %v1426 = vld [vmem:[%s1424 + $0x4] sm:$0xf]
        %v1427 = vld [vmem:[%s1424 + $0x8] sm:$0xf]
        %v1428 = vld [vmem:[%s1424 + $0xc] sm:$0xf]
        %v1429 = vld [vmem:[%s1424 + $0x10] sm:$0xf]
        %v1430 = vld [vmem:[%s1424 + $0x14] sm:$0xf]
        %v1431 = vld [vmem:[%s1424 + $0x18] sm:$0xf]
        %v1432 = vld [vmem:[%s1424 + $0x1c] sm:$0xf]
        %v1433 = vld [vmem:[%s1424 + $0x20] sm:$0xf]
        %v1434 = vld [vmem:[%s1424 + $0x24] sm:$0xf]
        %v1435 = vld [vmem:[%s1424 + $0x28] sm:$0xf]
        %v1436 = vld [vmem:[%s1424 + $0x2c] sm:$0xf]
        %v1437 = vld [vmem:[%s1424 + $0x30] sm:$0xf]
        %v1438 = vld [vmem:[%s1424 + $0x34] sm:$0xf]
        %v1439 = vld [vmem:[%s1424 + $0x38] sm:$0xf]
        %v1440 = vld [vmem:[%s1424 + $0x3c] sm:$0xf]
        %v1441 = vld [vmem:[%s1424 + $0x40] sm:$0xf]
        %v1442 = vld [vmem:[%s1424 + $0x44] sm:$0xf]
        %v1443 = vld [vmem:[%s1424 + $0x48] sm:$0xf]
        %v1444 = vld [vmem:[%s1424 + $0x4c] sm:$0xf]
        %v1445 = vld [vmem:[%s1424 + $0x50] sm:$0xf]
        %v1446 = vld [vmem:[%s1424 + $0x54] sm:$0xf]
        %v1447 = vld [vmem:[%s1424 + $0x58] sm:$0xf]
        %v1448 = vld [vmem:[%s1424 + $0x5c] sm:$0xf]
        %v1449 = vld [vmem:[%s1424 + $0x60] sm:$0xf]
        %v1450 = vld [vmem:[%s1424 + $0x64] sm:$0xf]
        %v1451 = vld [vmem:[%s1424 + $0x68] sm:$0xf]
        %v1452 = vld [vmem:[%s1424 + $0x6c] sm:$0xf]
        %v1453 = vld [vmem:[%s1424 + $0x70] sm:$0xf]
        %v1454 = vld [vmem:[%s1424 + $0x74] sm:$0xf]
        %v1455 = vld [vmem:[%s1424 + $0x78] sm:$0xf]
        %v1456 = vld [vmem:[%s1424 + $0x7c] sm:$0xf]
        %v1489 = vunpack.c.l.b16 %v1425
        %v1490 = vunpack.c.l.b16 %v1426
        %v1491 = vunpack.c.l.b16 %v1427
        %v1492 = vunpack.c.l.b16 %v1428
        %v1493 = vunpack.c.l.b16 %v1429
        %v1494 = vunpack.c.l.b16 %v1430
        %v1495 = vunpack.c.l.b16 %v1431
        %v1496 = vunpack.c.l.b16 %v1432
        %v1497 = vunpack.c.l.b16 %v1433
        %v1498 = vunpack.c.l.b16 %v1434
        %v1499 = vunpack.c.l.b16 %v1435
        %v1500 = vunpack.c.l.b16 %v1436
        %v1501 = vunpack.c.l.b16 %v1437
        %v1502 = vunpack.c.l.b16 %v1438
        %v1503 = vunpack.c.l.b16 %v1439
        %v1504 = vunpack.c.l.b16 %v1440
        %v1505 = vunpack.c.l.b16 %v1441
        %v1506 = vunpack.c.l.b16 %v1442
        %v1507 = vunpack.c.l.b16 %v1443
        %v1508 = vunpack.c.l.b16 %v1444
        %v1509 = vunpack.c.l.b16 %v1445
        %v1510 = vunpack.c.l.b16 %v1446
        %v1511 = vunpack.c.l.b16 %v1447
        %v1512 = vunpack.c.l.b16 %v1448
        %v1513 = vunpack.c.l.b16 %v1449
        %v1514 = vunpack.c.l.b16 %v1450
        %v1515 = vunpack.c.l.b16 %v1451
        %v1516 = vunpack.c.l.b16 %v1452
        %v1517 = vunpack.c.l.b16 %v1453
        %v1518 = vunpack.c.l.b16 %v1454
        %v1519 = vunpack.c.l.b16 %v1455
        %v1520 = vunpack.c.l.b16 %v1456
        %v1521 = vpack.c.b16 %v1490, %v1489
        %v1522 = vpack.c.b16 %v1492, %v1491
        %v1523 = vpack.c.b16 %v1494, %v1493
        %v1524 = vpack.c.b16 %v1496, %v1495
        %v1525 = vpack.c.b16 %v1498, %v1497
        %v1526 = vpack.c.b16 %v1500, %v1499
        %v1527 = vpack.c.b16 %v1502, %v1501
        %v1528 = vpack.c.b16 %v1504, %v1503
        %v1529 = vpack.c.b16 %v1506, %v1505
        %v1530 = vpack.c.b16 %v1508, %v1507
        %v1531 = vpack.c.b16 %v1510, %v1509
        %v1532 = vpack.c.b16 %v1512, %v1511
        %v1533 = vpack.c.b16 %v1514, %v1513
        %v1534 = vpack.c.b16 %v1516, %v1515
        %v1535 = vpack.c.b16 %v1518, %v1517
        %v1536 = vpack.c.b16 %v1520, %v1519
        %1553 = vmatprep.subr.bf16.mxu0 0
        %1554 = vmatpush1.bf16.msra.mxu0 %v1528
        %1555 = vmatprep.subr.bf16.mxu0 0
        %1556 = vmatpush1.bf16.msra.mxu0 %v1527
        %1557 = vmatprep.subr.bf16.mxu0 0
        %1558 = vmatpush1.bf16.msra.mxu0 %v1526
        %1559 = vmatprep.subr.bf16.mxu0 0
        %1560 = vmatpush1.bf16.msra.mxu0 %v1525
        %1561 = vmatprep.subr.bf16.mxu0 0
        %1562 = vmatpush1.bf16.msra.mxu0 %v1524
        %1563 = vmatprep.subr.bf16.mxu0 0
        %1564 = vmatpush1.bf16.msra.mxu0 %v1523
        %1565 = vmatprep.subr.bf16.mxu0 0
        %1566 = vmatpush1.bf16.msra.mxu0 %v1522
        %1567 = vmatprep.subr.bf16.mxu0 0
        %1568 = vmatpush1.bf16.msra.mxu0 %v1521
        %1569 = vmatprep.subr.bf16.mxu0 0
        %1570 = vmatpush2.bf16.msra.mxu0 %v1536
        %1571 = vmatprep.subr.bf16.mxu0 0
        %1572 = vmatpush2.bf16.msra.mxu0 %v1535
        %1573 = vmatprep.subr.bf16.mxu0 0
        %1574 = vmatpush2.bf16.msra.mxu0 %v1534
        %1575 = vmatprep.subr.bf16.mxu0 0
        %1576 = vmatpush2.bf16.msra.mxu0 %v1533
        %1577 = vmatprep.subr.bf16.mxu0 0
        %1578 = vmatpush2.bf16.msra.mxu0 %v1532
        %1579 = vmatprep.subr.bf16.mxu0 0
        %1580 = vmatpush2.bf16.msra.mxu0 %v1531
        %1581 = vmatprep.subr.bf16.mxu0 0
        %1582 = vmatpush2.bf16.msra.mxu0 %v1530
        %1583 = vmatprep.subr.bf16.mxu0 0
        %1584 = vmatpush2.bf16.msra.mxu0 %v1529
        %1585 = vmatprep.mubr.bf16.mxu0 %v1423
        %1586 = vmatmul.mubr.bf16.gmra.mxu0 %v1422
        %v1587 = vpop.f32.mrf.mxu0
        %v1588 = vadd.f32 0.0, %v1587
        %v1589 = vpop.f32.mrf.mxu0
        %v1590 = vpop.f32.mrf.mxu0
        %v1591 = vadd.f32 0.0, %v1590
        %v1592 = vpop.f32.mrf.mxu0
        %1593 = vdwg.mxu0
        %v1594 = vadd.f32 %v1416, %v1588
        %v1595 = vadd.f32 %v1419, %v1591
        %v1596 = vld [vmem:[%s6] sm:$0x1]
        %v1598 = vlaneseq
        %v1599 = vshrl.u32 %v1598, 7
        %v1600 = vsub.s32 0, %v1599
        %v1601 = vrot.slane %v1596, %v1600
        %v1603 = vadd.f32 %v1594, %v1601
        %v1604 = vadd.f32 %v1595, %v1601
        %v1605 = vadd.f32 %v1603, %v484
        %v1606 = vadd.f32 %v1604, %v485
        %v1607 = vmax.f32 %v1605, 0.0
        %v1608 = vmax.f32 %v1606, 0.0
        %1609 = vst [vmem:[#allocation2] sm:$0xff] %v1607
        %1610 = vst [vmem:[#allocation2 + $0x8] sm:$0x1] %v1608
        %v1611 = vld [vmem:[#allocation2] sm:$0xff]
        %v1612 = vld [vmem:[#allocation2 + $0x8] sm:$0x1]
        %v1613 = vpack.c.bf16 %v1612, %v1611
        %s1614 = scalar_lea.vmem [#allocation3], 384
        %v1615 = vld [vmem:[%s1614] sm:$0xff]
        %v1616 = vld [vmem:[%s1614 + $0x8] sm:$0xff]
        %v1617 = vld [vmem:[%s1614 + $0x10] sm:$0xff]
        %v1618 = vld [vmem:[%s1614 + $0x18] sm:$0xff]
        %v1619 = vld [vmem:[%s1614 + $0x20] sm:$0xff]
        %v1620 = vld [vmem:[%s1614 + $0x28] sm:$0xff]
        %v1621 = vld [vmem:[%s1614 + $0x30] sm:$0xff]
        %v1622 = vld [vmem:[%s1614 + $0x38] sm:$0xff]
        %v1623 = vld [vmem:[%s1614 + $0x40] sm:$0xff]
        %v1624 = vld [vmem:[%s1614 + $0x48] sm:$0xff]
        %v1625 = vld [vmem:[%s1614 + $0x50] sm:$0xff]
        %v1626 = vld [vmem:[%s1614 + $0x58] sm:$0xff]
        %v1627 = vld [vmem:[%s1614 + $0x60] sm:$0xff]
        %v1628 = vld [vmem:[%s1614 + $0x68] sm:$0xff]
        %v1629 = vld [vmem:[%s1614 + $0x70] sm:$0xff]
        %v1630 = vld [vmem:[%s1614 + $0x78] sm:$0xff]
        %s1631 = scalar_lea.vmem %s5, 6
        %v1632 = vld [vmem:[%s1631] sm:$0x3]
        %v1634 = vlaneseq
        %v1635 = vshrl.u32 %v1634, 7
        %v1636 = vsub.s32 0, %v1635
        %v1637 = vrot.slane %v1632, %v1636
        %v1638 = vlaneseq
        %v1639 = vshrl.u32 %v1638, 7
        %v1640 = vsub.s32 1, %v1639
        %v1641 = vrot.slane %v1632, %v1640
        %v1660 = vunpack.c.l.b16 %v1615
        %v1661 = vunpack.c.h.b16 %v1615
        %v1662 = vunpack.c.l.b16 %v1616
        %v1663 = vunpack.c.h.b16 %v1616
        %v1664 = vunpack.c.l.b16 %v1617
        %v1665 = vunpack.c.h.b16 %v1617
        %v1666 = vunpack.c.l.b16 %v1618
        %v1667 = vunpack.c.h.b16 %v1618
        %v1668 = vunpack.c.l.b16 %v1619
        %v1669 = vunpack.c.h.b16 %v1619
        %v1670 = vunpack.c.l.b16 %v1620
        %v1671 = vunpack.c.h.b16 %v1620
        %v1672 = vunpack.c.l.b16 %v1621
        %v1673 = vunpack.c.h.b16 %v1621
        %v1674 = vunpack.c.l.b16 %v1622
        %v1675 = vunpack.c.h.b16 %v1622
        %v1676 = vunpack.c.l.b16 %v1623
        %v1677 = vunpack.c.h.b16 %v1623
        %v1678 = vunpack.c.l.b16 %v1624
        %v1679 = vunpack.c.h.b16 %v1624
        %v1680 = vunpack.c.l.b16 %v1625
        %v1681 = vunpack.c.h.b16 %v1625
        %v1682 = vunpack.c.l.b16 %v1626
        %v1683 = vunpack.c.h.b16 %v1626
        %v1684 = vunpack.c.l.b16 %v1627
        %v1685 = vunpack.c.h.b16 %v1627
        %v1686 = vunpack.c.l.b16 %v1628
        %v1687 = vunpack.c.h.b16 %v1628
        %v1688 = vunpack.c.l.b16 %v1629
        %v1689 = vunpack.c.h.b16 %v1629
        %v1690 = vunpack.c.l.b16 %v1630
        %v1691 = vunpack.c.h.b16 %v1630
        %v1692 = vpack.c.b16 %v1662, %v1660
        %v1693 = vpack.c.b16 %v1663, %v1661
        %v1694 = vpack.c.b16 %v1666, %v1664
        %v1695 = vpack.c.b16 %v1667, %v1665
        %v1696 = vpack.c.b16 %v1670, %v1668
        %v1697 = vpack.c.b16 %v1671, %v1669
        %v1698 = vpack.c.b16 %v1674, %v1672
        %v1699 = vpack.c.b16 %v1675, %v1673
        %v1700 = vpack.c.b16 %v1678, %v1676
        %v1701 = vpack.c.b16 %v1679, %v1677
        %v1702 = vpack.c.b16 %v1682, %v1680
        %v1703 = vpack.c.b16 %v1683, %v1681
        %v1704 = vpack.c.b16 %v1686, %v1684
        %v1705 = vpack.c.b16 %v1687, %v1685
        %v1706 = vpack.c.b16 %v1690, %v1688
        %v1707 = vpack.c.b16 %v1691, %v1689
        %1724 = vmatprep.subr.bf16.mxu0 %v1707
        %1725 = vmatpush1.bf16.msra.mxu0 %v1706
        %1726 = vmatprep.subr.bf16.mxu0 %v1705
        %1727 = vmatpush1.bf16.msra.mxu0 %v1704
        %1728 = vmatprep.subr.bf16.mxu0 %v1703
        %1729 = vmatpush1.bf16.msra.mxu0 %v1702
        %1730 = vmatprep.subr.bf16.mxu0 %v1701
        %1731 = vmatpush1.bf16.msra.mxu0 %v1700
        %1732 = vmatprep.subr.bf16.mxu0 %v1699
        %1733 = vmatpush1.bf16.msra.mxu0 %v1698
        %1734 = vmatprep.subr.bf16.mxu0 %v1697
        %1735 = vmatpush1.bf16.msra.mxu0 %v1696
        %1736 = vmatprep.subr.bf16.mxu0 %v1695
        %1737 = vmatpush1.bf16.msra.mxu0 %v1694
        %1738 = vmatprep.subr.bf16.mxu0 %v1693
        %1739 = vmatpush1.bf16.msra.mxu0 %v1692
        %1740 = vmatprep.subr.bf16.mxu0 0
        %1741 = vmatpush2.bf16.msra.mxu0 0
        %1742 = vmatprep.subr.bf16.mxu0 0
        %1743 = vmatpush2.bf16.msra.mxu0 0
        %1744 = vmatprep.subr.bf16.mxu0 0
        %1745 = vmatpush2.bf16.msra.mxu0 0
        %1746 = vmatprep.subr.bf16.mxu0 0
        %1747 = vmatpush2.bf16.msra.mxu0 0
        %1748 = vmatprep.subr.bf16.mxu0 0
        %1749 = vmatpush2.bf16.msra.mxu0 0
        %1750 = vmatprep.subr.bf16.mxu0 0
        %1751 = vmatpush2.bf16.msra.mxu0 0
        %1752 = vmatprep.subr.bf16.mxu0 0
        %1753 = vmatpush2.bf16.msra.mxu0 0
        %1754 = vmatprep.subr.bf16.mxu0 0
        %1755 = vmatpush2.bf16.msra.mxu0 0
        %1756 = vmatprep.mubr.bf16.mxu0 0
        %1757 = vmatmul.mubr.bf16.gmra.mxu0 %v1613
        %v1758 = vpop.f32.mrf.mxu0
        %v1759 = vadd.f32 %v1637, %v1758
        %v1760 = vpop.f32.mrf.mxu0
        %v1761 = vadd.f32 %v1641, %v1760
        %v1762 = vpop.f32.mrf.mxu0
        %v1763 = vadd.f32 %v1637, %v1762
        %v1764 = vpop.f32.mrf.mxu0
        %v1765 = vadd.f32 %v1641, %v1764
        %1766 = vdwg.mxu0
        %v1767 = vmax.f32 %v1759, 0.0
        %v1768 = vmax.f32 %v1761, 0.0
        %v1769 = vmax.f32 %v1763, 0.0
        %v1770 = vmax.f32 %v1765, 0.0
        %s1771 = scalar_lea.vmem [#allocation3], 512
        %v1772 = vld [vmem:[%s1771] sm:$0xff]
        %v1773 = vld [vmem:[%s1771 + $0x8] sm:$0xff]
        %v1774 = vld [vmem:[%s1771 + $0x10] sm:$0xff]
        %v1775 = vld [vmem:[%s1771 + $0x18] sm:$0xff]
        %v1776 = vld [vmem:[%s1771 + $0x20] sm:$0xff]
        %v1777 = vld [vmem:[%s1771 + $0x28] sm:$0xff]
        %v1778 = vld [vmem:[%s1771 + $0x30] sm:$0xff]
        %v1779 = vld [vmem:[%s1771 + $0x38] sm:$0xff]
        %v1780 = vld [vmem:[%s1771 + $0x40] sm:$0xff]
        %v1781 = vld [vmem:[%s1771 + $0x48] sm:$0xff]
        %v1782 = vld [vmem:[%s1771 + $0x50] sm:$0xff]
        %v1783 = vld [vmem:[%s1771 + $0x58] sm:$0xff]
        %v1784 = vld [vmem:[%s1771 + $0x60] sm:$0xff]
        %v1785 = vld [vmem:[%s1771 + $0x68] sm:$0xff]
        %v1786 = vld [vmem:[%s1771 + $0x70] sm:$0xff]
        %v1787 = vld [vmem:[%s1771 + $0x78] sm:$0xff]
        %v1804 = vunpack.c.l.b16 %v1772
        %v1805 = vunpack.c.h.b16 %v1772
        %v1806 = vunpack.c.l.b16 %v1773
        %v1807 = vunpack.c.h.b16 %v1773
        %v1808 = vunpack.c.l.b16 %v1774
        %v1809 = vunpack.c.h.b16 %v1774
        %v1810 = vunpack.c.l.b16 %v1775
        %v1811 = vunpack.c.h.b16 %v1775
        %v1812 = vunpack.c.l.b16 %v1776
        %v1813 = vunpack.c.h.b16 %v1776
        %v1814 = vunpack.c.l.b16 %v1777
        %v1815 = vunpack.c.h.b16 %v1777
        %v1816 = vunpack.c.l.b16 %v1778
        %v1817 = vunpack.c.h.b16 %v1778
        %v1818 = vunpack.c.l.b16 %v1779
        %v1819 = vunpack.c.h.b16 %v1779
        %v1820 = vunpack.c.l.b16 %v1780
        %v1821 = vunpack.c.h.b16 %v1780
        %v1822 = vunpack.c.l.b16 %v1781
        %v1823 = vunpack.c.h.b16 %v1781
        %v1824 = vunpack.c.l.b16 %v1782
        %v1825 = vunpack.c.h.b16 %v1782
        %v1826 = vunpack.c.l.b16 %v1783
        %v1827 = vunpack.c.h.b16 %v1783
        %v1828 = vunpack.c.l.b16 %v1784
        %v1829 = vunpack.c.h.b16 %v1784
        %v1830 = vunpack.c.l.b16 %v1785
        %v1831 = vunpack.c.h.b16 %v1785
        %v1832 = vunpack.c.l.b16 %v1786
        %v1833 = vunpack.c.h.b16 %v1786
        %v1834 = vunpack.c.l.b16 %v1787
        %v1835 = vunpack.c.h.b16 %v1787
        %v1836 = vpack.c.b16 %v1806, %v1804
        %v1837 = vpack.c.b16 %v1807, %v1805
        %v1838 = vpack.c.b16 %v1810, %v1808
        %v1839 = vpack.c.b16 %v1811, %v1809
        %v1840 = vpack.c.b16 %v1814, %v1812
        %v1841 = vpack.c.b16 %v1815, %v1813
        %v1842 = vpack.c.b16 %v1818, %v1816
        %v1843 = vpack.c.b16 %v1819, %v1817
        %v1844 = vpack.c.b16 %v1822, %v1820
        %v1845 = vpack.c.b16 %v1823, %v1821
        %v1846 = vpack.c.b16 %v1826, %v1824
        %v1847 = vpack.c.b16 %v1827, %v1825
        %v1848 = vpack.c.b16 %v1830, %v1828
        %v1849 = vpack.c.b16 %v1831, %v1829
        %v1850 = vpack.c.b16 %v1834, %v1832
        %v1851 = vpack.c.b16 %v1835, %v1833
        %1868 = vmatprep.subr.bf16.mxu0 %v1851
        %1869 = vmatpush1.bf16.msra.mxu0 %v1850
        %1870 = vmatprep.subr.bf16.mxu0 %v1849
        %1871 = vmatpush1.bf16.msra.mxu0 %v1848
        %1872 = vmatprep.subr.bf16.mxu0 %v1847
        %1873 = vmatpush1.bf16.msra.mxu0 %v1846
        %1874 = vmatprep.subr.bf16.mxu0 %v1845
        %1875 = vmatpush1.bf16.msra.mxu0 %v1844
        %1876 = vmatprep.subr.bf16.mxu0 %v1843
        %1877 = vmatpush1.bf16.msra.mxu0 %v1842
        %1878 = vmatprep.subr.bf16.mxu0 %v1841
        %1879 = vmatpush1.bf16.msra.mxu0 %v1840
        %1880 = vmatprep.subr.bf16.mxu0 %v1839
        %1881 = vmatpush1.bf16.msra.mxu0 %v1838
        %1882 = vmatprep.subr.bf16.mxu0 %v1837
        %1883 = vmatpush1.bf16.msra.mxu0 %v1836
        %1884 = vmatprep.subr.bf16.mxu0 0
        %1885 = vmatpush2.bf16.msra.mxu0 0
        %1886 = vmatprep.subr.bf16.mxu0 0
        %1887 = vmatpush2.bf16.msra.mxu0 0
        %1888 = vmatprep.subr.bf16.mxu0 0
        %1889 = vmatpush2.bf16.msra.mxu0 0
        %1890 = vmatprep.subr.bf16.mxu0 0
        %1891 = vmatpush2.bf16.msra.mxu0 0
        %1892 = vmatprep.subr.bf16.mxu0 0
        %1893 = vmatpush2.bf16.msra.mxu0 0
        %1894 = vmatprep.subr.bf16.mxu0 0
        %1895 = vmatpush2.bf16.msra.mxu0 0
        %1896 = vmatprep.subr.bf16.mxu0 0
        %1897 = vmatpush2.bf16.msra.mxu0 0
        %1898 = vmatprep.subr.bf16.mxu0 0
        %1899 = vmatpush2.bf16.msra.mxu0 0
        %1900 = vmatprep.mubr.bf16.mxu0 0
        %1901 = vmatmul.mubr.bf16.gmra.mxu0 %v1613
        %v1902 = vpop.f32.mrf.mxu0
        %v1903 = vadd.f32 0.0, %v1902
        %v1904 = vpop.f32.mrf.mxu0
        %v1905 = vadd.f32 0.0, %v1904
        %v1906 = vpop.f32.mrf.mxu0
        %v1907 = vadd.f32 0.0, %v1906
        %v1908 = vpop.f32.mrf.mxu0
        %v1909 = vadd.f32 0.0, %v1908
        %1910 = vdwg.mxu0
        %v1911 = vpack.c.bf16 %v1907, %v1903
        %v1912 = vpack.c.bf16 %v1909, %v1905
        %s1913 = scalar_lea.vmem %s5, 8
        %v1914 = vld [vmem:[%s1913] sm:$0x3]
        %v1916 = vlaneseq
        %v1917 = vshrl.u32 %v1916, 7
        %v1918 = vsub.s32 0, %v1917
        %v1919 = vrot.slane %v1914, %v1918
        %v1920 = vlaneseq
        %v1921 = vshrl.u32 %v1920, 7
        %v1922 = vsub.s32 1, %v1921
        %v1923 = vrot.slane %v1914, %v1922
        %v1927 = vand.u32 %v1911, %v809
        %v1930 = vand.u32 %v1912, %v809
        %1932 = vmatprep.subr.bf16.mxu0 0
        %1933 = vmatpush1.bf16.msra.mxu0 0
        %1934 = vmatprep.subr.bf16.mxu0 0
        %1935 = vmatpush1.bf16.msra.mxu0 0
        %1936 = vmatprep.subr.bf16.mxu0 0
        %1937 = vmatpush1.bf16.msra.mxu0 0
        %1938 = vmatprep.subr.bf16.mxu0 0
        %1939 = vmatpush1.bf16.msra.mxu0 0
        %1940 = vmatprep.subr.bf16.mxu0 0
        %1941 = vmatpush1.bf16.msra.mxu0 0
        %1942 = vmatprep.subr.bf16.mxu0 0
        %1943 = vmatpush1.bf16.msra.mxu0 0
        %1944 = vmatprep.subr.bf16.mxu0 0
        %1945 = vmatpush1.bf16.msra.mxu0 0
        %1946 = vmatprep.subr.bf16.mxu0 %v1930
        %1947 = vmatpush1.bf16.msra.mxu0 %v1927
        %1948 = vmatprep.subr.bf16.mxu0 0
        %1949 = vmatpush2.bf16.msra.mxu0 0
        %1950 = vmatprep.subr.bf16.mxu0 0
        %1951 = vmatpush2.bf16.msra.mxu0 0
        %1952 = vmatprep.subr.bf16.mxu0 0
        %1953 = vmatpush2.bf16.msra.mxu0 0
        %1954 = vmatprep.subr.bf16.mxu0 0
        %1955 = vmatpush2.bf16.msra.mxu0 0
        %1956 = vmatprep.subr.bf16.mxu0 0
        %1957 = vmatpush2.bf16.msra.mxu0 0
        %1958 = vmatprep.subr.bf16.mxu0 0
        %1959 = vmatpush2.bf16.msra.mxu0 0
        %1960 = vmatprep.subr.bf16.mxu0 0
        %1961 = vmatpush2.bf16.msra.mxu0 0
        %1962 = vmatprep.subr.bf16.mxu0 0
        %1963 = vmatpush2.bf16.msra.mxu0 0
        %1964 = vmatprep.mubr.bf16.mxu0 0
        %1965 = vmatmul.mubr.bf16.gmra.mxu0 %v804
        %v1966 = vpop.f32.mrf.mxu0
        %v1967 = vadd.f32 %v1919, %v1966
        %v1968 = vpop.f32.mrf.mxu0
        %v1969 = vadd.f32 %v1923, %v1968
        %v1970 = vpop.f32.mrf.mxu0
        %v1971 = vadd.f32 %v1919, %v1970
        %v1972 = vpop.f32.mrf.mxu0
        %v1973 = vadd.f32 %v1923, %v1972
        %1974 = vdwg.mxu0
        %v1975 = vmax.f32 %v1967, 0.0
        %v1976 = vmax.f32 %v1969, 0.0
        %v1977 = vmax.f32 %v1971, 0.0
        %v1978 = vmax.f32 %v1973, 0.0
        %s1979 = scalar_lea.vmem [#allocation3], 640
        %v1980 = vld [vmem:[%s1979] sm:$0xff]
        %v1981 = vld [vmem:[%s1979 + $0x8] sm:$0xff]
        %v1982 = vld [vmem:[%s1979 + $0x10] sm:$0xff]
        %v1983 = vld [vmem:[%s1979 + $0x18] sm:$0xff]
        %v1984 = vld [vmem:[%s1979 + $0x20] sm:$0xff]
        %v1985 = vld [vmem:[%s1979 + $0x28] sm:$0xff]
        %v1986 = vld [vmem:[%s1979 + $0x30] sm:$0xff]
        %v1987 = vld [vmem:[%s1979 + $0x38] sm:$0xff]
        %v1988 = vld [vmem:[%s1979 + $0x40] sm:$0xff]
        %v1989 = vld [vmem:[%s1979 + $0x48] sm:$0xff]
        %v1990 = vld [vmem:[%s1979 + $0x50] sm:$0xff]
        %v1991 = vld [vmem:[%s1979 + $0x58] sm:$0xff]
        %v1992 = vld [vmem:[%s1979 + $0x60] sm:$0xff]
        %v1993 = vld [vmem:[%s1979 + $0x68] sm:$0xff]
        %v1994 = vld [vmem:[%s1979 + $0x70] sm:$0xff]
        %v1995 = vld [vmem:[%s1979 + $0x78] sm:$0xff]
        %v2012 = vunpack.c.l.b16 %v1980
        %v2013 = vunpack.c.h.b16 %v1980
        %v2014 = vunpack.c.l.b16 %v1981
        %v2015 = vunpack.c.h.b16 %v1981
        %v2016 = vunpack.c.l.b16 %v1982
        %v2017 = vunpack.c.h.b16 %v1982
        %v2018 = vunpack.c.l.b16 %v1983
        %v2019 = vunpack.c.h.b16 %v1983
        %v2020 = vunpack.c.l.b16 %v1984
        %v2021 = vunpack.c.h.b16 %v1984
        %v2022 = vunpack.c.l.b16 %v1985
        %v2023 = vunpack.c.h.b16 %v1985
        %v2024 = vunpack.c.l.b16 %v1986
        %v2025 = vunpack.c.h.b16 %v1986
        %v2026 = vunpack.c.l.b16 %v1987
        %v2027 = vunpack.c.h.b16 %v1987
        %v2028 = vunpack.c.l.b16 %v1988
        %v2029 = vunpack.c.h.b16 %v1988
        %v2030 = vunpack.c.l.b16 %v1989
        %v2031 = vunpack.c.h.b16 %v1989
        %v2032 = vunpack.c.l.b16 %v1990
        %v2033 = vunpack.c.h.b16 %v1990
        %v2034 = vunpack.c.l.b16 %v1991
        %v2035 = vunpack.c.h.b16 %v1991
        %v2036 = vunpack.c.l.b16 %v1992
        %v2037 = vunpack.c.h.b16 %v1992
        %v2038 = vunpack.c.l.b16 %v1993
        %v2039 = vunpack.c.h.b16 %v1993
        %v2040 = vunpack.c.l.b16 %v1994
        %v2041 = vunpack.c.h.b16 %v1994
        %v2042 = vunpack.c.l.b16 %v1995
        %v2043 = vunpack.c.h.b16 %v1995
        %v2044 = vpack.c.b16 %v2014, %v2012
        %v2045 = vpack.c.b16 %v2015, %v2013
        %v2046 = vpack.c.b16 %v2018, %v2016
        %v2047 = vpack.c.b16 %v2019, %v2017
        %v2048 = vpack.c.b16 %v2022, %v2020
        %v2049 = vpack.c.b16 %v2023, %v2021
        %v2050 = vpack.c.b16 %v2026, %v2024
        %v2051 = vpack.c.b16 %v2027, %v2025
        %v2052 = vpack.c.b16 %v2030, %v2028
        %v2053 = vpack.c.b16 %v2031, %v2029
        %v2054 = vpack.c.b16 %v2034, %v2032
        %v2055 = vpack.c.b16 %v2035, %v2033
        %v2056 = vpack.c.b16 %v2038, %v2036
        %v2057 = vpack.c.b16 %v2039, %v2037
        %v2058 = vpack.c.b16 %v2042, %v2040
        %v2059 = vpack.c.b16 %v2043, %v2041
        %2076 = vmatprep.subr.bf16.mxu0 %v2059
        %2077 = vmatpush1.bf16.msra.mxu0 %v2058
        %2078 = vmatprep.subr.bf16.mxu0 %v2057
        %2079 = vmatpush1.bf16.msra.mxu0 %v2056
        %2080 = vmatprep.subr.bf16.mxu0 %v2055
        %2081 = vmatpush1.bf16.msra.mxu0 %v2054
        %2082 = vmatprep.subr.bf16.mxu0 %v2053
        %2083 = vmatpush1.bf16.msra.mxu0 %v2052
        %2084 = vmatprep.subr.bf16.mxu0 %v2051
        %2085 = vmatpush1.bf16.msra.mxu0 %v2050
        %2086 = vmatprep.subr.bf16.mxu0 %v2049
        %2087 = vmatpush1.bf16.msra.mxu0 %v2048
        %2088 = vmatprep.subr.bf16.mxu0 %v2047
        %2089 = vmatpush1.bf16.msra.mxu0 %v2046
        %2090 = vmatprep.subr.bf16.mxu0 %v2045
        %2091 = vmatpush1.bf16.msra.mxu0 %v2044
        %2092 = vmatprep.subr.bf16.mxu0 0
        %2093 = vmatpush2.bf16.msra.mxu0 0
        %2094 = vmatprep.subr.bf16.mxu0 0
        %2095 = vmatpush2.bf16.msra.mxu0 0
        %2096 = vmatprep.subr.bf16.mxu0 0
        %2097 = vmatpush2.bf16.msra.mxu0 0
        %2098 = vmatprep.subr.bf16.mxu0 0
        %2099 = vmatpush2.bf16.msra.mxu0 0
        %2100 = vmatprep.subr.bf16.mxu0 0
        %2101 = vmatpush2.bf16.msra.mxu0 0
        %2102 = vmatprep.subr.bf16.mxu0 0
        %2103 = vmatpush2.bf16.msra.mxu0 0
        %2104 = vmatprep.subr.bf16.mxu0 0
        %2105 = vmatpush2.bf16.msra.mxu0 0
        %2106 = vmatprep.subr.bf16.mxu0 0
        %2107 = vmatpush2.bf16.msra.mxu0 0
        %2108 = vmatprep.mubr.bf16.mxu0 0
        %2109 = vmatmul.mubr.bf16.gmra.mxu0 %v1613
        %v2110 = vpop.f32.mrf.mxu0
        %v2111 = vadd.f32 0.0, %v2110
        %v2112 = vpop.f32.mrf.mxu0
        %v2113 = vadd.f32 0.0, %v2112
        %v2114 = vpop.f32.mrf.mxu0
        %v2115 = vadd.f32 0.0, %v2114
        %v2116 = vpop.f32.mrf.mxu0
        %v2117 = vadd.f32 0.0, %v2116
        %2118 = vdwg.mxu0
        %v2119 = vpack.c.bf16 %v2115, %v2111
        %v2120 = vpack.c.bf16 %v2117, %v2113
        %s2121 = scalar_lea.vmem %s5, 10
        %v2122 = vld [vmem:[%s2121] sm:$0x3]
        %v2124 = vlaneseq
        %v2125 = vshrl.u32 %v2124, 7
        %v2126 = vsub.s32 0, %v2125
        %v2127 = vrot.slane %v2122, %v2126
        %v2128 = vlaneseq
        %v2129 = vshrl.u32 %v2128, 7
        %v2130 = vsub.s32 1, %v2129
        %v2131 = vrot.slane %v2122, %v2130
        %v2135 = vand.u32 %v2119, %v809
        %v2138 = vand.u32 %v2120, %v809
        %2140 = vmatprep.subr.bf16.mxu0 0
        %2141 = vmatpush1.bf16.msra.mxu0 0
        %2142 = vmatprep.subr.bf16.mxu0 0
        %2143 = vmatpush1.bf16.msra.mxu0 0
        %2144 = vmatprep.subr.bf16.mxu0 0
        %2145 = vmatpush1.bf16.msra.mxu0 0
        %2146 = vmatprep.subr.bf16.mxu0 0
        %2147 = vmatpush1.bf16.msra.mxu0 0
        %2148 = vmatprep.subr.bf16.mxu0 0
        %2149 = vmatpush1.bf16.msra.mxu0 0
        %2150 = vmatprep.subr.bf16.mxu0 0
        %2151 = vmatpush1.bf16.msra.mxu0 0
        %2152 = vmatprep.subr.bf16.mxu0 0
        %2153 = vmatpush1.bf16.msra.mxu0 0
        %2154 = vmatprep.subr.bf16.mxu0 %v2138
        %2155 = vmatpush1.bf16.msra.mxu0 %v2135
        %2156 = vmatprep.subr.bf16.mxu0 0
        %2157 = vmatpush2.bf16.msra.mxu0 0
        %2158 = vmatprep.subr.bf16.mxu0 0
        %2159 = vmatpush2.bf16.msra.mxu0 0
        %2160 = vmatprep.subr.bf16.mxu0 0
        %2161 = vmatpush2.bf16.msra.mxu0 0
        %2162 = vmatprep.subr.bf16.mxu0 0
        %2163 = vmatpush2.bf16.msra.mxu0 0
        %2164 = vmatprep.subr.bf16.mxu0 0
        %2165 = vmatpush2.bf16.msra.mxu0 0
        %2166 = vmatprep.subr.bf16.mxu0 0
        %2167 = vmatpush2.bf16.msra.mxu0 0
        %2168 = vmatprep.subr.bf16.mxu0 0
        %2169 = vmatpush2.bf16.msra.mxu0 0
        %2170 = vmatprep.subr.bf16.mxu0 0
        %2171 = vmatpush2.bf16.msra.mxu0 0
        %2172 = vmatprep.mubr.bf16.mxu0 0
        %2173 = vmatmul.mubr.bf16.gmra.mxu0 %v1024
        %v2174 = vpop.f32.mrf.mxu0
        %v2175 = vadd.f32 %v2127, %v2174
        %v2176 = vpop.f32.mrf.mxu0
        %v2177 = vadd.f32 %v2131, %v2176
        %v2178 = vpop.f32.mrf.mxu0
        %v2179 = vadd.f32 %v2127, %v2178
        %v2180 = vpop.f32.mrf.mxu0
        %v2181 = vadd.f32 %v2131, %v2180
        %2182 = vdwg.mxu0
        %v2183 = vmax.f32 %v2175, 0.0
        %v2184 = vmax.f32 %v2177, 0.0
        %v2185 = vmax.f32 %v2179, 0.0
        %v2186 = vmax.f32 %v2181, 0.0
        %v2187 = vpack.c.bf16 %v1769, %v1767
        %v2188 = vpack.c.bf16 %v1770, %v1768
        %s2189 = scalar_lea.vmem [#allocation6], 384
        %v2190 = vld [vmem:[%s2189] sm:$0xf]
        %v2191 = vld [vmem:[%s2189 + $0x4] sm:$0xf]
        %v2192 = vld [vmem:[%s2189 + $0x8] sm:$0xf]
        %v2193 = vld [vmem:[%s2189 + $0xc] sm:$0xf]
        %v2194 = vld [vmem:[%s2189 + $0x10] sm:$0xf]
        %v2195 = vld [vmem:[%s2189 + $0x14] sm:$0xf]
        %v2196 = vld [vmem:[%s2189 + $0x18] sm:$0xf]
        %v2197 = vld [vmem:[%s2189 + $0x1c] sm:$0xf]
        %v2198 = vld [vmem:[%s2189 + $0x20] sm:$0xf]
        %v2199 = vld [vmem:[%s2189 + $0x24] sm:$0xf]
        %v2200 = vld [vmem:[%s2189 + $0x28] sm:$0xf]
        %v2201 = vld [vmem:[%s2189 + $0x2c] sm:$0xf]
        %v2202 = vld [vmem:[%s2189 + $0x30] sm:$0xf]
        %v2203 = vld [vmem:[%s2189 + $0x34] sm:$0xf]
        %v2204 = vld [vmem:[%s2189 + $0x38] sm:$0xf]
        %v2205 = vld [vmem:[%s2189 + $0x3c] sm:$0xf]
        %v2206 = vld [vmem:[%s2189 + $0x40] sm:$0xf]
        %v2207 = vld [vmem:[%s2189 + $0x44] sm:$0xf]
        %v2208 = vld [vmem:[%s2189 + $0x48] sm:$0xf]
        %v2209 = vld [vmem:[%s2189 + $0x4c] sm:$0xf]
        %v2210 = vld [vmem:[%s2189 + $0x50] sm:$0xf]
        %v2211 = vld [vmem:[%s2189 + $0x54] sm:$0xf]
        %v2212 = vld [vmem:[%s2189 + $0x58] sm:$0xf]
        %v2213 = vld [vmem:[%s2189 + $0x5c] sm:$0xf]
        %v2214 = vld [vmem:[%s2189 + $0x60] sm:$0xf]
        %v2215 = vld [vmem:[%s2189 + $0x64] sm:$0xf]
        %v2216 = vld [vmem:[%s2189 + $0x68] sm:$0xf]
        %v2217 = vld [vmem:[%s2189 + $0x6c] sm:$0xf]
        %v2218 = vld [vmem:[%s2189 + $0x70] sm:$0xf]
        %v2219 = vld [vmem:[%s2189 + $0x74] sm:$0xf]
        %v2220 = vld [vmem:[%s2189 + $0x78] sm:$0xf]
        %v2221 = vld [vmem:[%s2189 + $0x7c] sm:$0xf]
        %v2222 = vpack.c.bf16 %v1977, %v1975
        %v2223 = vpack.c.bf16 %v1978, %v1976
        %s2224 = scalar_lea.vmem [#allocation6], 512
        %v2225 = vld [vmem:[%s2224] sm:$0xf]
        %v2226 = vld [vmem:[%s2224 + $0x4] sm:$0xf]
        %v2227 = vld [vmem:[%s2224 + $0x8] sm:$0xf]
        %v2228 = vld [vmem:[%s2224 + $0xc] sm:$0xf]
        %v2229 = vld [vmem:[%s2224 + $0x10] sm:$0xf]
        %v2230 = vld [vmem:[%s2224 + $0x14] sm:$0xf]
        %v2231 = vld [vmem:[%s2224 + $0x18] sm:$0xf]
        %v2232 = vld [vmem:[%s2224 + $0x1c] sm:$0xf]
        %v2233 = vld [vmem:[%s2224 + $0x20] sm:$0xf]
        %v2234 = vld [vmem:[%s2224 + $0x24] sm:$0xf]
        %v2235 = vld [vmem:[%s2224 + $0x28] sm:$0xf]
        %v2236 = vld [vmem:[%s2224 + $0x2c] sm:$0xf]
        %v2237 = vld [vmem:[%s2224 + $0x30] sm:$0xf]
        %v2238 = vld [vmem:[%s2224 + $0x34] sm:$0xf]
        %v2239 = vld [vmem:[%s2224 + $0x38] sm:$0xf]
        %v2240 = vld [vmem:[%s2224 + $0x3c] sm:$0xf]
        %v2241 = vld [vmem:[%s2224 + $0x40] sm:$0xf]
        %v2242 = vld [vmem:[%s2224 + $0x44] sm:$0xf]
        %v2243 = vld [vmem:[%s2224 + $0x48] sm:$0xf]
        %v2244 = vld [vmem:[%s2224 + $0x4c] sm:$0xf]
        %v2245 = vld [vmem:[%s2224 + $0x50] sm:$0xf]
        %v2246 = vld [vmem:[%s2224 + $0x54] sm:$0xf]
        %v2247 = vld [vmem:[%s2224 + $0x58] sm:$0xf]
        %v2248 = vld [vmem:[%s2224 + $0x5c] sm:$0xf]
        %v2249 = vld [vmem:[%s2224 + $0x60] sm:$0xf]
        %v2250 = vld [vmem:[%s2224 + $0x64] sm:$0xf]
        %v2251 = vld [vmem:[%s2224 + $0x68] sm:$0xf]
        %v2252 = vld [vmem:[%s2224 + $0x6c] sm:$0xf]
        %v2253 = vld [vmem:[%s2224 + $0x70] sm:$0xf]
        %v2254 = vld [vmem:[%s2224 + $0x74] sm:$0xf]
        %v2255 = vld [vmem:[%s2224 + $0x78] sm:$0xf]
        %v2256 = vld [vmem:[%s2224 + $0x7c] sm:$0xf]
        %v2289 = vunpack.c.l.b16 %v2225
        %v2290 = vunpack.c.l.b16 %v2226
        %v2291 = vunpack.c.l.b16 %v2227
        %v2292 = vunpack.c.l.b16 %v2228
        %v2293 = vunpack.c.l.b16 %v2229
        %v2294 = vunpack.c.l.b16 %v2230
        %v2295 = vunpack.c.l.b16 %v2231
        %v2296 = vunpack.c.l.b16 %v2232
        %v2297 = vunpack.c.l.b16 %v2233
        %v2298 = vunpack.c.l.b16 %v2234
        %v2299 = vunpack.c.l.b16 %v2235
        %v2300 = vunpack.c.l.b16 %v2236
        %v2301 = vunpack.c.l.b16 %v2237
        %v2302 = vunpack.c.l.b16 %v2238
        %v2303 = vunpack.c.l.b16 %v2239
        %v2304 = vunpack.c.l.b16 %v2240
        %v2305 = vunpack.c.l.b16 %v2241
        %v2306 = vunpack.c.l.b16 %v2242
        %v2307 = vunpack.c.l.b16 %v2243
        %v2308 = vunpack.c.l.b16 %v2244
        %v2309 = vunpack.c.l.b16 %v2245
        %v2310 = vunpack.c.l.b16 %v2246
        %v2311 = vunpack.c.l.b16 %v2247
        %v2312 = vunpack.c.l.b16 %v2248
        %v2313 = vunpack.c.l.b16 %v2249
        %v2314 = vunpack.c.l.b16 %v2250
        %v2315 = vunpack.c.l.b16 %v2251
        %v2316 = vunpack.c.l.b16 %v2252
        %v2317 = vunpack.c.l.b16 %v2253
        %v2318 = vunpack.c.l.b16 %v2254
        %v2319 = vunpack.c.l.b16 %v2255
        %v2320 = vunpack.c.l.b16 %v2256
        %v2321 = vpack.c.b16 %v2290, %v2289
        %v2322 = vpack.c.b16 %v2292, %v2291
        %v2323 = vpack.c.b16 %v2294, %v2293
        %v2324 = vpack.c.b16 %v2296, %v2295
        %v2325 = vpack.c.b16 %v2298, %v2297
        %v2326 = vpack.c.b16 %v2300, %v2299
        %v2327 = vpack.c.b16 %v2302, %v2301
        %v2328 = vpack.c.b16 %v2304, %v2303
        %v2329 = vpack.c.b16 %v2306, %v2305
        %v2330 = vpack.c.b16 %v2308, %v2307
        %v2331 = vpack.c.b16 %v2310, %v2309
        %v2332 = vpack.c.b16 %v2312, %v2311
        %v2333 = vpack.c.b16 %v2314, %v2313
        %v2334 = vpack.c.b16 %v2316, %v2315
        %v2335 = vpack.c.b16 %v2318, %v2317
        %v2336 = vpack.c.b16 %v2320, %v2319
        %2353 = vmatprep.subr.bf16.mxu0 0
        %2354 = vmatpush1.bf16.msra.mxu0 %v2328
        %2355 = vmatprep.subr.bf16.mxu0 0
        %2356 = vmatpush1.bf16.msra.mxu0 %v2327
        %2357 = vmatprep.subr.bf16.mxu0 0
        %2358 = vmatpush1.bf16.msra.mxu0 %v2326
        %2359 = vmatprep.subr.bf16.mxu0 0
        %2360 = vmatpush1.bf16.msra.mxu0 %v2325
        %2361 = vmatprep.subr.bf16.mxu0 0
        %2362 = vmatpush1.bf16.msra.mxu0 %v2324
        %2363 = vmatprep.subr.bf16.mxu0 0
        %2364 = vmatpush1.bf16.msra.mxu0 %v2323
        %2365 = vmatprep.subr.bf16.mxu0 0
        %2366 = vmatpush1.bf16.msra.mxu0 %v2322
        %2367 = vmatprep.subr.bf16.mxu0 0
        %2368 = vmatpush1.bf16.msra.mxu0 %v2321
        %2369 = vmatprep.subr.bf16.mxu0 0
        %2370 = vmatpush2.bf16.msra.mxu0 %v2336
        %2371 = vmatprep.subr.bf16.mxu0 0
        %2372 = vmatpush2.bf16.msra.mxu0 %v2335
        %2373 = vmatprep.subr.bf16.mxu0 0
        %2374 = vmatpush2.bf16.msra.mxu0 %v2334
        %2375 = vmatprep.subr.bf16.mxu0 0
        %2376 = vmatpush2.bf16.msra.mxu0 %v2333
        %2377 = vmatprep.subr.bf16.mxu0 0
        %2378 = vmatpush2.bf16.msra.mxu0 %v2332
        %2379 = vmatprep.subr.bf16.mxu0 0
        %2380 = vmatpush2.bf16.msra.mxu0 %v2331
        %2381 = vmatprep.subr.bf16.mxu0 0
        %2382 = vmatpush2.bf16.msra.mxu0 %v2330
        %2383 = vmatprep.subr.bf16.mxu0 0
        %2384 = vmatpush2.bf16.msra.mxu0 %v2329
        %2385 = vmatprep.mubr.bf16.mxu0 %v2223
        %2386 = vmatmul.mubr.bf16.gmra.mxu0 %v2222
        %v2387 = vpop.f32.mrf.mxu0
        %v2388 = vadd.f32 0.0, %v2387
        %v2389 = vpop.f32.mrf.mxu0
        %v2390 = vpop.f32.mrf.mxu0
        %v2391 = vadd.f32 0.0, %v2390
        %v2392 = vpop.f32.mrf.mxu0
        %2393 = vdwg.mxu0
        %v2426 = vunpack.c.l.b16 %v2190
        %v2427 = vunpack.c.l.b16 %v2191
        %v2428 = vunpack.c.l.b16 %v2192
        %v2429 = vunpack.c.l.b16 %v2193
        %v2430 = vunpack.c.l.b16 %v2194
        %v2431 = vunpack.c.l.b16 %v2195
        %v2432 = vunpack.c.l.b16 %v2196
        %v2433 = vunpack.c.l.b16 %v2197
        %v2434 = vunpack.c.l.b16 %v2198
        %v2435 = vunpack.c.l.b16 %v2199
        %v2436 = vunpack.c.l.b16 %v2200
        %v2437 = vunpack.c.l.b16 %v2201
        %v2438 = vunpack.c.l.b16 %v2202
        %v2439 = vunpack.c.l.b16 %v2203
        %v2440 = vunpack.c.l.b16 %v2204
        %v2441 = vunpack.c.l.b16 %v2205
        %v2442 = vunpack.c.l.b16 %v2206
        %v2443 = vunpack.c.l.b16 %v2207
        %v2444 = vunpack.c.l.b16 %v2208
        %v2445 = vunpack.c.l.b16 %v2209
        %v2446 = vunpack.c.l.b16 %v2210
        %v2447 = vunpack.c.l.b16 %v2211
        %v2448 = vunpack.c.l.b16 %v2212
        %v2449 = vunpack.c.l.b16 %v2213
        %v2450 = vunpack.c.l.b16 %v2214
        %v2451 = vunpack.c.l.b16 %v2215
        %v2452 = vunpack.c.l.b16 %v2216
        %v2453 = vunpack.c.l.b16 %v2217
        %v2454 = vunpack.c.l.b16 %v2218
        %v2455 = vunpack.c.l.b16 %v2219
        %v2456 = vunpack.c.l.b16 %v2220
        %v2457 = vunpack.c.l.b16 %v2221
        %v2458 = vpack.c.b16 %v2427, %v2426
        %v2459 = vpack.c.b16 %v2429, %v2428
        %v2460 = vpack.c.b16 %v2431, %v2430
        %v2461 = vpack.c.b16 %v2433, %v2432
        %v2462 = vpack.c.b16 %v2435, %v2434
        %v2463 = vpack.c.b16 %v2437, %v2436
        %v2464 = vpack.c.b16 %v2439, %v2438
        %v2465 = vpack.c.b16 %v2441, %v2440
        %v2466 = vpack.c.b16 %v2443, %v2442
        %v2467 = vpack.c.b16 %v2445, %v2444
        %v2468 = vpack.c.b16 %v2447, %v2446
        %v2469 = vpack.c.b16 %v2449, %v2448
        %v2470 = vpack.c.b16 %v2451, %v2450
        %v2471 = vpack.c.b16 %v2453, %v2452
        %v2472 = vpack.c.b16 %v2455, %v2454
        %v2473 = vpack.c.b16 %v2457, %v2456
        %2490 = vmatprep.subr.bf16.mxu0 0
        %2491 = vmatpush1.bf16.msra.mxu0 %v2465
        %2492 = vmatprep.subr.bf16.mxu0 0
        %2493 = vmatpush1.bf16.msra.mxu0 %v2464
        %2494 = vmatprep.subr.bf16.mxu0 0
        %2495 = vmatpush1.bf16.msra.mxu0 %v2463
        %2496 = vmatprep.subr.bf16.mxu0 0
        %2497 = vmatpush1.bf16.msra.mxu0 %v2462
        %2498 = vmatprep.subr.bf16.mxu0 0
        %2499 = vmatpush1.bf16.msra.mxu0 %v2461
        %2500 = vmatprep.subr.bf16.mxu0 0
        %2501 = vmatpush1.bf16.msra.mxu0 %v2460
        %2502 = vmatprep.subr.bf16.mxu0 0
        %2503 = vmatpush1.bf16.msra.mxu0 %v2459
        %2504 = vmatprep.subr.bf16.mxu0 0
        %2505 = vmatpush1.bf16.msra.mxu0 %v2458
        %2506 = vmatprep.subr.bf16.mxu0 0
        %2507 = vmatpush2.bf16.msra.mxu0 %v2473
        %2508 = vmatprep.subr.bf16.mxu0 0
        %2509 = vmatpush2.bf16.msra.mxu0 %v2472
        %2510 = vmatprep.subr.bf16.mxu0 0
        %2511 = vmatpush2.bf16.msra.mxu0 %v2471
        %2512 = vmatprep.subr.bf16.mxu0 0
        %2513 = vmatpush2.bf16.msra.mxu0 %v2470
        %2514 = vmatprep.subr.bf16.mxu0 0
        %2515 = vmatpush2.bf16.msra.mxu0 %v2469
        %2516 = vmatprep.subr.bf16.mxu0 0
        %2517 = vmatpush2.bf16.msra.mxu0 %v2468
        %2518 = vmatprep.subr.bf16.mxu0 0
        %2519 = vmatpush2.bf16.msra.mxu0 %v2467
        %2520 = vmatprep.subr.bf16.mxu0 0
        %2521 = vmatpush2.bf16.msra.mxu0 %v2466
        %2522 = vmatprep.mubr.bf16.mxu0 %v2188
        %2523 = vmatmul.mubr.bf16.gmra.mxu0 %v2187
        %v2524 = vpop.f32.mrf.mxu0
        %v2525 = vadd.f32 %v2388, %v2524
        %v2526 = vpop.f32.mrf.mxu0
        %v2527 = vpop.f32.mrf.mxu0
        %v2528 = vadd.f32 %v2391, %v2527
        %v2529 = vpop.f32.mrf.mxu0
        %2530 = vdwg.mxu0
        %v2531 = vpack.c.bf16 %v2185, %v2183
        %v2532 = vpack.c.bf16 %v2186, %v2184
        %s2533 = scalar_lea.vmem [#allocation6], 640
        %v2534 = vld [vmem:[%s2533] sm:$0xf]
        %v2535 = vld [vmem:[%s2533 + $0x4] sm:$0xf]
        %v2536 = vld [vmem:[%s2533 + $0x8] sm:$0xf]
        %v2537 = vld [vmem:[%s2533 + $0xc] sm:$0xf]
        %v2538 = vld [vmem:[%s2533 + $0x10] sm:$0xf]
        %v2539 = vld [vmem:[%s2533 + $0x14] sm:$0xf]
        %v2540 = vld [vmem:[%s2533 + $0x18] sm:$0xf]
        %v2541 = vld [vmem:[%s2533 + $0x1c] sm:$0xf]
        %v2542 = vld [vmem:[%s2533 + $0x20] sm:$0xf]
        %v2543 = vld [vmem:[%s2533 + $0x24] sm:$0xf]
        %v2544 = vld [vmem:[%s2533 + $0x28] sm:$0xf]
        %v2545 = vld [vmem:[%s2533 + $0x2c] sm:$0xf]
        %v2546 = vld [vmem:[%s2533 + $0x30] sm:$0xf]
        %v2547 = vld [vmem:[%s2533 + $0x34] sm:$0xf]
        %v2548 = vld [vmem:[%s2533 + $0x38] sm:$0xf]
        %v2549 = vld [vmem:[%s2533 + $0x3c] sm:$0xf]
        %v2550 = vld [vmem:[%s2533 + $0x40] sm:$0xf]
        %v2551 = vld [vmem:[%s2533 + $0x44] sm:$0xf]
        %v2552 = vld [vmem:[%s2533 + $0x48] sm:$0xf]
        %v2553 = vld [vmem:[%s2533 + $0x4c] sm:$0xf]
        %v2554 = vld [vmem:[%s2533 + $0x50] sm:$0xf]
        %v2555 = vld [vmem:[%s2533 + $0x54] sm:$0xf]
        %v2556 = vld [vmem:[%s2533 + $0x58] sm:$0xf]
        %v2557 = vld [vmem:[%s2533 + $0x5c] sm:$0xf]
        %v2558 = vld [vmem:[%s2533 + $0x60] sm:$0xf]
        %v2559 = vld [vmem:[%s2533 + $0x64] sm:$0xf]
        %v2560 = vld [vmem:[%s2533 + $0x68] sm:$0xf]
        %v2561 = vld [vmem:[%s2533 + $0x6c] sm:$0xf]
        %v2562 = vld [vmem:[%s2533 + $0x70] sm:$0xf]
        %v2563 = vld [vmem:[%s2533 + $0x74] sm:$0xf]
        %v2564 = vld [vmem:[%s2533 + $0x78] sm:$0xf]
        %v2565 = vld [vmem:[%s2533 + $0x7c] sm:$0xf]
        %v2598 = vunpack.c.l.b16 %v2534
        %v2599 = vunpack.c.l.b16 %v2535
        %v2600 = vunpack.c.l.b16 %v2536
        %v2601 = vunpack.c.l.b16 %v2537
        %v2602 = vunpack.c.l.b16 %v2538
        %v2603 = vunpack.c.l.b16 %v2539
        %v2604 = vunpack.c.l.b16 %v2540
        %v2605 = vunpack.c.l.b16 %v2541
        %v2606 = vunpack.c.l.b16 %v2542
        %v2607 = vunpack.c.l.b16 %v2543
        %v2608 = vunpack.c.l.b16 %v2544
        %v2609 = vunpack.c.l.b16 %v2545
        %v2610 = vunpack.c.l.b16 %v2546
        %v2611 = vunpack.c.l.b16 %v2547
        %v2612 = vunpack.c.l.b16 %v2548
        %v2613 = vunpack.c.l.b16 %v2549
        %v2614 = vunpack.c.l.b16 %v2550
        %v2615 = vunpack.c.l.b16 %v2551
        %v2616 = vunpack.c.l.b16 %v2552
        %v2617 = vunpack.c.l.b16 %v2553
        %v2618 = vunpack.c.l.b16 %v2554
        %v2619 = vunpack.c.l.b16 %v2555
        %v2620 = vunpack.c.l.b16 %v2556
        %v2621 = vunpack.c.l.b16 %v2557
        %v2622 = vunpack.c.l.b16 %v2558
        %v2623 = vunpack.c.l.b16 %v2559
        %v2624 = vunpack.c.l.b16 %v2560
        %v2625 = vunpack.c.l.b16 %v2561
        %v2626 = vunpack.c.l.b16 %v2562
        %v2627 = vunpack.c.l.b16 %v2563
        %v2628 = vunpack.c.l.b16 %v2564
        %v2629 = vunpack.c.l.b16 %v2565
        %v2630 = vpack.c.b16 %v2599, %v2598
        %v2631 = vpack.c.b16 %v2601, %v2600
        %v2632 = vpack.c.b16 %v2603, %v2602
        %v2633 = vpack.c.b16 %v2605, %v2604
        %v2634 = vpack.c.b16 %v2607, %v2606
        %v2635 = vpack.c.b16 %v2609, %v2608
        %v2636 = vpack.c.b16 %v2611, %v2610
        %v2637 = vpack.c.b16 %v2613, %v2612
        %v2638 = vpack.c.b16 %v2615, %v2614
        %v2639 = vpack.c.b16 %v2617, %v2616
        %v2640 = vpack.c.b16 %v2619, %v2618
        %v2641 = vpack.c.b16 %v2621, %v2620
        %v2642 = vpack.c.b16 %v2623, %v2622
        %v2643 = vpack.c.b16 %v2625, %v2624
        %v2644 = vpack.c.b16 %v2627, %v2626
        %v2645 = vpack.c.b16 %v2629, %v2628
        %2662 = vmatprep.subr.bf16.mxu0 0
        %2663 = vmatpush1.bf16.msra.mxu0 %v2637
        %2664 = vmatprep.subr.bf16.mxu0 0
        %2665 = vmatpush1.bf16.msra.mxu0 %v2636
        %2666 = vmatprep.subr.bf16.mxu0 0
        %2667 = vmatpush1.bf16.msra.mxu0 %v2635
        %2668 = vmatprep.subr.bf16.mxu0 0
        %2669 = vmatpush1.bf16.msra.mxu0 %v2634
        %2670 = vmatprep.subr.bf16.mxu0 0
        %2671 = vmatpush1.bf16.msra.mxu0 %v2633
        %2672 = vmatprep.subr.bf16.mxu0 0
        %2673 = vmatpush1.bf16.msra.mxu0 %v2632
        %2674 = vmatprep.subr.bf16.mxu0 0
        %2675 = vmatpush1.bf16.msra.mxu0 %v2631
        %2676 = vmatprep.subr.bf16.mxu0 0
        %2677 = vmatpush1.bf16.msra.mxu0 %v2630
        %2678 = vmatprep.subr.bf16.mxu0 0
        %2679 = vmatpush2.bf16.msra.mxu0 %v2645
        %2680 = vmatprep.subr.bf16.mxu0 0
        %2681 = vmatpush2.bf16.msra.mxu0 %v2644
        %2682 = vmatprep.subr.bf16.mxu0 0
        %2683 = vmatpush2.bf16.msra.mxu0 %v2643
        %2684 = vmatprep.subr.bf16.mxu0 0
        %2685 = vmatpush2.bf16.msra.mxu0 %v2642
        %2686 = vmatprep.subr.bf16.mxu0 0
        %2687 = vmatpush2.bf16.msra.mxu0 %v2641
        %2688 = vmatprep.subr.bf16.mxu0 0
        %2689 = vmatpush2.bf16.msra.mxu0 %v2640
        %2690 = vmatprep.subr.bf16.mxu0 0
        %2691 = vmatpush2.bf16.msra.mxu0 %v2639
        %2692 = vmatprep.subr.bf16.mxu0 0
        %2693 = vmatpush2.bf16.msra.mxu0 %v2638
        %2694 = vmatprep.mubr.bf16.mxu0 %v2532
        %2695 = vmatmul.mubr.bf16.gmra.mxu0 %v2531
        %v2696 = vpop.f32.mrf.mxu0
        %v2697 = vadd.f32 0.0, %v2696
        %v2698 = vpop.f32.mrf.mxu0
        %v2699 = vpop.f32.mrf.mxu0
        %v2700 = vadd.f32 0.0, %v2699
        %v2701 = vpop.f32.mrf.mxu0
        %2702 = vdwg.mxu0
        %v2703 = vadd.f32 %v2525, %v2697
        %v2704 = vadd.f32 %v2528, %v2700
        %s2705 = scalar_lea.vmem %s6, 1
        %v2706 = vld [vmem:[%s2705] sm:$0x1]
        %v2708 = vlaneseq
        %v2709 = vshrl.u32 %v2708, 7
        %v2710 = vsub.s32 0, %v2709
        %v2711 = vrot.slane %v2706, %v2710
        %v2713 = vadd.f32 %v2703, %v2711
        %v2714 = vadd.f32 %v2704, %v2711
        %v2715 = vadd.f32 %v2713, %v1611
        %v2716 = vadd.f32 %v2714, %v1612
        %v2717 = vmax.f32 %v2715, 0.0
        %v2718 = vmax.f32 %v2716, 0.0
        %2719 = vst [vmem:[#allocation2] sm:$0xff] %v2717
        %2720 = vst [vmem:[#allocation2 + $0x8] sm:$0x1] %v2718
        %v2721 = vld [vmem:[#allocation2] sm:$0xff]
        %v2722 = vld [vmem:[#allocation2 + $0x8] sm:$0x1]
        %v2723 = vpack.c.bf16 %v2722, %v2721
        %s2724 = scalar_lea.vmem [#allocation3], 768
        %v2725 = vld [vmem:[%s2724] sm:$0xff]
        %v2726 = vld [vmem:[%s2724 + $0x8] sm:$0xff]
        %v2727 = vld [vmem:[%s2724 + $0x10] sm:$0xff]
        %v2728 = vld [vmem:[%s2724 + $0x18] sm:$0xff]
        %v2729 = vld [vmem:[%s2724 + $0x20] sm:$0xff]
        %v2730 = vld [vmem:[%s2724 + $0x28] sm:$0xff]
        %v2731 = vld [vmem:[%s2724 + $0x30] sm:$0xff]
        %v2732 = vld [vmem:[%s2724 + $0x38] sm:$0xff]
        %v2733 = vld [vmem:[%s2724 + $0x40] sm:$0xff]
        %v2734 = vld [vmem:[%s2724 + $0x48] sm:$0xff]
        %v2735 = vld [vmem:[%s2724 + $0x50] sm:$0xff]
        %v2736 = vld [vmem:[%s2724 + $0x58] sm:$0xff]
        %v2737 = vld [vmem:[%s2724 + $0x60] sm:$0xff]
        %v2738 = vld [vmem:[%s2724 + $0x68] sm:$0xff]
        %v2739 = vld [vmem:[%s2724 + $0x70] sm:$0xff]
        %v2740 = vld [vmem:[%s2724 + $0x78] sm:$0xff]
        %s2741 = scalar_lea.vmem %s5, 12
        %v2742 = vld [vmem:[%s2741] sm:$0x3]
        %v2744 = vlaneseq
        %v2745 = vshrl.u32 %v2744, 7
        %v2746 = vsub.s32 0, %v2745
        %v2747 = vrot.slane %v2742, %v2746
        %v2748 = vlaneseq
        %v2749 = vshrl.u32 %v2748, 7
        %v2750 = vsub.s32 1, %v2749
        %v2751 = vrot.slane %v2742, %v2750
        %v2770 = vunpack.c.l.b16 %v2725
        %v2771 = vunpack.c.h.b16 %v2725
        %v2772 = vunpack.c.l.b16 %v2726
        %v2773 = vunpack.c.h.b16 %v2726
        %v2774 = vunpack.c.l.b16 %v2727
        %v2775 = vunpack.c.h.b16 %v2727
        %v2776 = vunpack.c.l.b16 %v2728
        %v2777 = vunpack.c.h.b16 %v2728
        %v2778 = vunpack.c.l.b16 %v2729
        %v2779 = vunpack.c.h.b16 %v2729
        %v2780 = vunpack.c.l.b16 %v2730
        %v2781 = vunpack.c.h.b16 %v2730
        %v2782 = vunpack.c.l.b16 %v2731
        %v2783 = vunpack.c.h.b16 %v2731
        %v2784 = vunpack.c.l.b16 %v2732
        %v2785 = vunpack.c.h.b16 %v2732
        %v2786 = vunpack.c.l.b16 %v2733
        %v2787 = vunpack.c.h.b16 %v2733
        %v2788 = vunpack.c.l.b16 %v2734
        %v2789 = vunpack.c.h.b16 %v2734
        %v2790 = vunpack.c.l.b16 %v2735
        %v2791 = vunpack.c.h.b16 %v2735
        %v2792 = vunpack.c.l.b16 %v2736
        %v2793 = vunpack.c.h.b16 %v2736
        %v2794 = vunpack.c.l.b16 %v2737
        %v2795 = vunpack.c.h.b16 %v2737
        %v2796 = vunpack.c.l.b16 %v2738
        %v2797 = vunpack.c.h.b16 %v2738
        %v2798 = vunpack.c.l.b16 %v2739
        %v2799 = vunpack.c.h.b16 %v2739
        %v2800 = vunpack.c.l.b16 %v2740
        %v2801 = vunpack.c.h.b16 %v2740
        %v2802 = vpack.c.b16 %v2772, %v2770
        %v2803 = vpack.c.b16 %v2773, %v2771
        %v2804 = vpack.c.b16 %v2776, %v2774
        %v2805 = vpack.c.b16 %v2777, %v2775
        %v2806 = vpack.c.b16 %v2780, %v2778
        %v2807 = vpack.c.b16 %v2781, %v2779
        %v2808 = vpack.c.b16 %v2784, %v2782
        %v2809 = vpack.c.b16 %v2785, %v2783
        %v2810 = vpack.c.b16 %v2788, %v2786
        %v2811 = vpack.c.b16 %v2789, %v2787
        %v2812 = vpack.c.b16 %v2792, %v2790
        %v2813 = vpack.c.b16 %v2793, %v2791
        %v2814 = vpack.c.b16 %v2796, %v2794
        %v2815 = vpack.c.b16 %v2797, %v2795
        %v2816 = vpack.c.b16 %v2800, %v2798
        %v2817 = vpack.c.b16 %v2801, %v2799
        %2834 = vmatprep.subr.bf16.mxu0 %v2817
        %2835 = vmatpush1.bf16.msra.mxu0 %v2816
        %2836 = vmatprep.subr.bf16.mxu0 %v2815
        %2837 = vmatpush1.bf16.msra.mxu0 %v2814
        %2838 = vmatprep.subr.bf16.mxu0 %v2813
        %2839 = vmatpush1.bf16.msra.mxu0 %v2812
        %2840 = vmatprep.subr.bf16.mxu0 %v2811
        %2841 = vmatpush1.bf16.msra.mxu0 %v2810
        %2842 = vmatprep.subr.bf16.mxu0 %v2809
        %2843 = vmatpush1.bf16.msra.mxu0 %v2808
        %2844 = vmatprep.subr.bf16.mxu0 %v2807
        %2845 = vmatpush1.bf16.msra.mxu0 %v2806
        %2846 = vmatprep.subr.bf16.mxu0 %v2805
        %2847 = vmatpush1.bf16.msra.mxu0 %v2804
        %2848 = vmatprep.subr.bf16.mxu0 %v2803
        %2849 = vmatpush1.bf16.msra.mxu0 %v2802
        %2850 = vmatprep.subr.bf16.mxu0 0
        %2851 = vmatpush2.bf16.msra.mxu0 0
        %2852 = vmatprep.subr.bf16.mxu0 0
        %2853 = vmatpush2.bf16.msra.mxu0 0
        %2854 = vmatprep.subr.bf16.mxu0 0
        %2855 = vmatpush2.bf16.msra.mxu0 0
        %2856 = vmatprep.subr.bf16.mxu0 0
        %2857 = vmatpush2.bf16.msra.mxu0 0
        %2858 = vmatprep.subr.bf16.mxu0 0
        %2859 = vmatpush2.bf16.msra.mxu0 0
        %2860 = vmatprep.subr.bf16.mxu0 0
        %2861 = vmatpush2.bf16.msra.mxu0 0
        %2862 = vmatprep.subr.bf16.mxu0 0
        %2863 = vmatpush2.bf16.msra.mxu0 0
        %2864 = vmatprep.subr.bf16.mxu0 0
        %2865 = vmatpush2.bf16.msra.mxu0 0
        %2866 = vmatprep.mubr.bf16.mxu0 0
        %2867 = vmatmul.mubr.bf16.gmra.mxu0 %v2723
        %v2868 = vpop.f32.mrf.mxu0
        %v2869 = vadd.f32 %v2747, %v2868
        %v2870 = vpop.f32.mrf.mxu0
        %v2871 = vadd.f32 %v2751, %v2870
        %v2872 = vpop.f32.mrf.mxu0
        %v2873 = vadd.f32 %v2747, %v2872
        %v2874 = vpop.f32.mrf.mxu0
        %v2875 = vadd.f32 %v2751, %v2874
        %2876 = vdwg.mxu0
        %v2877 = vmax.f32 %v2869, 0.0
        %v2878 = vmax.f32 %v2871, 0.0
        %v2879 = vmax.f32 %v2873, 0.0
        %v2880 = vmax.f32 %v2875, 0.0
        %s2881 = scalar_lea.vmem [#allocation3], 896
        %v2882 = vld [vmem:[%s2881] sm:$0xff]
        %v2883 = vld [vmem:[%s2881 + $0x8] sm:$0xff]
        %v2884 = vld [vmem:[%s2881 + $0x10] sm:$0xff]
        %v2885 = vld [vmem:[%s2881 + $0x18] sm:$0xff]
        %v2886 = vld [vmem:[%s2881 + $0x20] sm:$0xff]
        %v2887 = vld [vmem:[%s2881 + $0x28] sm:$0xff]
        %v2888 = vld [vmem:[%s2881 + $0x30] sm:$0xff]
        %v2889 = vld [vmem:[%s2881 + $0x38] sm:$0xff]
        %v2890 = vld [vmem:[%s2881 + $0x40] sm:$0xff]
        %v2891 = vld [vmem:[%s2881 + $0x48] sm:$0xff]
        %v2892 = vld [vmem:[%s2881 + $0x50] sm:$0xff]
        %v2893 = vld [vmem:[%s2881 + $0x58] sm:$0xff]
        %v2894 = vld [vmem:[%s2881 + $0x60] sm:$0xff]
        %v2895 = vld [vmem:[%s2881 + $0x68] sm:$0xff]
        %v2896 = vld [vmem:[%s2881 + $0x70] sm:$0xff]
        %v2897 = vld [vmem:[%s2881 + $0x78] sm:$0xff]
        %v2914 = vunpack.c.l.b16 %v2882
        %v2915 = vunpack.c.h.b16 %v2882
        %v2916 = vunpack.c.l.b16 %v2883
        %v2917 = vunpack.c.h.b16 %v2883
        %v2918 = vunpack.c.l.b16 %v2884
        %v2919 = vunpack.c.h.b16 %v2884
        %v2920 = vunpack.c.l.b16 %v2885
        %v2921 = vunpack.c.h.b16 %v2885
        %v2922 = vunpack.c.l.b16 %v2886
        %v2923 = vunpack.c.h.b16 %v2886
        %v2924 = vunpack.c.l.b16 %v2887
        %v2925 = vunpack.c.h.b16 %v2887
        %v2926 = vunpack.c.l.b16 %v2888
        %v2927 = vunpack.c.h.b16 %v2888
        %v2928 = vunpack.c.l.b16 %v2889
        %v2929 = vunpack.c.h.b16 %v2889
        %v2930 = vunpack.c.l.b16 %v2890
        %v2931 = vunpack.c.h.b16 %v2890
        %v2932 = vunpack.c.l.b16 %v2891
        %v2933 = vunpack.c.h.b16 %v2891
        %v2934 = vunpack.c.l.b16 %v2892
        %v2935 = vunpack.c.h.b16 %v2892
        %v2936 = vunpack.c.l.b16 %v2893
        %v2937 = vunpack.c.h.b16 %v2893
        %v2938 = vunpack.c.l.b16 %v2894
        %v2939 = vunpack.c.h.b16 %v2894
        %v2940 = vunpack.c.l.b16 %v2895
        %v2941 = vunpack.c.h.b16 %v2895
        %v2942 = vunpack.c.l.b16 %v2896
        %v2943 = vunpack.c.h.b16 %v2896
        %v2944 = vunpack.c.l.b16 %v2897
        %v2945 = vunpack.c.h.b16 %v2897
        %v2946 = vpack.c.b16 %v2916, %v2914
        %v2947 = vpack.c.b16 %v2917, %v2915
        %v2948 = vpack.c.b16 %v2920, %v2918
        %v2949 = vpack.c.b16 %v2921, %v2919
        %v2950 = vpack.c.b16 %v2924, %v2922
        %v2951 = vpack.c.b16 %v2925, %v2923
        %v2952 = vpack.c.b16 %v2928, %v2926
        %v2953 = vpack.c.b16 %v2929, %v2927
        %v2954 = vpack.c.b16 %v2932, %v2930
        %v2955 = vpack.c.b16 %v2933, %v2931
        %v2956 = vpack.c.b16 %v2936, %v2934
        %v2957 = vpack.c.b16 %v2937, %v2935
        %v2958 = vpack.c.b16 %v2940, %v2938
        %v2959 = vpack.c.b16 %v2941, %v2939
        %v2960 = vpack.c.b16 %v2944, %v2942
        %v2961 = vpack.c.b16 %v2945, %v2943
        %2978 = vmatprep.subr.bf16.mxu0 %v2961
        %2979 = vmatpush1.bf16.msra.mxu0 %v2960
        %2980 = vmatprep.subr.bf16.mxu0 %v2959
        %2981 = vmatpush1.bf16.msra.mxu0 %v2958
        %2982 = vmatprep.subr.bf16.mxu0 %v2957
        %2983 = vmatpush1.bf16.msra.mxu0 %v2956
        %2984 = vmatprep.subr.bf16.mxu0 %v2955
        %2985 = vmatpush1.bf16.msra.mxu0 %v2954
        %2986 = vmatprep.subr.bf16.mxu0 %v2953
        %2987 = vmatpush1.bf16.msra.mxu0 %v2952
        %2988 = vmatprep.subr.bf16.mxu0 %v2951
        %2989 = vmatpush1.bf16.msra.mxu0 %v2950
        %2990 = vmatprep.subr.bf16.mxu0 %v2949
        %2991 = vmatpush1.bf16.msra.mxu0 %v2948
        %2992 = vmatprep.subr.bf16.mxu0 %v2947
        %2993 = vmatpush1.bf16.msra.mxu0 %v2946
        %2994 = vmatprep.subr.bf16.mxu0 0
        %2995 = vmatpush2.bf16.msra.mxu0 0
        %2996 = vmatprep.subr.bf16.mxu0 0
        %2997 = vmatpush2.bf16.msra.mxu0 0
        %2998 = vmatprep.subr.bf16.mxu0 0
        %2999 = vmatpush2.bf16.msra.mxu0 0
        %3000 = vmatprep.subr.bf16.mxu0 0
        %3001 = vmatpush2.bf16.msra.mxu0 0
        %3002 = vmatprep.subr.bf16.mxu0 0
        %3003 = vmatpush2.bf16.msra.mxu0 0
        %3004 = vmatprep.subr.bf16.mxu0 0
        %3005 = vmatpush2.bf16.msra.mxu0 0
        %3006 = vmatprep.subr.bf16.mxu0 0
        %3007 = vmatpush2.bf16.msra.mxu0 0
        %3008 = vmatprep.subr.bf16.mxu0 0
        %3009 = vmatpush2.bf16.msra.mxu0 0
        %3010 = vmatprep.mubr.bf16.mxu0 0
        %3011 = vmatmul.mubr.bf16.gmra.mxu0 %v2723
        %v3012 = vpop.f32.mrf.mxu0
        %v3013 = vadd.f32 0.0, %v3012
        %v3014 = vpop.f32.mrf.mxu0
        %v3015 = vadd.f32 0.0, %v3014
        %v3016 = vpop.f32.mrf.mxu0
        %v3017 = vadd.f32 0.0, %v3016
        %v3018 = vpop.f32.mrf.mxu0
        %v3019 = vadd.f32 0.0, %v3018
        %3020 = vdwg.mxu0
        %v3021 = vpack.c.bf16 %v3017, %v3013
        %v3022 = vpack.c.bf16 %v3019, %v3015
        %s3023 = scalar_lea.vmem %s5, 14
        %v3024 = vld [vmem:[%s3023] sm:$0x3]
        %v3026 = vlaneseq
        %v3027 = vshrl.u32 %v3026, 7
        %v3028 = vsub.s32 0, %v3027
        %v3029 = vrot.slane %v3024, %v3028
        %v3030 = vlaneseq
        %v3031 = vshrl.u32 %v3030, 7
        %v3032 = vsub.s32 1, %v3031
        %v3033 = vrot.slane %v3024, %v3032
        %v3037 = vand.u32 %v3021, %v809
        %v3040 = vand.u32 %v3022, %v809
        %3042 = vmatprep.subr.bf16.mxu0 0
        %3043 = vmatpush1.bf16.msra.mxu0 0
        %3044 = vmatprep.subr.bf16.mxu0 0
        %3045 = vmatpush1.bf16.msra.mxu0 0
        %3046 = vmatprep.subr.bf16.mxu0 0
        %3047 = vmatpush1.bf16.msra.mxu0 0
        %3048 = vmatprep.subr.bf16.mxu0 0
        %3049 = vmatpush1.bf16.msra.mxu0 0
        %3050 = vmatprep.subr.bf16.mxu0 0
        %3051 = vmatpush1.bf16.msra.mxu0 0
        %3052 = vmatprep.subr.bf16.mxu0 0
        %3053 = vmatpush1.bf16.msra.mxu0 0
        %3054 = vmatprep.subr.bf16.mxu0 0
        %3055 = vmatpush1.bf16.msra.mxu0 0
        %3056 = vmatprep.subr.bf16.mxu0 %v3040
        %3057 = vmatpush1.bf16.msra.mxu0 %v3037
        %3058 = vmatprep.subr.bf16.mxu0 0
        %3059 = vmatpush2.bf16.msra.mxu0 0
        %3060 = vmatprep.subr.bf16.mxu0 0
        %3061 = vmatpush2.bf16.msra.mxu0 0
        %3062 = vmatprep.subr.bf16.mxu0 0
        %3063 = vmatpush2.bf16.msra.mxu0 0
        %3064 = vmatprep.subr.bf16.mxu0 0
        %3065 = vmatpush2.bf16.msra.mxu0 0
        %3066 = vmatprep.subr.bf16.mxu0 0
        %3067 = vmatpush2.bf16.msra.mxu0 0
        %3068 = vmatprep.subr.bf16.mxu0 0
        %3069 = vmatpush2.bf16.msra.mxu0 0
        %3070 = vmatprep.subr.bf16.mxu0 0
        %3071 = vmatpush2.bf16.msra.mxu0 0
        %3072 = vmatprep.subr.bf16.mxu0 0
        %3073 = vmatpush2.bf16.msra.mxu0 0
        %3074 = vmatprep.mubr.bf16.mxu0 0
        %3075 = vmatmul.mubr.bf16.gmra.mxu0 %v804
        %v3076 = vpop.f32.mrf.mxu0
        %v3077 = vadd.f32 %v3029, %v3076
        %v3078 = vpop.f32.mrf.mxu0
        %v3079 = vadd.f32 %v3033, %v3078
        %v3080 = vpop.f32.mrf.mxu0
        %v3081 = vadd.f32 %v3029, %v3080
        %v3082 = vpop.f32.mrf.mxu0
        %v3083 = vadd.f32 %v3033, %v3082
        %3084 = vdwg.mxu0
        %v3085 = vmax.f32 %v3077, 0.0
        %v3086 = vmax.f32 %v3079, 0.0
        %v3087 = vmax.f32 %v3081, 0.0
        %v3088 = vmax.f32 %v3083, 0.0
        %s3089 = scalar_lea.vmem [#allocation3], 1024
        %v3090 = vld [vmem:[%s3089] sm:$0xff]
        %v3091 = vld [vmem:[%s3089 + $0x8] sm:$0xff]
        %v3092 = vld [vmem:[%s3089 + $0x10] sm:$0xff]
        %v3093 = vld [vmem:[%s3089 + $0x18] sm:$0xff]
        %v3094 = vld [vmem:[%s3089 + $0x20] sm:$0xff]
        %v3095 = vld [vmem:[%s3089 + $0x28] sm:$0xff]
        %v3096 = vld [vmem:[%s3089 + $0x30] sm:$0xff]
        %v3097 = vld [vmem:[%s3089 + $0x38] sm:$0xff]
        %v3098 = vld [vmem:[%s3089 + $0x40] sm:$0xff]
        %v3099 = vld [vmem:[%s3089 + $0x48] sm:$0xff]
        %v3100 = vld [vmem:[%s3089 + $0x50] sm:$0xff]
        %v3101 = vld [vmem:[%s3089 + $0x58] sm:$0xff]
        %v3102 = vld [vmem:[%s3089 + $0x60] sm:$0xff]
        %v3103 = vld [vmem:[%s3089 + $0x68] sm:$0xff]
        %v3104 = vld [vmem:[%s3089 + $0x70] sm:$0xff]
        %v3105 = vld [vmem:[%s3089 + $0x78] sm:$0xff]
        %v3122 = vunpack.c.l.b16 %v3090
        %v3123 = vunpack.c.h.b16 %v3090
        %v3124 = vunpack.c.l.b16 %v3091
        %v3125 = vunpack.c.h.b16 %v3091
        %v3126 = vunpack.c.l.b16 %v3092
        %v3127 = vunpack.c.h.b16 %v3092
        %v3128 = vunpack.c.l.b16 %v3093
        %v3129 = vunpack.c.h.b16 %v3093
        %v3130 = vunpack.c.l.b16 %v3094
        %v3131 = vunpack.c.h.b16 %v3094
        %v3132 = vunpack.c.l.b16 %v3095
        %v3133 = vunpack.c.h.b16 %v3095
        %v3134 = vunpack.c.l.b16 %v3096
        %v3135 = vunpack.c.h.b16 %v3096
        %v3136 = vunpack.c.l.b16 %v3097
        %v3137 = vunpack.c.h.b16 %v3097
        %v3138 = vunpack.c.l.b16 %v3098
        %v3139 = vunpack.c.h.b16 %v3098
        %v3140 = vunpack.c.l.b16 %v3099
        %v3141 = vunpack.c.h.b16 %v3099
        %v3142 = vunpack.c.l.b16 %v3100
        %v3143 = vunpack.c.h.b16 %v3100
        %v3144 = vunpack.c.l.b16 %v3101
        %v3145 = vunpack.c.h.b16 %v3101
        %v3146 = vunpack.c.l.b16 %v3102
        %v3147 = vunpack.c.h.b16 %v3102
        %v3148 = vunpack.c.l.b16 %v3103
        %v3149 = vunpack.c.h.b16 %v3103
        %v3150 = vunpack.c.l.b16 %v3104
        %v3151 = vunpack.c.h.b16 %v3104
        %v3152 = vunpack.c.l.b16 %v3105
        %v3153 = vunpack.c.h.b16 %v3105
        %v3154 = vpack.c.b16 %v3124, %v3122
        %v3155 = vpack.c.b16 %v3125, %v3123
        %v3156 = vpack.c.b16 %v3128, %v3126
        %v3157 = vpack.c.b16 %v3129, %v3127
        %v3158 = vpack.c.b16 %v3132, %v3130
        %v3159 = vpack.c.b16 %v3133, %v3131
        %v3160 = vpack.c.b16 %v3136, %v3134
        %v3161 = vpack.c.b16 %v3137, %v3135
        %v3162 = vpack.c.b16 %v3140, %v3138
        %v3163 = vpack.c.b16 %v3141, %v3139
        %v3164 = vpack.c.b16 %v3144, %v3142
        %v3165 = vpack.c.b16 %v3145, %v3143
        %v3166 = vpack.c.b16 %v3148, %v3146
        %v3167 = vpack.c.b16 %v3149, %v3147
        %v3168 = vpack.c.b16 %v3152, %v3150
        %v3169 = vpack.c.b16 %v3153, %v3151
        %3186 = vmatprep.subr.bf16.mxu0 %v3169
        %3187 = vmatpush1.bf16.msra.mxu0 %v3168
        %3188 = vmatprep.subr.bf16.mxu0 %v3167
        %3189 = vmatpush1.bf16.msra.mxu0 %v3166
        %3190 = vmatprep.subr.bf16.mxu0 %v3165
        %3191 = vmatpush1.bf16.msra.mxu0 %v3164
        %3192 = vmatprep.subr.bf16.mxu0 %v3163
        %3193 = vmatpush1.bf16.msra.mxu0 %v3162
        %3194 = vmatprep.subr.bf16.mxu0 %v3161
        %3195 = vmatpush1.bf16.msra.mxu0 %v3160
        %3196 = vmatprep.subr.bf16.mxu0 %v3159
        %3197 = vmatpush1.bf16.msra.mxu0 %v3158
        %3198 = vmatprep.subr.bf16.mxu0 %v3157
        %3199 = vmatpush1.bf16.msra.mxu0 %v3156
        %3200 = vmatprep.subr.bf16.mxu0 %v3155
        %3201 = vmatpush1.bf16.msra.mxu0 %v3154
        %3202 = vmatprep.subr.bf16.mxu0 0
        %3203 = vmatpush2.bf16.msra.mxu0 0
        %3204 = vmatprep.subr.bf16.mxu0 0
        %3205 = vmatpush2.bf16.msra.mxu0 0
        %3206 = vmatprep.subr.bf16.mxu0 0
        %3207 = vmatpush2.bf16.msra.mxu0 0
        %3208 = vmatprep.subr.bf16.mxu0 0
        %3209 = vmatpush2.bf16.msra.mxu0 0
        %3210 = vmatprep.subr.bf16.mxu0 0
        %3211 = vmatpush2.bf16.msra.mxu0 0
        %3212 = vmatprep.subr.bf16.mxu0 0
        %3213 = vmatpush2.bf16.msra.mxu0 0
        %3214 = vmatprep.subr.bf16.mxu0 0
        %3215 = vmatpush2.bf16.msra.mxu0 0
        %3216 = vmatprep.subr.bf16.mxu0 0
        %3217 = vmatpush2.bf16.msra.mxu0 0
        %3218 = vmatprep.mubr.bf16.mxu0 0
        %3219 = vmatmul.mubr.bf16.gmra.mxu0 %v2723
        %v3220 = vpop.f32.mrf.mxu0
        %v3221 = vadd.f32 0.0, %v3220
        %v3222 = vpop.f32.mrf.mxu0
        %v3223 = vadd.f32 0.0, %v3222
        %v3224 = vpop.f32.mrf.mxu0
        %v3225 = vadd.f32 0.0, %v3224
        %v3226 = vpop.f32.mrf.mxu0
        %v3227 = vadd.f32 0.0, %v3226
        %3228 = vdwg.mxu0
        %v3229 = vpack.c.bf16 %v3225, %v3221
        %v3230 = vpack.c.bf16 %v3227, %v3223
        %s3231 = scalar_lea.vmem %s5, 16
        %v3232 = vld [vmem:[%s3231] sm:$0x3]
        %v3234 = vlaneseq
        %v3235 = vshrl.u32 %v3234, 7
        %v3236 = vsub.s32 0, %v3235
        %v3237 = vrot.slane %v3232, %v3236
        %v3238 = vlaneseq
        %v3239 = vshrl.u32 %v3238, 7
        %v3240 = vsub.s32 1, %v3239
        %v3241 = vrot.slane %v3232, %v3240
        %v3245 = vand.u32 %v3229, %v809
        %v3248 = vand.u32 %v3230, %v809
        %3250 = vmatprep.subr.bf16.mxu0 0
        %3251 = vmatpush1.bf16.msra.mxu0 0
        %3252 = vmatprep.subr.bf16.mxu0 0
        %3253 = vmatpush1.bf16.msra.mxu0 0
        %3254 = vmatprep.subr.bf16.mxu0 0
        %3255 = vmatpush1.bf16.msra.mxu0 0
        %3256 = vmatprep.subr.bf16.mxu0 0
        %3257 = vmatpush1.bf16.msra.mxu0 0
        %3258 = vmatprep.subr.bf16.mxu0 0
        %3259 = vmatpush1.bf16.msra.mxu0 0
        %3260 = vmatprep.subr.bf16.mxu0 0
        %3261 = vmatpush1.bf16.msra.mxu0 0
        %3262 = vmatprep.subr.bf16.mxu0 0
        %3263 = vmatpush1.bf16.msra.mxu0 0
        %3264 = vmatprep.subr.bf16.mxu0 %v3248
        %3265 = vmatpush1.bf16.msra.mxu0 %v3245
        %3266 = vmatprep.subr.bf16.mxu0 0
        %3267 = vmatpush2.bf16.msra.mxu0 0
        %3268 = vmatprep.subr.bf16.mxu0 0
        %3269 = vmatpush2.bf16.msra.mxu0 0
        %3270 = vmatprep.subr.bf16.mxu0 0
        %3271 = vmatpush2.bf16.msra.mxu0 0
        %3272 = vmatprep.subr.bf16.mxu0 0
        %3273 = vmatpush2.bf16.msra.mxu0 0
        %3274 = vmatprep.subr.bf16.mxu0 0
        %3275 = vmatpush2.bf16.msra.mxu0 0
        %3276 = vmatprep.subr.bf16.mxu0 0
        %3277 = vmatpush2.bf16.msra.mxu0 0
        %3278 = vmatprep.subr.bf16.mxu0 0
        %3279 = vmatpush2.bf16.msra.mxu0 0
        %3280 = vmatprep.subr.bf16.mxu0 0
        %3281 = vmatpush2.bf16.msra.mxu0 0
        %3282 = vmatprep.mubr.bf16.mxu0 0
        %3283 = vmatmul.mubr.bf16.gmra.mxu0 %v1024
        %v3284 = vpop.f32.mrf.mxu0
        %v3285 = vadd.f32 %v3237, %v3284
        %v3286 = vpop.f32.mrf.mxu0
        %v3287 = vadd.f32 %v3241, %v3286
        %v3288 = vpop.f32.mrf.mxu0
        %v3289 = vadd.f32 %v3237, %v3288
        %v3290 = vpop.f32.mrf.mxu0
        %v3291 = vadd.f32 %v3241, %v3290
        %3292 = vdwg.mxu0
        %v3293 = vmax.f32 %v3285, 0.0
        %v3294 = vmax.f32 %v3287, 0.0
        %v3295 = vmax.f32 %v3289, 0.0
        %v3296 = vmax.f32 %v3291, 0.0
        %v3297 = vpack.c.bf16 %v2879, %v2877
        %v3298 = vpack.c.bf16 %v2880, %v2878
        %s3299 = scalar_lea.vmem [#allocation6], 768
        %v3300 = vld [vmem:[%s3299] sm:$0xf]
        %v3301 = vld [vmem:[%s3299 + $0x4] sm:$0xf]
        %v3302 = vld [vmem:[%s3299 + $0x8] sm:$0xf]
        %v3303 = vld [vmem:[%s3299 + $0xc] sm:$0xf]
        %v3304 = vld [vmem:[%s3299 + $0x10] sm:$0xf]
        %v3305 = vld [vmem:[%s3299 + $0x14] sm:$0xf]
        %v3306 = vld [vmem:[%s3299 + $0x18] sm:$0xf]
        %v3307 = vld [vmem:[%s3299 + $0x1c] sm:$0xf]
        %v3308 = vld [vmem:[%s3299 + $0x20] sm:$0xf]
        %v3309 = vld [vmem:[%s3299 + $0x24] sm:$0xf]
        %v3310 = vld [vmem:[%s3299 + $0x28] sm:$0xf]
        %v3311 = vld [vmem:[%s3299 + $0x2c] sm:$0xf]
        %v3312 = vld [vmem:[%s3299 + $0x30] sm:$0xf]
        %v3313 = vld [vmem:[%s3299 + $0x34] sm:$0xf]
        %v3314 = vld [vmem:[%s3299 + $0x38] sm:$0xf]
        %v3315 = vld [vmem:[%s3299 + $0x3c] sm:$0xf]
        %v3316 = vld [vmem:[%s3299 + $0x40] sm:$0xf]
        %v3317 = vld [vmem:[%s3299 + $0x44] sm:$0xf]
        %v3318 = vld [vmem:[%s3299 + $0x48] sm:$0xf]
        %v3319 = vld [vmem:[%s3299 + $0x4c] sm:$0xf]
        %v3320 = vld [vmem:[%s3299 + $0x50] sm:$0xf]
        %v3321 = vld [vmem:[%s3299 + $0x54] sm:$0xf]
        %v3322 = vld [vmem:[%s3299 + $0x58] sm:$0xf]
        %v3323 = vld [vmem:[%s3299 + $0x5c] sm:$0xf]
        %v3324 = vld [vmem:[%s3299 + $0x60] sm:$0xf]
        %v3325 = vld [vmem:[%s3299 + $0x64] sm:$0xf]
        %v3326 = vld [vmem:[%s3299 + $0x68] sm:$0xf]
        %v3327 = vld [vmem:[%s3299 + $0x6c] sm:$0xf]
        %v3328 = vld [vmem:[%s3299 + $0x70] sm:$0xf]
        %v3329 = vld [vmem:[%s3299 + $0x74] sm:$0xf]
        %v3330 = vld [vmem:[%s3299 + $0x78] sm:$0xf]
        %v3331 = vld [vmem:[%s3299 + $0x7c] sm:$0xf]
        %v3332 = vpack.c.bf16 %v3087, %v3085
        %v3333 = vpack.c.bf16 %v3088, %v3086
        %s3334 = scalar_lea.vmem [#allocation6], 896
        %v3335 = vld [vmem:[%s3334] sm:$0xf]
        %v3336 = vld [vmem:[%s3334 + $0x4] sm:$0xf]
        %v3337 = vld [vmem:[%s3334 + $0x8] sm:$0xf]
        %v3338 = vld [vmem:[%s3334 + $0xc] sm:$0xf]
        %v3339 = vld [vmem:[%s3334 + $0x10] sm:$0xf]
        %v3340 = vld [vmem:[%s3334 + $0x14] sm:$0xf]
        %v3341 = vld [vmem:[%s3334 + $0x18] sm:$0xf]
        %v3342 = vld [vmem:[%s3334 + $0x1c] sm:$0xf]
        %v3343 = vld [vmem:[%s3334 + $0x20] sm:$0xf]
        %v3344 = vld [vmem:[%s3334 + $0x24] sm:$0xf]
        %v3345 = vld [vmem:[%s3334 + $0x28] sm:$0xf]
        %v3346 = vld [vmem:[%s3334 + $0x2c] sm:$0xf]
        %v3347 = vld [vmem:[%s3334 + $0x30] sm:$0xf]
        %v3348 = vld [vmem:[%s3334 + $0x34] sm:$0xf]
        %v3349 = vld [vmem:[%s3334 + $0x38] sm:$0xf]
        %v3350 = vld [vmem:[%s3334 + $0x3c] sm:$0xf]
        %v3351 = vld [vmem:[%s3334 + $0x40] sm:$0xf]
        %v3352 = vld [vmem:[%s3334 + $0x44] sm:$0xf]
        %v3353 = vld [vmem:[%s3334 + $0x48] sm:$0xf]
        %v3354 = vld [vmem:[%s3334 + $0x4c] sm:$0xf]
        %v3355 = vld [vmem:[%s3334 + $0x50] sm:$0xf]
        %v3356 = vld [vmem:[%s3334 + $0x54] sm:$0xf]
        %v3357 = vld [vmem:[%s3334 + $0x58] sm:$0xf]
        %v3358 = vld [vmem:[%s3334 + $0x5c] sm:$0xf]
        %v3359 = vld [vmem:[%s3334 + $0x60] sm:$0xf]
        %v3360 = vld [vmem:[%s3334 + $0x64] sm:$0xf]
        %v3361 = vld [vmem:[%s3334 + $0x68] sm:$0xf]
        %v3362 = vld [vmem:[%s3334 + $0x6c] sm:$0xf]
        %v3363 = vld [vmem:[%s3334 + $0x70] sm:$0xf]
        %v3364 = vld [vmem:[%s3334 + $0x74] sm:$0xf]
        %v3365 = vld [vmem:[%s3334 + $0x78] sm:$0xf]
        %v3366 = vld [vmem:[%s3334 + $0x7c] sm:$0xf]
        %v3399 = vunpack.c.l.b16 %v3335
        %v3400 = vunpack.c.l.b16 %v3336
        %v3401 = vunpack.c.l.b16 %v3337
        %v3402 = vunpack.c.l.b16 %v3338
        %v3403 = vunpack.c.l.b16 %v3339
        %v3404 = vunpack.c.l.b16 %v3340
        %v3405 = vunpack.c.l.b16 %v3341
        %v3406 = vunpack.c.l.b16 %v3342
        %v3407 = vunpack.c.l.b16 %v3343
        %v3408 = vunpack.c.l.b16 %v3344
        %v3409 = vunpack.c.l.b16 %v3345
        %v3410 = vunpack.c.l.b16 %v3346
        %v3411 = vunpack.c.l.b16 %v3347
        %v3412 = vunpack.c.l.b16 %v3348
        %v3413 = vunpack.c.l.b16 %v3349
        %v3414 = vunpack.c.l.b16 %v3350
        %v3415 = vunpack.c.l.b16 %v3351
        %v3416 = vunpack.c.l.b16 %v3352
        %v3417 = vunpack.c.l.b16 %v3353
        %v3418 = vunpack.c.l.b16 %v3354
        %v3419 = vunpack.c.l.b16 %v3355
        %v3420 = vunpack.c.l.b16 %v3356
        %v3421 = vunpack.c.l.b16 %v3357
        %v3422 = vunpack.c.l.b16 %v3358
        %v3423 = vunpack.c.l.b16 %v3359
        %v3424 = vunpack.c.l.b16 %v3360
        %v3425 = vunpack.c.l.b16 %v3361
        %v3426 = vunpack.c.l.b16 %v3362
        %v3427 = vunpack.c.l.b16 %v3363
        %v3428 = vunpack.c.l.b16 %v3364
        %v3429 = vunpack.c.l.b16 %v3365
        %v3430 = vunpack.c.l.b16 %v3366
        %v3431 = vpack.c.b16 %v3400, %v3399
        %v3432 = vpack.c.b16 %v3402, %v3401
        %v3433 = vpack.c.b16 %v3404, %v3403
        %v3434 = vpack.c.b16 %v3406, %v3405
        %v3435 = vpack.c.b16 %v3408, %v3407
        %v3436 = vpack.c.b16 %v3410, %v3409
        %v3437 = vpack.c.b16 %v3412, %v3411
        %v3438 = vpack.c.b16 %v3414, %v3413
        %v3439 = vpack.c.b16 %v3416, %v3415
        %v3440 = vpack.c.b16 %v3418, %v3417
        %v3441 = vpack.c.b16 %v3420, %v3419
        %v3442 = vpack.c.b16 %v3422, %v3421
        %v3443 = vpack.c.b16 %v3424, %v3423
        %v3444 = vpack.c.b16 %v3426, %v3425
        %v3445 = vpack.c.b16 %v3428, %v3427
        %v3446 = vpack.c.b16 %v3430, %v3429
        %3463 = vmatprep.subr.bf16.mxu0 0
        %3464 = vmatpush1.bf16.msra.mxu0 %v3438
        %3465 = vmatprep.subr.bf16.mxu0 0
        %3466 = vmatpush1.bf16.msra.mxu0 %v3437
        %3467 = vmatprep.subr.bf16.mxu0 0
        %3468 = vmatpush1.bf16.msra.mxu0 %v3436
        %3469 = vmatprep.subr.bf16.mxu0 0
        %3470 = vmatpush1.bf16.msra.mxu0 %v3435
        %3471 = vmatprep.subr.bf16.mxu0 0
        %3472 = vmatpush1.bf16.msra.mxu0 %v3434
        %3473 = vmatprep.subr.bf16.mxu0 0
        %3474 = vmatpush1.bf16.msra.mxu0 %v3433
        %3475 = vmatprep.subr.bf16.mxu0 0
        %3476 = vmatpush1.bf16.msra.mxu0 %v3432
        %3477 = vmatprep.subr.bf16.mxu0 0
        %3478 = vmatpush1.bf16.msra.mxu0 %v3431
        %3479 = vmatprep.subr.bf16.mxu0 0
        %3480 = vmatpush2.bf16.msra.mxu0 %v3446
        %3481 = vmatprep.subr.bf16.mxu0 0
        %3482 = vmatpush2.bf16.msra.mxu0 %v3445
        %3483 = vmatprep.subr.bf16.mxu0 0
        %3484 = vmatpush2.bf16.msra.mxu0 %v3444
        %3485 = vmatprep.subr.bf16.mxu0 0
        %3486 = vmatpush2.bf16.msra.mxu0 %v3443
        %3487 = vmatprep.subr.bf16.mxu0 0
        %3488 = vmatpush2.bf16.msra.mxu0 %v3442
        %3489 = vmatprep.subr.bf16.mxu0 0
        %3490 = vmatpush2.bf16.msra.mxu0 %v3441
        %3491 = vmatprep.subr.bf16.mxu0 0
        %3492 = vmatpush2.bf16.msra.mxu0 %v3440
        %3493 = vmatprep.subr.bf16.mxu0 0
        %3494 = vmatpush2.bf16.msra.mxu0 %v3439
        %3495 = vmatprep.mubr.bf16.mxu0 %v3333
        %3496 = vmatmul.mubr.bf16.gmra.mxu0 %v3332
        %v3497 = vpop.f32.mrf.mxu0
        %v3498 = vadd.f32 0.0, %v3497
        %v3499 = vpop.f32.mrf.mxu0
        %v3500 = vpop.f32.mrf.mxu0
        %v3501 = vadd.f32 0.0, %v3500
        %v3502 = vpop.f32.mrf.mxu0
        %3503 = vdwg.mxu0
        %v3536 = vunpack.c.l.b16 %v3300
        %v3537 = vunpack.c.l.b16 %v3301
        %v3538 = vunpack.c.l.b16 %v3302
        %v3539 = vunpack.c.l.b16 %v3303
        %v3540 = vunpack.c.l.b16 %v3304
        %v3541 = vunpack.c.l.b16 %v3305
        %v3542 = vunpack.c.l.b16 %v3306
        %v3543 = vunpack.c.l.b16 %v3307
        %v3544 = vunpack.c.l.b16 %v3308
        %v3545 = vunpack.c.l.b16 %v3309
        %v3546 = vunpack.c.l.b16 %v3310
        %v3547 = vunpack.c.l.b16 %v3311
        %v3548 = vunpack.c.l.b16 %v3312
        %v3549 = vunpack.c.l.b16 %v3313
        %v3550 = vunpack.c.l.b16 %v3314
        %v3551 = vunpack.c.l.b16 %v3315
        %v3552 = vunpack.c.l.b16 %v3316
        %v3553 = vunpack.c.l.b16 %v3317
        %v3554 = vunpack.c.l.b16 %v3318
        %v3555 = vunpack.c.l.b16 %v3319
        %v3556 = vunpack.c.l.b16 %v3320
        %v3557 = vunpack.c.l.b16 %v3321
        %v3558 = vunpack.c.l.b16 %v3322
        %v3559 = vunpack.c.l.b16 %v3323
        %v3560 = vunpack.c.l.b16 %v3324
        %v3561 = vunpack.c.l.b16 %v3325
        %v3562 = vunpack.c.l.b16 %v3326
        %v3563 = vunpack.c.l.b16 %v3327
        %v3564 = vunpack.c.l.b16 %v3328
        %v3565 = vunpack.c.l.b16 %v3329
        %v3566 = vunpack.c.l.b16 %v3330
        %v3567 = vunpack.c.l.b16 %v3331
        %v3568 = vpack.c.b16 %v3537, %v3536
        %v3569 = vpack.c.b16 %v3539, %v3538
        %v3570 = vpack.c.b16 %v3541, %v3540
        %v3571 = vpack.c.b16 %v3543, %v3542
        %v3572 = vpack.c.b16 %v3545, %v3544
        %v3573 = vpack.c.b16 %v3547, %v3546
        %v3574 = vpack.c.b16 %v3549, %v3548
        %v3575 = vpack.c.b16 %v3551, %v3550
        %v3576 = vpack.c.b16 %v3553, %v3552
        %v3577 = vpack.c.b16 %v3555, %v3554
        %v3578 = vpack.c.b16 %v3557, %v3556
        %v3579 = vpack.c.b16 %v3559, %v3558
        %v3580 = vpack.c.b16 %v3561, %v3560
        %v3581 = vpack.c.b16 %v3563, %v3562
        %v3582 = vpack.c.b16 %v3565, %v3564
        %v3583 = vpack.c.b16 %v3567, %v3566
        %3600 = vmatprep.subr.bf16.mxu0 0
        %3601 = vmatpush1.bf16.msra.mxu0 %v3575
        %3602 = vmatprep.subr.bf16.mxu0 0
        %3603 = vmatpush1.bf16.msra.mxu0 %v3574
        %3604 = vmatprep.subr.bf16.mxu0 0
        %3605 = vmatpush1.bf16.msra.mxu0 %v3573
        %3606 = vmatprep.subr.bf16.mxu0 0
        %3607 = vmatpush1.bf16.msra.mxu0 %v3572
        %3608 = vmatprep.subr.bf16.mxu0 0
        %3609 = vmatpush1.bf16.msra.mxu0 %v3571
        %3610 = vmatprep.subr.bf16.mxu0 0
        %3611 = vmatpush1.bf16.msra.mxu0 %v3570
        %3612 = vmatprep.subr.bf16.mxu0 0
        %3613 = vmatpush1.bf16.msra.mxu0 %v3569
        %3614 = vmatprep.subr.bf16.mxu0 0
        %3615 = vmatpush1.bf16.msra.mxu0 %v3568
        %3616 = vmatprep.subr.bf16.mxu0 0
        %3617 = vmatpush2.bf16.msra.mxu0 %v3583
        %3618 = vmatprep.subr.bf16.mxu0 0
        %3619 = vmatpush2.bf16.msra.mxu0 %v3582
        %3620 = vmatprep.subr.bf16.mxu0 0
        %3621 = vmatpush2.bf16.msra.mxu0 %v3581
        %3622 = vmatprep.subr.bf16.mxu0 0
        %3623 = vmatpush2.bf16.msra.mxu0 %v3580
        %3624 = vmatprep.subr.bf16.mxu0 0
        %3625 = vmatpush2.bf16.msra.mxu0 %v3579
        %3626 = vmatprep.subr.bf16.mxu0 0
        %3627 = vmatpush2.bf16.msra.mxu0 %v3578
        %3628 = vmatprep.subr.bf16.mxu0 0
        %3629 = vmatpush2.bf16.msra.mxu0 %v3577
        %3630 = vmatprep.subr.bf16.mxu0 0
        %3631 = vmatpush2.bf16.msra.mxu0 %v3576
        %3632 = vmatprep.mubr.bf16.mxu0 %v3298
        %3633 = vmatmul.mubr.bf16.gmra.mxu0 %v3297
        %v3634 = vpop.f32.mrf.mxu0
        %v3635 = vadd.f32 %v3498, %v3634
        %v3636 = vpop.f32.mrf.mxu0
        %v3637 = vpop.f32.mrf.mxu0
        %v3638 = vadd.f32 %v3501, %v3637
        %v3639 = vpop.f32.mrf.mxu0
        %3640 = vdwg.mxu0
        %v3641 = vpack.c.bf16 %v3295, %v3293
        %v3642 = vpack.c.bf16 %v3296, %v3294
        %s3643 = scalar_lea.vmem [#allocation6], 1024
        %v3644 = vld [vmem:[%s3643] sm:$0xf]
        %v3645 = vld [vmem:[%s3643 + $0x4] sm:$0xf]
        %v3646 = vld [vmem:[%s3643 + $0x8] sm:$0xf]
        %v3647 = vld [vmem:[%s3643 + $0xc] sm:$0xf]
        %v3648 = vld [vmem:[%s3643 + $0x10] sm:$0xf]
        %v3649 = vld [vmem:[%s3643 + $0x14] sm:$0xf]
        %v3650 = vld [vmem:[%s3643 + $0x18] sm:$0xf]
        %v3651 = vld [vmem:[%s3643 + $0x1c] sm:$0xf]
        %v3652 = vld [vmem:[%s3643 + $0x20] sm:$0xf]
        %v3653 = vld [vmem:[%s3643 + $0x24] sm:$0xf]
        %v3654 = vld [vmem:[%s3643 + $0x28] sm:$0xf]
        %v3655 = vld [vmem:[%s3643 + $0x2c] sm:$0xf]
        %v3656 = vld [vmem:[%s3643 + $0x30] sm:$0xf]
        %v3657 = vld [vmem:[%s3643 + $0x34] sm:$0xf]
        %v3658 = vld [vmem:[%s3643 + $0x38] sm:$0xf]
        %v3659 = vld [vmem:[%s3643 + $0x3c] sm:$0xf]
        %v3660 = vld [vmem:[%s3643 + $0x40] sm:$0xf]
        %v3661 = vld [vmem:[%s3643 + $0x44] sm:$0xf]
        %v3662 = vld [vmem:[%s3643 + $0x48] sm:$0xf]
        %v3663 = vld [vmem:[%s3643 + $0x4c] sm:$0xf]
        %v3664 = vld [vmem:[%s3643 + $0x50] sm:$0xf]
        %v3665 = vld [vmem:[%s3643 + $0x54] sm:$0xf]
        %v3666 = vld [vmem:[%s3643 + $0x58] sm:$0xf]
        %v3667 = vld [vmem:[%s3643 + $0x5c] sm:$0xf]
        %v3668 = vld [vmem:[%s3643 + $0x60] sm:$0xf]
        %v3669 = vld [vmem:[%s3643 + $0x64] sm:$0xf]
        %v3670 = vld [vmem:[%s3643 + $0x68] sm:$0xf]
        %v3671 = vld [vmem:[%s3643 + $0x6c] sm:$0xf]
        %v3672 = vld [vmem:[%s3643 + $0x70] sm:$0xf]
        %v3673 = vld [vmem:[%s3643 + $0x74] sm:$0xf]
        %v3674 = vld [vmem:[%s3643 + $0x78] sm:$0xf]
        %v3675 = vld [vmem:[%s3643 + $0x7c] sm:$0xf]
        %v3708 = vunpack.c.l.b16 %v3644
        %v3709 = vunpack.c.l.b16 %v3645
        %v3710 = vunpack.c.l.b16 %v3646
        %v3711 = vunpack.c.l.b16 %v3647
        %v3712 = vunpack.c.l.b16 %v3648
        %v3713 = vunpack.c.l.b16 %v3649
        %v3714 = vunpack.c.l.b16 %v3650
        %v3715 = vunpack.c.l.b16 %v3651
        %v3716 = vunpack.c.l.b16 %v3652
        %v3717 = vunpack.c.l.b16 %v3653
        %v3718 = vunpack.c.l.b16 %v3654
        %v3719 = vunpack.c.l.b16 %v3655
        %v3720 = vunpack.c.l.b16 %v3656
        %v3721 = vunpack.c.l.b16 %v3657
        %v3722 = vunpack.c.l.b16 %v3658
        %v3723 = vunpack.c.l.b16 %v3659
        %v3724 = vunpack.c.l.b16 %v3660
        %v3725 = vunpack.c.l.b16 %v3661
        %v3726 = vunpack.c.l.b16 %v3662
        %v3727 = vunpack.c.l.b16 %v3663
        %v3728 = vunpack.c.l.b16 %v3664
        %v3729 = vunpack.c.l.b16 %v3665
        %v3730 = vunpack.c.l.b16 %v3666
        %v3731 = vunpack.c.l.b16 %v3667
        %v3732 = vunpack.c.l.b16 %v3668
        %v3733 = vunpack.c.l.b16 %v3669
        %v3734 = vunpack.c.l.b16 %v3670
        %v3735 = vunpack.c.l.b16 %v3671
        %v3736 = vunpack.c.l.b16 %v3672
        %v3737 = vunpack.c.l.b16 %v3673
        %v3738 = vunpack.c.l.b16 %v3674
        %v3739 = vunpack.c.l.b16 %v3675
        %v3740 = vpack.c.b16 %v3709, %v3708
        %v3741 = vpack.c.b16 %v3711, %v3710
        %v3742 = vpack.c.b16 %v3713, %v3712
        %v3743 = vpack.c.b16 %v3715, %v3714
        %v3744 = vpack.c.b16 %v3717, %v3716
        %v3745 = vpack.c.b16 %v3719, %v3718
        %v3746 = vpack.c.b16 %v3721, %v3720
        %v3747 = vpack.c.b16 %v3723, %v3722
        %v3748 = vpack.c.b16 %v3725, %v3724
        %v3749 = vpack.c.b16 %v3727, %v3726
        %v3750 = vpack.c.b16 %v3729, %v3728
        %v3751 = vpack.c.b16 %v3731, %v3730
        %v3752 = vpack.c.b16 %v3733, %v3732
        %v3753 = vpack.c.b16 %v3735, %v3734
        %v3754 = vpack.c.b16 %v3737, %v3736
        %v3755 = vpack.c.b16 %v3739, %v3738
        %3772 = vmatprep.subr.bf16.mxu0 0
        %3773 = vmatpush1.bf16.msra.mxu0 %v3747
        %3774 = vmatprep.subr.bf16.mxu0 0
        %3775 = vmatpush1.bf16.msra.mxu0 %v3746
        %3776 = vmatprep.subr.bf16.mxu0 0
        %3777 = vmatpush1.bf16.msra.mxu0 %v3745
        %3778 = vmatprep.subr.bf16.mxu0 0
        %3779 = vmatpush1.bf16.msra.mxu0 %v3744
        %3780 = vmatprep.subr.bf16.mxu0 0
        %3781 = vmatpush1.bf16.msra.mxu0 %v3743
        %3782 = vmatprep.subr.bf16.mxu0 0
        %3783 = vmatpush1.bf16.msra.mxu0 %v3742
        %3784 = vmatprep.subr.bf16.mxu0 0
        %3785 = vmatpush1.bf16.msra.mxu0 %v3741
        %3786 = vmatprep.subr.bf16.mxu0 0
        %3787 = vmatpush1.bf16.msra.mxu0 %v3740
        %3788 = vmatprep.subr.bf16.mxu0 0
        %3789 = vmatpush2.bf16.msra.mxu0 %v3755
        %3790 = vmatprep.subr.bf16.mxu0 0
        %3791 = vmatpush2.bf16.msra.mxu0 %v3754
        %3792 = vmatprep.subr.bf16.mxu0 0
        %3793 = vmatpush2.bf16.msra.mxu0 %v3753
        %3794 = vmatprep.subr.bf16.mxu0 0
        %3795 = vmatpush2.bf16.msra.mxu0 %v3752
        %3796 = vmatprep.subr.bf16.mxu0 0
        %3797 = vmatpush2.bf16.msra.mxu0 %v3751
        %3798 = vmatprep.subr.bf16.mxu0 0
        %3799 = vmatpush2.bf16.msra.mxu0 %v3750
        %3800 = vmatprep.subr.bf16.mxu0 0
        %3801 = vmatpush2.bf16.msra.mxu0 %v3749
        %3802 = vmatprep.subr.bf16.mxu0 0
        %3803 = vmatpush2.bf16.msra.mxu0 %v3748
        %3804 = vmatprep.mubr.bf16.mxu0 %v3642
        %3805 = vmatmul.mubr.bf16.gmra.mxu0 %v3641
        %v3806 = vpop.f32.mrf.mxu0
        %v3807 = vadd.f32 0.0, %v3806
        %v3808 = vpop.f32.mrf.mxu0
        %v3809 = vpop.f32.mrf.mxu0
        %v3810 = vadd.f32 0.0, %v3809
        %v3811 = vpop.f32.mrf.mxu0
        %3812 = vdwg.mxu0
        %v3813 = vadd.f32 %v3635, %v3807
        %v3814 = vadd.f32 %v3638, %v3810
        %s3815 = scalar_lea.vmem %s6, 2
        %v3816 = vld [vmem:[%s3815] sm:$0x1]
        %v3818 = vlaneseq
        %v3819 = vshrl.u32 %v3818, 7
        %v3820 = vsub.s32 0, %v3819
        %v3821 = vrot.slane %v3816, %v3820
        %v3823 = vadd.f32 %v3813, %v3821
        %v3824 = vadd.f32 %v3814, %v3821
        %v3825 = vadd.f32 %v3823, %v2721
        %v3826 = vadd.f32 %v3824, %v2722
        %v3827 = vmax.f32 %v3825, 0.0
        %v3828 = vmax.f32 %v3826, 0.0
        %3829 = vst [vmem:[#allocation2] sm:$0xff] %v3827
        %3830 = vst [vmem:[#allocation2 + $0x8] sm:$0x1] %v3828
        %v3831 = vld [vmem:[#allocation2] sm:$0xff]
        %v3832 = vld [vmem:[#allocation2 + $0x8] sm:$0x1]
        %3833 = vst [vmem:[%s345] sm:$0xff] %v3831
        %3834 = vst [vmem:[%s345 + $0x8] sm:$0x1] %v3832
        %p3835 = scmp.lt.s32.totalorder %s25, 1
        %s3836 = scalar_select %p3835, %s25, 1
        %s3837 = smul.addr %s3836, 2
        %s3838 = smul.addr %s3837, 8
        %s3839 = scalar_lea.vmem %s7, %s3838
        %s3840 = sand.u32 %s211, 1
        %s3841 = scalar_lea.sflag [#allocation5], %s3840
        %s3842 = sand.u32 %s211, 1
        %s3843 = scalar_lea.vmem [#allocation8], %s3842
        // Predicated region
        $region57: #{gcn_classifier_forward.1} parent=47 // pred_check
          %p3844 = pneg %p195
        $region58: #{gcn_classifier_forward.1} parent=47 // pred_check_branch
          %3846 = sbr.rel (%p3844) target = $region60
        $region59: #{gcn_classifier_forward.1} parent=47 // pred_region
          _
        $region60: #{gcn_classifier_forward.1} parent=47 // pred_fallthru
          _
        // Predicated region
        $region61: #{gcn_classifier_forward.1} parent=47 // pred_check
          %p3847 = pneg %p221
        $region62: #{gcn_classifier_forward.1} parent=47 // pred_check_branch
          %3849 = sbr.rel (%p3847) target = $region64
        $region63: #{gcn_classifier_forward.1} parent=47 // pred_region
          %s3851 = ssub.s32 16, 16
          %3852 = vsyncadd %s3841, %s3851
          %s3853 = smul.addr %s25, 16
          %s3854 = scalar_lea.hbm %s8, %s3853
          %s3856 = sshll.u32 %s3843, 4
          %s3857 = int_to_ptr.vmem [resolvable:$true] %s3856
          %3859 = dma.vmem_to_hbm [thread:$0]  %s3857, 16, %s3854, %s3841
        $region64: #{gcn_classifier_forward.1} parent=47 // pred_fallthru
          _
      $region48: #{gcn_classifier_forward.1} parent=5 // pred_fallthru
        _
      %p3860 = scmp.le.s32.totalorder 2, %s20
      // Predicated region
      $region65: #{gcn_classifier_forward.1} parent=5 // pred_check
        %p3861 = pneg %p3860
      $region66: #{gcn_classifier_forward.1} parent=5 // pred_check_branch
        %3863 = sbr.rel (%p3861) target = $region68
      $region67: #{gcn_classifier_forward.1} parent=5 // pred_region
        %s3864 = ssub.s32 %s20, 2
        // Predicated region
        $region69: #{gcn_classifier_forward.1} parent=67 // pred_check
          %p3865 = pneg %p201
        $region70: #{gcn_classifier_forward.1} parent=67 // pred_check_branch
          %3867 = sbr.rel (%p3865) target = $region72
        $region71: #{gcn_classifier_forward.1} parent=67 // pred_region
          %p3868 = scmp.lt.s32.totalorder %s26, 1
          %s3869 = scalar_select %p3868, %s26, 1
          %s3870 = smul.addr %s3869, 2
          %s3871 = smul.addr %s3870, 8
          %s3872 = scalar_lea.vmem %s7, %s3871
        $region72: #{gcn_classifier_forward.1} parent=67 // pred_fallthru
          _
        // Predicated region
        $region73: #{gcn_classifier_forward.1} parent=67 // pred_check
          %p3873 = pneg %p227
        $region74: #{gcn_classifier_forward.1} parent=67 // pred_check_branch
          %3875 = sbr.rel (%p3873) target = $region76
        $region75: #{gcn_classifier_forward.1} parent=67 // pred_region
          %s3876 = sand.u32 %s212, 1
          %s3877 = scalar_lea.sflag [#allocation5], %s3876
          %s3878 = sand.u32 %s212, 1
          %s3879 = scalar_lea.vmem [#allocation8], %s3878
          %3880 = dma.done %s3877, 16
        $region76: #{gcn_classifier_forward.1} parent=67 // pred_fallthru
          _
      $region68: #{gcn_classifier_forward.1} parent=5 // pred_fallthru
        _
    $region6: #{gcn_classifier_forward.1} parent=1 // loop_footer
      %s24 = sadd.s32 1, %s20
    $region7: #{gcn_classifier_forward.1} parent=1 // loop_footer_branch
      %19 = sbr.rel target = $region3
    $region8: #{gcn_classifier_forward.1} parent=1 // loop_exit
      _
    %3881 = vsyncpa [#allocation4], 1
    %s3882 = scalar_lea.sflag [#allocation4], 1
    %3883 = vsyncpa %s3882, 1
    %3884 = vsyncpa [#allocation7], 1
    %3885 = vsyncpa [#allocation5], 1
    %s3886 = scalar_lea.sflag [#allocation5], 1
    %3887 = vsyncpa %s3886, 1

</llo_original>
